<compile_context>
chip_gen: v7x
topology: tpu7x:2x2x1
jax: 0.10.0
libtpu: 0.0.40
codegen_flags: <defaults>
</compile_context>

<pallas_src>
import math

import jax
import jax.numpy as jnp
from jax.experimental import pallas as pl
from jax.experimental.pallas import tpu as pltpu

BN_EPS = 1e-5


def _round_up(x, m):
    return (x + m - 1) // m * m


def _tpu_vmem_capacity_bytes():
    try:
        return int(pltpu.get_tpu_info().vmem_capacity_bytes)
    except Exception:
        return 64 << 20            # conservative default: v7x physical VMEM per core


def _pick_band_rows(h, w, target_flat_rows=512):
    """Row-band height Th: divides h; Th*w a multiple of 16 for bf16 alignment."""
    th_max = max(1, min(h, target_flat_rows // max(w, 1)))
    for th in range(th_max, 0, -1):
        if h % th == 0 and (th == h or (th * w) % 16 == 0):
            return th
    return h


def _fused_footprint_bytes(m, mb, cin, planes, cout, pad_off, k3, out_itemsize):
    """Explicit VMEM footprint estimate of the fused path (double buffers included)."""
    bf = 2
    x_blocks = 2 * m * cin * bf                       # double-buffered input block
    out_blocks = 2 * mb * cout * out_itemsize         # double-buffered output block
    hpad = (m + 2 * pad_off) * planes * bf            # persistent conv1 scratch
    weights = 2 * (cin * planes + 9 * planes * planes + k3 * cout) * bf
    biases = 2 * (2 * planes + cout) * 4
    live = (mb * planes * 4 + mb * 9 * planes * bf    # h1 chunk, im2col slab
            + mb * k3 * bf + mb * cout * 4)           # conv3 operands / f32 result
    return x_blocks + out_blocks + hpad + weights + biases + live


# ----------------------------------------------------------------------------
# Fused whole-Bottleneck kernel (stride == 1)
# ----------------------------------------------------------------------------
def _make_bottleneck_kernel(w_img, m_full, m_band, planes, pad_off, n_bands, has_ds):
    """Grid = (batch, row-band).  conv1 output for the whole image lives in a
    persistent bf16 scratch; each band does one im2col-slab matmul for conv2 and
    one (residual-folded) matmul for conv3."""

    def kernel(x_ref, w1_ref, b1_ref, w2_ref, b2_ref, w3_ref, b3_ref, o_ref, hpad_ref):
        r = pl.program_id(1)

        def init_conv1():
            # conv1 (1x1) + folded BN1 + ReLU for the whole image -> bf16 scratch.
            # Only the two pad bands are zeroed; the middle is fully overwritten.
            hpad_ref[:pad_off, :] = jnp.zeros((pad_off, planes), jnp.bfloat16)
            hpad_ref[pad_off + m_full:, :] = jnp.zeros((pad_off, planes), jnp.bfloat16)
            for rb in range(n_bands):
                xs = x_ref[rb * m_band:(rb + 1) * m_band, :]
                h1 = jnp.dot(xs, w1_ref[...], preferred_element_type=jnp.float32)
                h1 = jnp.maximum(h1 + b1_ref[...], 0.0)
                hpad_ref[pad_off + rb * m_band:pad_off + (rb + 1) * m_band, :] = (
                    h1.astype(jnp.bfloat16))

        if n_bands == 1:
            init_conv1()
            region = hpad_ref[...]                               # (m + 2*pad, P) bf16
            xb = x_ref[...]                                      # (m, Cin) bf16
        else:
            pl.when(r == 0)(init_conv1)                          # once per batch elem
            m0 = pl.multiple_of(r * m_band, m_band)              # aligned band start
            region = hpad_ref[pl.ds(m0, m_band + 2 * pad_off), :]
            xb = x_ref[pl.ds(m0, m_band), :]

        # ---- conv2 (3x3, pad 1, stride 1) + folded BN2 + ReLU ------------------
        # Nine shifted bf16 slices of the padded conv1 output form an in-VMEM
        # im2col slab (m_band, 9P); one MXU matmul against w2 (9P, P).
        col = jax.lax.broadcasted_iota(jnp.int32, (m_band, planes), 0) % w_img
        zeros = jnp.zeros((m_band, planes), jnp.bfloat16)
        taps = []
        for t in range(9):
            oy, ox = t // 3 - 1, t % 3 - 1
            k = oy * w_img + ox
            tap = region[pad_off + k:pad_off + k + m_band, :]    # (m_band, P) bf16
            if ox == -1:
                tap = jnp.where(col >= 1, tap, zeros)            # left column wrap
            elif ox == 1:
                tap = jnp.where(col <= w_img - 2, tap, zeros)    # right column wrap
            taps.append(tap)
        slab = jnp.concatenate(taps, axis=-1)                    # (m_band, 9P) bf16
        h2 = jnp.dot(slab, w2_ref[...], preferred_element_type=jnp.float32)
        h2 = jnp.maximum(h2 + b2_ref[...], 0.0).astype(jnp.bfloat16)

        # ---- conv3 (1x1) + folded BN3 (+ downsample folded into MXU) + ReLU ----
        if has_ds:
            h2x = jnp.concatenate([h2, xb], axis=-1)             # (m_band, P + Cin)
            y = jnp.dot(h2x, w3_ref[...], preferred_element_type=jnp.float32)
            y = y + b3_ref[...]
        else:
            y = jnp.dot(h2, w3_ref[...], preferred_element_type=jnp.float32)
            y = y + b3_ref[...] + xb.astype(jnp.float32)         # identity residual
        o_ref[...] = jnp.maximum(y, 0.0).astype(o_ref.dtype)

    return kernel


def bottleneck_fused(prep, x_nhwc, th, out_dtype, vmem_limit_bytes):
    """x_nhwc: (N, H, W, Cin) bf16, stride==1 only.  Returns (N, H, W, Cout)."""
    n, h, w, cin = x_nhwc.shape
    planes, cout = prep["planes"], prep["cout"]
    m = h * w
    mb = th * w
    n_bands = h // th
    has_ds = "w3d" in prep
    pad_off = _round_up(w + 1, 16)

    x_flat = x_nhwc.reshape(n, m, cin)
    w1 = prep["w1"].reshape(cin, planes)
    b1 = prep["b1"].reshape(1, planes)
    w2 = prep["w2"].reshape(9 * planes, planes)
    b2 = prep["b2"].reshape(1, planes)
    if has_ds:
        w3, b3 = prep["w3d"], prep["b3d"].reshape(1, cout)
    else:
        w3, b3 = prep["w3"].reshape(planes, cout), prep["b3"].reshape(1, cout)
    k3 = w3.shape[0]

    # TODO(synk): single-buffer the grid-invariant weight blocks
    # (pipeline_mode=pl.Buffered(1)) -- matters for VMEM headroom at real ResNet
    # widths on v7x.
    in_specs = [
        pl.BlockSpec((None, m, cin), lambda i, r: (i, 0, 0)),     # x (resident per batch)
        pl.BlockSpec((cin, planes), lambda i, r: (0, 0)),         # w1 (BN-folded, bf16)
        pl.BlockSpec((1, planes), lambda i, r: (0, 0)),           # b1
        pl.BlockSpec((9 * planes, planes), lambda i, r: (0, 0)),  # w2 flat (9P, P)
        pl.BlockSpec((1, planes), lambda i, r: (0, 0)),           # b2
        pl.BlockSpec((k3, cout), lambda i, r: (0, 0)),            # w3 or [w3; wd]
        pl.BlockSpec((1, cout), lambda i, r: (0, 0)),             # b3 or b3+bd
    ]

    out = pl.pallas_call(
        _make_bottleneck_kernel(w, m, mb, planes, pad_off, n_bands, has_ds),
        out_shape=jax.ShapeDtypeStruct((n, m, cout), out_dtype),
        grid=(n, n_bands),
        in_specs=in_specs,
        out_specs=pl.BlockSpec((None, mb, cout), lambda i, r: (i, r, 0)),
        scratch_shapes=[pltpu.VMEM((m + 2 * pad_off, planes), jnp.bfloat16)],
        compiler_params=pltpu.CompilerParams(
            dimension_semantics=("parallel", "arbitrary"),
            vmem_limit_bytes=vmem_limit_bytes),
    )(x_flat, w1, b1, w2, b2, w3, b3)
    return out.reshape(n, h, w, cout)


# ----------------------------------------------------------------------------
# Fallback path (stride != 1): fused matmul(+bias+residual+ReLU) kernel
# ----------------------------------------------------------------------------
def _make_matmul_kernel(has_residual, relu):
    def kernel(p_ref, w_ref, b_ref, *rest):
        if has_residual:
            r_ref, o_ref = rest
        else:
            (o_ref,) = rest
        y = jnp.dot(p_ref[...], w_ref[...], preferred_element_type=jnp.float32)
        y = y + b_ref[...]
        if has_residual:
            y = y + r_ref[...].astype(jnp.float32)
        if relu:
            y = jnp.maximum(y, 0.0)
        o_ref[...] = y.astype(o_ref.dtype)

    return kernel


def _pick_tm(m):
    """Largest tile <= 1024 that divides m (avoids wrapper-side padding)."""
    if m <= 1024:
        return m, 0
    for tm in range(1024, 15, -16):
        if m % tm == 0:
            return tm, 0
    tm = 256
    return tm, _round_up(m, tm) - m


def matmul_bias_act(patches, weights, bias, residual=None, relu=True,
                    out_dtype=jnp.float32):
    """patches:(M,K) bf16, weights:(K,N) bf16 (BN-scale folded), bias:(N,) f32."""
    m, k = patches.shape
    _, nc = weights.shape
    tm, pad = _pick_tm(m)
    if pad:
        # TODO(synk): replace this pad with a pl.when-masked ragged last tile.
        patches = jnp.pad(patches, ((0, pad), (0, 0)))
        if residual is not None:
            residual = jnp.pad(residual, ((0, pad), (0, 0)))
    mp = m + pad

    in_specs = [pl.BlockSpec((tm, k), lambda i: (i, 0)),
                pl.BlockSpec((k, nc), lambda i: (0, 0)),
                pl.BlockSpec((1, nc), lambda i: (0, 0))]
    args = [patches, weights, bias.reshape(1, nc)]
    if residual is not None:
        in_specs.append(pl.BlockSpec((tm, nc), lambda i: (i, 0)))
        args.append(residual)

    out = pl.pallas_call(
        _make_matmul_kernel(residual is not None, relu),
        out_shape=jax.ShapeDtypeStruct((mp, nc), out_dtype),
        grid=(mp // tm,),
        in_specs=in_specs,
        out_specs=pl.BlockSpec((tm, nc), lambda i: (i, 0)),
        compiler_params=pltpu.CompilerParams(dimension_semantics=("parallel",)),
    )(*args)
    return out[:m] if pad else out


def im2col(x, kh, kw, stride, pad):
    """x: NHWC -> patches (N*OH*OW, KH*KW*C).  Pure slicing glue, keeps dtype."""
    n, h, w, c = x.shape
    xp = jnp.pad(x, ((0, 0), (pad, pad), (pad, pad), (0, 0)))
    oh = (h + 2 * pad - kh) // stride + 1
    ow = (w + 2 * pad - kw) // stride + 1
    cols = []
    for dy in range(kh):
        for dx in range(kw):
            cols.append(xp[:, dy:dy + stride * oh:stride, dx:dx + stride * ow:stride, :])
    patches = jnp.stack(cols, axis=3)            # (n, oh, ow, kh*kw, c)
    return patches.reshape(n * oh * ow, kh * kw * c), oh, ow


def bottleneck_modular(prep, x_nhwc, stride, out_dtype):
    n, h, w, cin = x_nhwc.shape
    planes, cout = prep["planes"], prep["cout"]

    # conv1 (1x1): plain matmul, bf16 intermediate output.
    h1 = matmul_bias_act(x_nhwc.reshape(n * h * w, cin), prep["w1"].reshape(cin, planes),
                         prep["b1"], relu=True, out_dtype=jnp.bfloat16)
    h1 = h1.reshape(n, h, w, planes)

    # conv2 (3x3, stride): bf16 im2col built in the wrapper.
    patches, oh, ow = im2col(h1, 3, 3, stride, 1)
    h2 = matmul_bias_act(patches, prep["w2"].reshape(9 * planes, planes), prep["b2"],
                         relu=True, out_dtype=jnp.bfloat16)

    # residual (downsample = strided 1x1 conv + folded BN).
    if "wd" in prep:
        xs = x_nhwc[:, ::stride, ::stride, :].reshape(n * oh * ow, cin)
        r = matmul_bias_act(xs, prep["wd"].reshape(cin, cout), prep["bd"],
                            relu=False, out_dtype=jnp.float32)
    else:
        r = x_nhwc[:, ::stride, ::stride, :].reshape(n * oh * ow, cout).astype(jnp.float32)

    # conv3 (1x1) + residual add + ReLU, fused epilogue.
    y = matmul_bias_act(h2, prep["w3"].reshape(planes, cout), prep["b3"],
                        residual=r, relu=True, out_dtype=out_dtype)
    return y.reshape(n, oh, ow, cout)


# ----------------------------------------------------------------------------
# Parameters: init + BN folding into bf16 weights / f32 bias
# ----------------------------------------------------------------------------
def init_bottleneck_params(key, inplanes, planes, stride):
    expansion = 4
    cout = planes * expansion
    ks = jax.random.split(key, 8)

    def conv_w(k, kh, kw, ci, co):
        fan_out = kh * kw * co
        return jax.random.normal(k, (kh, kw, ci, co), jnp.float32) * math.sqrt(2.0 / fan_out)

    def bn(k, c):  # deterministic non-trivial inference-mode BN stats
        kg, kb, km, kv = jax.random.split(k, 4)
        gamma = 1.0 + 0.1 * jax.random.normal(kg, (c,), jnp.float32)
        beta = 0.1 * jax.random.normal(kb, (c,), jnp.float32)
        mean = 0.1 * jax.random.normal(km, (c,), jnp.float32)
        var = jax.random.uniform(kv, (c,), jnp.float32, minval=0.5, maxval=1.5)
        return gamma, beta, mean, var

    params = {
        "stride": stride,
        "conv1": conv_w(ks[0], 1, 1, inplanes, planes), "bn1": bn(ks[1], planes),
        "conv2": conv_w(ks[2], 3, 3, planes, planes),   "bn2": bn(ks[3], planes),
        "conv3": conv_w(ks[4], 1, 1, planes, cout),     "bn3": bn(ks[5], cout),
    }
    if stride != 1 or inplanes != cout:
        params["downsample"] = (conv_w(ks[6], 1, 1, inplanes, cout), bn(ks[7], cout))
    return params


def prepare_params(params):
    """Fold BN scale into bf16 conv weights; BN bias stays as an f32 add."""
    def fold(w, bnp):
        gamma, beta, mean, var = bnp
        scale = gamma / jnp.sqrt(var + BN_EPS)
        bias = beta - mean * scale
        return (w * scale).astype(jnp.bfloat16), bias.astype(jnp.float32)

    prep = {"stride": params["stride"]}
    prep["w1"], prep["b1"] = fold(params["conv1"], params["bn1"])
    prep["w2"], prep["b2"] = fold(params["conv2"], params["bn2"])
    prep["w3"], prep["b3"] = fold(params["conv3"], params["bn3"])
    prep["planes"] = params["conv1"].shape[-1]
    prep["cout"] = params["conv3"].shape[-1]
    if "downsample" in params:
        wd, bd = fold(*params["downsample"])
        prep["wd"], prep["bd"] = wd, bd
        cin = params["conv1"].shape[2]
        planes, cout = prep["planes"], prep["cout"]
        # conv3 and the downsample projection share one MXU matmul in the fused path:
        #   [h2 | x] @ [[w3], [wd]] + (b3 + bd)
        prep["w3d"] = jnp.concatenate(
            [prep["w3"].reshape(planes, cout), wd.reshape(cin, cout)], axis=0)
        prep["b3d"] = prep["b3"] + bd
    return prep


# ----------------------------------------------------------------------------
# Forward pass (NCHW in / NCHW out, like the PyTorch module)
# ----------------------------------------------------------------------------
def bottleneck_forward(params, x_nchw, out_dtype=jnp.bfloat16):
    prep = prepare_params(params)
    stride = prep["stride"]
    x = jnp.transpose(x_nchw, (0, 2, 3, 1)).astype(jnp.bfloat16)   # NHWC bf16
    n, h, w, cin = x.shape
    planes, cout = prep["planes"], prep["cout"]

    if stride == 1:
        th = _pick_band_rows(h, w)
        mb = th * w
        pad_off = _round_up(w + 1, 16)
        k3 = planes + cin if "w3d" in prep else planes
        footprint = _fused_footprint_bytes(h * w, mb, cin, planes, cout, pad_off, k3,
                                           jnp.dtype(out_dtype).itemsize)
        vmem_cap = _tpu_vmem_capacity_bytes()
        if footprint <= int(0.8 * vmem_cap):
            vmem_limit = int(min(vmem_cap, max(2 * footprint, 32 << 20)))
            out = bottleneck_fused(prep, x, th, out_dtype, vmem_limit)
            return jnp.transpose(out, (0, 3, 1, 2))                # NCHW

    # TODO(synk): stride>1 fused path (strided taps from the conv1 scratch); the
    # modular path below round-trips h1 / im2col patches / h2 through HBM.
    out = bottleneck_modular(prep, x, stride, out_dtype)
    return jnp.transpose(out, (0, 3, 1, 2))                        # NCHW


# ----------------------------------------------------------------------------
# Pure-JAX reference with matching bf16 rounding points (for validation)
# ----------------------------------------------------------------------------
def reference_forward(params, x_nchw):
    prep = prepare_params(params)
    stride = prep["stride"]
    x = jnp.transpose(x_nchw, (0, 2, 3, 1)).astype(jnp.bfloat16)
    n = x.shape[0]

    def conv(inp, wk, bk, s, pad):
        W_ = prep[wk].astype(jnp.float32)
        b_ = prep[bk]
        kh, kw, ci, co = W_.shape
        patches, oh, ow = im2col(inp.astype(jnp.float32), kh, kw, s, pad)
        y = jnp.dot(patches, W_.reshape(kh * kw * ci, co),
                    precision=jax.lax.Precision.HIGHEST) + b_.reshape(1, co)
        return y.reshape(n, oh, ow, co)

    h1 = jnp.maximum(conv(x, "w1", "b1", 1, 0), 0.0).astype(jnp.bfloat16)
    h2 = jnp.maximum(conv(h1, "w2", "b2", stride, 1), 0.0).astype(jnp.bfloat16)
    y = conv(h2, "w3", "b3", 1, 0)
    if "wd" in prep:
        r = conv(x[:, ::stride, ::stride, :], "wd", "bd", 1, 0)
    else:
        r = x[:, ::stride, ::stride, :].astype(jnp.float32)
    out = jnp.maximum(y + r, 0.0)
    return jnp.transpose(out, (0, 3, 1, 2))


# ----------------------------------------------------------------------------
if __name__ == "__main__":
    key = jax.random.PRNGKey(0)
    kp1, kp2, kp3, kx1, kx3 = jax.random.split(key, 5)

    planes = 32                                   # Bottleneck output = 4*planes = 128

    # Case 1: stride=1, downsample (Cin != 4*planes)  -> fused path, single band,
    #         downsample folded into the conv3 matmul.
    N, Cin, H, W = 2, 64, 16, 16
    x1 = jax.random.normal(kx1, (N, Cin, H, W), jnp.float32)
    p1 = init_bottleneck_params(kp1, Cin, planes, stride=1)
    out1 = jax.block_until_ready(bottleneck_forward(p1, x1))
    assert out1.shape == (N, 4 * planes, H, W), out1.shape

    # Case 2: stride=2, downsample                    -> modular (im2col) path.
    p2 = init_bottleneck_params(kp2, Cin, planes, stride=2)
    out2 = jax.block_until_ready(bottleneck_forward(p2, x1))
    assert out2.shape == (N, 4 * planes, H // 2, W // 2), out2.shape

    # Case 3: stride=1, identity residual (Cin == 4*planes), larger image ->
    #         fused path with two row bands (exercises the band grid axis).
    Cin3, H3, W3 = 4 * planes, 32, 32
    x3 = jax.random.normal(kx3, (N, Cin3, H3, W3), jnp.float32)
    p3 = init_bottleneck_params(kp3, Cin3, planes, stride=1)
    out3 = jax.block_until_ready(bottleneck_forward(p3, x3))
    assert out3.shape == (N, 4 * planes, H3, W3), out3.shape

    # Validate all paths against a pure-JAX reference with identical bf16 rounding.
    for p, xin, o in ((p1, x1, out1), (p2, x1, out2), (p3, x3, out3)):
        ref = reference_forward(p, xin)
        o32 = o.astype(jnp.float32)
        err = float(jnp.max(jnp.abs(o32 - ref)))
        scale = float(jnp.max(jnp.abs(ref))) + 1e-6
        assert err <= 2e-2 * scale + 2e-2, (err, scale)
        assert bool(jnp.all(jnp.isfinite(o32)))

    print("KERNEL_OK")
</pallas_src>

<mosaic_0001>
module attributes {stable_mosaic.version = 11 : i64} {
  func.func @kernel(%arg0: i32, %arg1: i32, %arg2: memref<1x256x64xbf16, #tpu.memory_space<vmem>>, %arg3: memref<64x32xbf16, #tpu.memory_space<vmem>>, %arg4: memref<1x32xf32, #tpu.memory_space<vmem>>, %arg5: memref<288x32xbf16, #tpu.memory_space<vmem>>, %arg6: memref<1x32xf32, #tpu.memory_space<vmem>>, %arg7: memref<96x128xbf16, #tpu.memory_space<vmem>>, %arg8: memref<1x128xf32, #tpu.memory_space<vmem>>, %arg9: memref<1x256x128xbf16, #tpu.memory_space<vmem>>, %arg10: memref<320x32xbf16, #tpu.memory_space<vmem>>) attributes {dimension_semantics = [#tpu.dimension_semantics<parallel>, #tpu.dimension_semantics<arbitrary>], iteration_bounds = array<i64: 2, 1>, scalar_prefetch = 0 : i64, scratch_operands = 1 : i64, tpu.core_type = #tpu.core_type<tc>, window_params = [{transform_indices = @transform_0, window_bounds = array<i64: 1, 256, 64>}, {pipeline_mode = #tpu.pipeline_mode<synchronous>, transform_indices = @transform_1, window_bounds = array<i64: 64, 32>}, {pipeline_mode = #tpu.pipeline_mode<synchronous>, transform_indices = @transform_2, window_bounds = array<i64: 1, 32>}, {pipeline_mode = #tpu.pipeline_mode<synchronous>, transform_indices = @transform_3, window_bounds = array<i64: 288, 32>}, {pipeline_mode = #tpu.pipeline_mode<synchronous>, transform_indices = @transform_4, window_bounds = array<i64: 1, 32>}, {pipeline_mode = #tpu.pipeline_mode<synchronous>, transform_indices = @transform_5, window_bounds = array<i64: 96, 128>}, {pipeline_mode = #tpu.pipeline_mode<synchronous>, transform_indices = @transform_6, window_bounds = array<i64: 1, 128>}, {transform_indices = @transform_7, window_bounds = array<i64: 1, 256, 128>}]} {
    %cst = arith.constant 0.000000e+00 : bf16
    %0 = vector.broadcast %cst : bf16 to vector<32x32xbf16>
    %c0 = arith.constant 0 : index
    %c0_0 = arith.constant 0 : index
    %1 = vector.load %arg10[%c0, %c0_0] : memref<320x32xbf16, #tpu.memory_space<vmem>>, vector<32x32xbf16>
    tpu.vector_store %arg10[%c0, %c0_0], %0 {strides = array<i32>} : memref<320x32xbf16, #tpu.memory_space<vmem>>, vector<32x32xbf16>,
    %cst_1 = arith.constant 0.000000e+00 : bf16
    %2 = vector.broadcast %cst_1 : bf16 to vector<32x32xbf16>
    %c288 = arith.constant 288 : index
    %c0_2 = arith.constant 0 : index
    %3 = vector.load %arg10[%c288, %c0_2] : memref<320x32xbf16, #tpu.memory_space<vmem>>, vector<32x32xbf16>
    tpu.vector_store %arg10[%c288, %c0_2], %2 {strides = array<i32>} : memref<320x32xbf16, #tpu.memory_space<vmem>>, vector<32x32xbf16>,
    %c0_3 = arith.constant 0 : index
    %c0_4 = arith.constant 0 : index
    %c0_5 = arith.constant 0 : index
    %4 = vector.load %arg2[%c0_3, %c0_4, %c0_5] : memref<1x256x64xbf16, #tpu.memory_space<vmem>>, vector<1x256x64xbf16>
    %5 = vector.shape_cast %4 : vector<1x256x64xbf16> to vector<256x64xbf16>
    %c0_6 = arith.constant 0 : index
    %c0_7 = arith.constant 0 : index
    %6 = vector.load %arg3[%c0_6, %c0_7] : memref<64x32xbf16, #tpu.memory_space<vmem>>, vector<64x32xbf16>
    %cst_8 = arith.constant dense<0.000000e+00> : vector<256x32xf32>
    %7 = tpu.matmul %5, %6, %cst_8 {dimension_numbers = #tpu.dot_dimension_numbers<[1], [0], [0], [1], [0, 0, 1, 1], [], []>} : vector<256x64xbf16>, vector<64x32xbf16>, vector<256x32xf32> -> vector<256x32xf32>
    %c0_9 = arith.constant 0 : index
    %c0_10 = arith.constant 0 : index
    %8 = vector.load %arg4[%c0_9, %c0_10] : memref<1x32xf32, #tpu.memory_space<vmem>>, vector<1x32xf32>
    %9 = vector.broadcast %8 : vector<1x32xf32> to vector<256x32xf32>
    %10 = arith.addf %7, %9 : vector<256x32xf32>
    %cst_11 = arith.constant 0.000000e+00 : f32
    %11 = vector.broadcast %cst_11 : f32 to vector<256x32xf32>
    %12 = arith.maximumf %10, %11 : vector<256x32xf32>
    %13 = arith.truncf %12 : vector<256x32xf32> to vector<256x32xbf16>
    %c32 = arith.constant 32 : index
    %c0_12 = arith.constant 0 : index
    %14 = vector.load %arg10[%c32, %c0_12] : memref<320x32xbf16, #tpu.memory_space<vmem>>, vector<256x32xbf16>
    tpu.vector_store %arg10[%c32, %c0_12], %13 {strides = array<i32>} : memref<320x32xbf16, #tpu.memory_space<vmem>>, vector<256x32xbf16>,
    %c0_13 = arith.constant 0 : index
    %c0_14 = arith.constant 0 : index
    %15 = vector.load %arg10[%c0_13, %c0_14] : memref<320x32xbf16, #tpu.memory_space<vmem>>, vector<320x32xbf16>
    %c0_15 = arith.constant 0 : index
    %c0_16 = arith.constant 0 : index
    %c0_17 = arith.constant 0 : index
    %16 = vector.load %arg2[%c0_15, %c0_16, %c0_17] : memref<1x256x64xbf16, #tpu.memory_space<vmem>>, vector<1x256x64xbf16>
    %17 = vector.shape_cast %16 : vector<1x256x64xbf16> to vector<256x64xbf16>
    %18 = tpu.iota {dimensions = array<i32: 0>} : vector<256x32xi32>
    %c16_i32 = arith.constant 16 : i32
    %c0_i32 = arith.constant 0 : i32
    %19 = arith.cmpi eq, %c16_i32, %c0_i32 : i32
    %c1_i32 = arith.constant 1 : i32
    %20 = arith.select %19, %c1_i32, %c16_i32 : i32
    %21 = vector.broadcast %20 : i32 to vector<256x32xi32>
    %22 = arith.remsi %18, %21 : vector<256x32xi32>
    %c0_i32_18 = arith.constant 0 : i32
    %23 = vector.broadcast %c0_i32_18 : i32 to vector<256x32xi32>
    %24 = arith.cmpi ne, %22, %23 : vector<256x32xi32>
    %c0_i32_19 = arith.constant 0 : i32
    %25 = vector.broadcast %c0_i32_19 : i32 to vector<256x32xi32>
    %26 = arith.cmpi slt, %22, %25 : vector<256x32xi32>
    %c0_i32_20 = arith.constant 0 : i32
    %27 = arith.cmpi slt, %20, %c0_i32_20 : i32
    %28 = vector.broadcast %27 : i1 to vector<256x32xi1>
    %29 = vector.broadcast %28 : vector<256x32xi1> to vector<256x32xi1>
    %30 = arith.xori %26, %29 : vector<256x32xi1>
    %31 = arith.andi %30, %24 : vector<256x32xi1>
    %32 = vector.broadcast %20 : i32 to vector<256x32xi32>
    %33 = arith.addi %22, %32 : vector<256x32xi32>
    %34 = arith.select %31, %33, %22 : vector<256x32xi1>, vector<256x32xi32>
    %cst_21 = arith.constant 0.000000e+00 : bf16
    %35 = vector.broadcast %cst_21 : bf16 to vector<256x32xbf16>
    %36 = vector.extract_strided_slice %15 {offsets = [15, 0], sizes = [256, 32], strides = [1, 1]} : vector<320x32xbf16> to vector<256x32xbf16>
    %c1_i32_22 = arith.constant 1 : i32
    %37 = vector.broadcast %c1_i32_22 : i32 to vector<256x32xi32>
    %38 = arith.cmpi sge, %34, %37 : vector<256x32xi32>
    %39 = arith.select %38, %36, %35 : vector<256x32xi1>, vector<256x32xbf16>
    %40 = vector.extract_strided_slice %15 {offsets = [16, 0], sizes = [256, 32], strides = [1, 1]} : vector<320x32xbf16> to vector<256x32xbf16>
    %41 = vector.extract_strided_slice %15 {offsets = [17, 0], sizes = [256, 32], strides = [1, 1]} : vector<320x32xbf16> to vector<256x32xbf16>
    %c14_i32 = arith.constant 14 : i32
    %42 = vector.broadcast %c14_i32 : i32 to vector<256x32xi32>
    %43 = arith.cmpi sle, %34, %42 : vector<256x32xi32>
    %44 = arith.select %43, %41, %35 : vector<256x32xi1>, vector<256x32xbf16>
    %45 = vector.extract_strided_slice %15 {offsets = [31, 0], sizes = [256, 32], strides = [1, 1]} : vector<320x32xbf16> to vector<256x32xbf16>
    %c1_i32_23 = arith.constant 1 : i32
    %46 = vector.broadcast %c1_i32_23 : i32 to vector<256x32xi32>
    %47 = arith.cmpi sge, %34, %46 : vector<256x32xi32>
    %48 = arith.select %47, %45, %35 : vector<256x32xi1>, vector<256x32xbf16>
    %49 = vector.extract_strided_slice %15 {offsets = [32, 0], sizes = [256, 32], strides = [1, 1]} : vector<320x32xbf16> to vector<256x32xbf16>
    %50 = vector.extract_strided_slice %15 {offsets = [33, 0], sizes = [256, 32], strides = [1, 1]} : vector<320x32xbf16> to vector<256x32xbf16>
    %c14_i32_24 = arith.constant 14 : i32
    %51 = vector.broadcast %c14_i32_24 : i32 to vector<256x32xi32>
    %52 = arith.cmpi sle, %34, %51 : vector<256x32xi32>
    %53 = arith.select %52, %50, %35 : vector<256x32xi1>, vector<256x32xbf16>
    %54 = vector.extract_strided_slice %15 {offsets = [47, 0], sizes = [256, 32], strides = [1, 1]} : vector<320x32xbf16> to vector<256x32xbf16>
    %c1_i32_25 = arith.constant 1 : i32
    %55 = vector.broadcast %c1_i32_25 : i32 to vector<256x32xi32>
    %56 = arith.cmpi sge, %34, %55 : vector<256x32xi32>
    %57 = arith.select %56, %54, %35 : vector<256x32xi1>, vector<256x32xbf16>
    %58 = vector.extract_strided_slice %15 {offsets = [48, 0], sizes = [256, 32], strides = [1, 1]} : vector<320x32xbf16> to vector<256x32xbf16>
    %59 = vector.extract_strided_slice %15 {offsets = [49, 0], sizes = [256, 32], strides = [1, 1]} : vector<320x32xbf16> to vector<256x32xbf16>
    %c14_i32_26 = arith.constant 14 : i32
    %60 = vector.broadcast %c14_i32_26 : i32 to vector<256x32xi32>
    %61 = arith.cmpi sle, %34, %60 : vector<256x32xi32>
    %62 = arith.select %61, %59, %35 : vector<256x32xi1>, vector<256x32xbf16>
    %63 = tpu.concatenate %39, %40, %44, %48, %49, %53, %57, %58, %62 in 1 : vector<256x32xbf16>, vector<256x32xbf16>, vector<256x32xbf16>, vector<256x32xbf16>, vector<256x32xbf16>, vector<256x32xbf16>, vector<256x32xbf16>, vector<256x32xbf16>, vector<256x32xbf16> -> vector<256x288xbf16>
    %c0_27 = arith.constant 0 : index
    %c0_28 = arith.constant 0 : index
    %64 = vector.load %arg5[%c0_27, %c0_28] : memref<288x32xbf16, #tpu.memory_space<vmem>>, vector<288x32xbf16>
    %cst_29 = arith.constant dense<0.000000e+00> : vector<256x32xf32>
    %65 = tpu.matmul %63, %64, %cst_29 {dimension_numbers = #tpu.dot_dimension_numbers<[1], [0], [0], [1], [0, 0, 1, 1], [], []>} : vector<256x288xbf16>, vector<288x32xbf16>, vector<256x32xf32> -> vector<256x32xf32>
    %c0_30 = arith.constant 0 : index
    %c0_31 = arith.constant 0 : index
    %66 = vector.load %arg6[%c0_30, %c0_31] : memref<1x32xf32, #tpu.memory_space<vmem>>, vector<1x32xf32>
    %67 = vector.broadcast %66 : vector<1x32xf32> to vector<256x32xf32>
    %68 = arith.addf %65, %67 : vector<256x32xf32>
    %cst_32 = arith.constant 0.000000e+00 : f32
    %69 = vector.broadcast %cst_32 : f32 to vector<256x32xf32>
    %70 = arith.maximumf %68, %69 : vector<256x32xf32>
    %71 = arith.truncf %70 : vector<256x32xf32> to vector<256x32xbf16>
    %72 = tpu.concatenate %71, %17 in 1 : vector<256x32xbf16>, vector<256x64xbf16> -> vector<256x96xbf16>
    %c0_33 = arith.constant 0 : index
    %c0_34 = arith.constant 0 : index
    %73 = vector.load %arg7[%c0_33, %c0_34] : memref<96x128xbf16, #tpu.memory_space<vmem>>, vector<96x128xbf16>
    %cst_35 = arith.constant dense<0.000000e+00> : vector<256x128xf32>
    %74 = tpu.matmul %72, %73, %cst_35 {dimension_numbers = #tpu.dot_dimension_numbers<[1], [0], [0], [1], [0, 0, 1, 1], [], []>} : vector<256x96xbf16>, vector<96x128xbf16>, vector<256x128xf32> -> vector<256x128xf32>
    %c0_36 = arith.constant 0 : index
    %c0_37 = arith.constant 0 : index
    %75 = vector.load %arg8[%c0_36, %c0_37] : memref<1x128xf32, #tpu.memory_space<vmem>>, vector<1x128xf32>
    %76 = vector.broadcast %75 : vector<1x128xf32> to vector<256x128xf32>
    %77 = arith.addf %74, %76 : vector<256x128xf32>
    %cst_38 = arith.constant 0.000000e+00 : f32
    %78 = vector.broadcast %cst_38 : f32 to vector<256x128xf32>
    %79 = arith.maximumf %77, %78 : vector<256x128xf32>
    %80 = arith.truncf %79 : vector<256x128xf32> to vector<256x128xbf16>
    %c0_39 = arith.constant 0 : index
    %c0_40 = arith.constant 0 : index
    %c0_41 = arith.constant 0 : index
    %81 = vector.load %arg9[%c0_39, %c0_40, %c0_41] : memref<1x256x128xbf16, #tpu.memory_space<vmem>>, vector<1x256x128xbf16>
    %82 = vector.shape_cast %81 : vector<1x256x128xbf16> to vector<256x128xbf16>
    %83 = vector.shape_cast %80 : vector<256x128xbf16> to vector<1x256x128xbf16>
    tpu.vector_store %arg9[%c0_39, %c0_40, %c0_41], %83 {strides = array<i32>} : memref<1x256x128xbf16, #tpu.memory_space<vmem>>, vector<1x256x128xbf16>,
    return
  }
  func.func @transform_0(%arg0: i32, %arg1: i32) -> (i32, i32, i32) {
    %c0_i32 = arith.constant 0 : i32
    %c0_i32_0 = arith.constant 0 : i32
    %c0_i32_1 = arith.constant 0 : i32
    return %arg0, %c0_i32, %c0_i32_0 : i32, i32, i32
  }
  func.func @transform_1(%arg0: i32, %arg1: i32) -> (i32, i32) {
    %c0_i32 = arith.constant 0 : i32
    %c0_i32_0 = arith.constant 0 : i32
    %c0_i32_1 = arith.constant 0 : i32
    return %c0_i32, %c0_i32_0 : i32, i32
  }
  func.func @transform_2(%arg0: i32, %arg1: i32) -> (i32, i32) {
    %c0_i32 = arith.constant 0 : i32
    %c0_i32_0 = arith.constant 0 : i32
    %c0_i32_1 = arith.constant 0 : i32
    return %c0_i32, %c0_i32_0 : i32, i32
  }
  func.func @transform_3(%arg0: i32, %arg1: i32) -> (i32, i32) {
    %c0_i32 = arith.constant 0 : i32
    %c0_i32_0 = arith.constant 0 : i32
    %c0_i32_1 = arith.constant 0 : i32
    return %c0_i32, %c0_i32_0 : i32, i32
  }
  func.func @transform_4(%arg0: i32, %arg1: i32) -> (i32, i32) {
    %c0_i32 = arith.constant 0 : i32
    %c0_i32_0 = arith.constant 0 : i32
    %c0_i32_1 = arith.constant 0 : i32
    return %c0_i32, %c0_i32_0 : i32, i32
  }
  func.func @transform_5(%arg0: i32, %arg1: i32) -> (i32, i32) {
    %c0_i32 = arith.constant 0 : i32
    %c0_i32_0 = arith.constant 0 : i32
    %c0_i32_1 = arith.constant 0 : i32
    return %c0_i32, %c0_i32_0 : i32, i32
  }
  func.func @transform_6(%arg0: i32, %arg1: i32) -> (i32, i32) {
    %c0_i32 = arith.constant 0 : i32
    %c0_i32_0 = arith.constant 0 : i32
    %c0_i32_1 = arith.constant 0 : i32
    return %c0_i32, %c0_i32_0 : i32, i32
  }
  func.func @transform_7(%arg0: i32, %arg1: i32) -> (i32, i32, i32) {
    %c0_i32 = arith.constant 0 : i32
    %c0_i32_0 = arith.constant 0 : i32
    return %arg0, %arg1, %c0_i32 : i32, i32, i32
  }
}

</mosaic_0001>

<llo_original>
// kernel: tpu_custom_call.1
$region0: #{tpu_custom_call.1}
  #allocation0 [shape = 'u32[]', space=smem, size = 0x4, offset = 0x4, fixed_abs, tag = 'smem constant byte address 0x4 - core index']
  #allocation1 [shape = 'u32[144,128]{1,0:T(1,128)}', space=vmem, size = 0x12000, scoped, tag = 'internal scratch']
  #allocation2 [shape = 'bf16[320,32]{1,0:T(16,128)(2,1)}', space=vmem, size = 0x14000, scoped, tag = 'scratch operand']
  %s0 = inlined_call_operand.vmem [shape: bf16[2,256,64], index: 0, kind: input, shape index: {}]
  %s1 = inlined_call_operand.vmem [shape: bf16[64,32], index: 1, kind: input, shape index: {}]
  %s2 = inlined_call_operand.vmem [shape: f32[1,32], index: 2, kind: input, shape index: {}]
  %s3 = inlined_call_operand.vmem [shape: bf16[288,32], index: 3, kind: input, shape index: {}]
  %s4 = inlined_call_operand.vmem [shape: f32[1,32], index: 4, kind: input, shape index: {}]
  %s5 = inlined_call_operand.vmem [shape: bf16[96,128], index: 5, kind: input, shape index: {}]
  %s6 = inlined_call_operand.vmem [shape: f32[1,128], index: 6, kind: input, shape index: {}]
  %s7 = inlined_call_operand.hbm [shape: bf16[2,256,128], index: 7, kind: output, shape index: {}]
  %s8 = sld [smem:[#allocation0]]
  $region61: #{tpu_custom_call.1} parent=0
    _
  %s10 = ssub.s32 1, %s8
  %s11 = scalar_select 0, %s10, %s8
  $region1: #{tpu_custom_call.1} parent=0
    #allocation3 [shape = 'u8[131072]{0}', space=vmem, size = 0x20000, scoped, tag = 'output window, operand 0']
    #allocation4 [shape = 's32[2]{0}', space=sflag, size = 0x8, scoped, tag = 'scoped memory for tpu_custom_call.1']
    %12 = vsyncpa [#allocation4], 0
    %s13 = scalar_lea.sflag [#allocation4], 1
    %14 = vsyncpa %s13, 0
    loop: start=0, step=1, limit=4
    $region2: #{tpu_custom_call.1} parent=1 // loop_pre_header
      _
    $region3: #{tpu_custom_call.1} parent=1 // loop_header
      %s16 = sphi 0, %s20
      %p17 = scmp.ge.s32.totalorder %s16, 4
      %s23 = sphi 0, %s35
      %s24 = sphi 0, %s31
      %s25 = sphi 0, %s23
      %s26 = sphi 0, %s24
      %s27 = sphi 0, %s25
      %s28 = sphi 0, %s26
      %s38 = sphi 0, %s40
      %s41 = sphi 0, %s38
      %s42 = sphi 0, %s41
      %s58 = sphi 0, %s42
      %s62 = sphi 0, %s62
      %s64 = sphi 0, %s62
      %s65 = sphi 0, %s64
      %s79 = sphi 0, %s65
      %s83 = sphi 0, %s83
      %s85 = sphi 0, %s83
      %s86 = sphi 0, %s85
      %s100 = sphi 0, %s86
      %s104 = sphi 0, %s104
      %s106 = sphi 0, %s104
      %s107 = sphi 0, %s106
      %s121 = sphi 0, %s107
      %s125 = sphi 0, %s125
      %s127 = sphi 0, %s125
      %s128 = sphi 0, %s127
      %s142 = sphi 0, %s128
      %s146 = sphi 0, %s146
      %s148 = sphi 0, %s146
      %s149 = sphi 0, %s148
      %s163 = sphi 0, %s149
      %s167 = sphi 0, %s167
      %s169 = sphi 0, %s167
      %s170 = sphi 0, %s169
      %s184 = sphi 0, %s170
      %s192 = sphi 0, %s194
      %s195 = sphi 0, %s192
      %s196 = sphi 0, %s195
      %s212 = sphi 0, %s196
    $region4: #{tpu_custom_call.1} parent=1 // loop_header_branch
      %19 = sbr.rel (%p17) target = $region8
    $region5: #{tpu_custom_call.1} parent=1 // loop_body
      %s21 = ssub.s32 %s16, 1
      %s22 = ssub.s32 %s16, 2
      %s29 = sadd.s32 1, %s24
      %p30 = scmp.ge.s32.totalorder %s29, 1
      %s31 = scalar_select %p30, 0, %s29
      %s32 = sadd.s32 1, %s23
      %s33 = scalar_select %p30, %s32, %s23
      %p34 = scmp.ge.s32.totalorder %s33, 2
      %s35 = scalar_select %p34, 0, %s33
      %s36 = ssub.s32 %s23, %s35
      %p37 = scmp.eq.s32.totalorder %s36, 0
      %s39 = sadd.s32 %s38, 1
      %s40 = scalar_select %p37, %s38, %s39
      %p43 = pneg %p37
      %p44 = scmp.eq.s32.totalorder %s16, 1
      %p45 = por %p43, %p44
      %p46 = scmp.ne.s32.totalorder %s38, %s41
      %p47 = scmp.eq.s32.totalorder %s16, 0
      %p48 = por %p46, %p47
      %p49 = scmp.ne.s32.totalorder %s38, %s41
      %p50 = scmp.eq.s32.totalorder %s21, 1
      %p51 = por %p49, %p50
      %p52 = scmp.ne.s32.totalorder %s41, %s42
      %p53 = scmp.eq.s32.totalorder %s21, 0
      %p54 = por %p52, %p53
      %p55 = scmp.ne.s32.totalorder %s41, %s42
      %p56 = scmp.eq.s32.totalorder %s22, 1
      %p57 = por %p55, %p56
      %p59 = scmp.ne.s32.totalorder %s42, %s58
      %p60 = scmp.eq.s32.totalorder %s22, 0
      %p61 = por %p59, %p60
      %s63 = sadd.s32 %s62, 1
      %p66 = scmp.eq.s32.totalorder %s16, 1
      %p67 = scmp.ne.s32.totalorder %s62, %s64
      %p68 = scmp.eq.s32.totalorder %s16, 0
      %p69 = por %p67, %p68
      %p70 = scmp.ne.s32.totalorder %s62, %s64
      %p71 = scmp.eq.s32.totalorder %s21, 1
      %p72 = por %p70, %p71
      %p73 = scmp.ne.s32.totalorder %s64, %s65
      %p74 = scmp.eq.s32.totalorder %s21, 0
      %p75 = por %p73, %p74
      %p76 = scmp.ne.s32.totalorder %s64, %s65
      %p77 = scmp.eq.s32.totalorder %s22, 1
      %p78 = por %p76, %p77
      %p80 = scmp.ne.s32.totalorder %s65, %s79
      %p81 = scmp.eq.s32.totalorder %s22, 0
      %p82 = por %p80, %p81
      %s84 = sadd.s32 %s83, 1
      %p87 = scmp.eq.s32.totalorder %s16, 1
      %p88 = scmp.ne.s32.totalorder %s83, %s85
      %p89 = scmp.eq.s32.totalorder %s16, 0
      %p90 = por %p88, %p89
      %p91 = scmp.ne.s32.totalorder %s83, %s85
      %p92 = scmp.eq.s32.totalorder %s21, 1
      %p93 = por %p91, %p92
      %p94 = scmp.ne.s32.totalorder %s85, %s86
      %p95 = scmp.eq.s32.totalorder %s21, 0
      %p96 = por %p94, %p95
      %p97 = scmp.ne.s32.totalorder %s85, %s86
      %p98 = scmp.eq.s32.totalorder %s22, 1
      %p99 = por %p97, %p98
      %p101 = scmp.ne.s32.totalorder %s86, %s100
      %p102 = scmp.eq.s32.totalorder %s22, 0
      %p103 = por %p101, %p102
      %s105 = sadd.s32 %s104, 1
      %p108 = scmp.eq.s32.totalorder %s16, 1
      %p109 = scmp.ne.s32.totalorder %s104, %s106
      %p110 = scmp.eq.s32.totalorder %s16, 0
      %p111 = por %p109, %p110
      %p112 = scmp.ne.s32.totalorder %s104, %s106
      %p113 = scmp.eq.s32.totalorder %s21, 1
      %p114 = por %p112, %p113
      %p115 = scmp.ne.s32.totalorder %s106, %s107
      %p116 = scmp.eq.s32.totalorder %s21, 0
      %p117 = por %p115, %p116
      %p118 = scmp.ne.s32.totalorder %s106, %s107
      %p119 = scmp.eq.s32.totalorder %s22, 1
      %p120 = por %p118, %p119
      %p122 = scmp.ne.s32.totalorder %s107, %s121
      %p123 = scmp.eq.s32.totalorder %s22, 0
      %p124 = por %p122, %p123
      %s126 = sadd.s32 %s125, 1
      %p129 = scmp.eq.s32.totalorder %s16, 1
      %p130 = scmp.ne.s32.totalorder %s125, %s127
      %p131 = scmp.eq.s32.totalorder %s16, 0
      %p132 = por %p130, %p131
      %p133 = scmp.ne.s32.totalorder %s125, %s127
      %p134 = scmp.eq.s32.totalorder %s21, 1
      %p135 = por %p133, %p134
      %p136 = scmp.ne.s32.totalorder %s127, %s128
      %p137 = scmp.eq.s32.totalorder %s21, 0
      %p138 = por %p136, %p137
      %p139 = scmp.ne.s32.totalorder %s127, %s128
      %p140 = scmp.eq.s32.totalorder %s22, 1
      %p141 = por %p139, %p140
      %p143 = scmp.ne.s32.totalorder %s128, %s142
      %p144 = scmp.eq.s32.totalorder %s22, 0
      %p145 = por %p143, %p144
      %s147 = sadd.s32 %s146, 1
      %p150 = scmp.eq.s32.totalorder %s16, 1
      %p151 = scmp.ne.s32.totalorder %s146, %s148
      %p152 = scmp.eq.s32.totalorder %s16, 0
      %p153 = por %p151, %p152
      %p154 = scmp.ne.s32.totalorder %s146, %s148
      %p155 = scmp.eq.s32.totalorder %s21, 1
      %p156 = por %p154, %p155
      %p157 = scmp.ne.s32.totalorder %s148, %s149
      %p158 = scmp.eq.s32.totalorder %s21, 0
      %p159 = por %p157, %p158
      %p160 = scmp.ne.s32.totalorder %s148, %s149
      %p161 = scmp.eq.s32.totalorder %s22, 1
      %p162 = por %p160, %p161
      %p164 = scmp.ne.s32.totalorder %s149, %s163
      %p165 = scmp.eq.s32.totalorder %s22, 0
      %p166 = por %p164, %p165
      %s168 = sadd.s32 %s167, 1
      %p171 = scmp.eq.s32.totalorder %s16, 1
      %p172 = scmp.ne.s32.totalorder %s167, %s169
      %p173 = scmp.eq.s32.totalorder %s16, 0
      %p174 = por %p172, %p173
      %p175 = scmp.ne.s32.totalorder %s167, %s169
      %p176 = scmp.eq.s32.totalorder %s21, 1
      %p177 = por %p175, %p176
      %p178 = scmp.ne.s32.totalorder %s169, %s170
      %p179 = scmp.eq.s32.totalorder %s21, 0
      %p180 = por %p178, %p179
      %p181 = scmp.ne.s32.totalorder %s169, %s170
      %p182 = scmp.eq.s32.totalorder %s22, 1
      %p183 = por %p181, %p182
      %p185 = scmp.ne.s32.totalorder %s170, %s184
      %p186 = scmp.eq.s32.totalorder %s22, 0
      %p187 = por %p185, %p186
      %s188 = ssub.s32 %s23, %s35
      %s189 = ssub.s32 %s24, %s31
      %s190 = sor.u32 %s188, %s189
      %p191 = scmp.eq.s32.totalorder %s190, 0
      %s193 = sadd.s32 %s192, 1
      %s194 = scalar_select %p191, %s192, %s193
      %p197 = pneg %p191
      %p198 = scmp.eq.s32.totalorder %s16, 1
      %p199 = por %p197, %p198
      %p200 = scmp.ne.s32.totalorder %s192, %s195
      %p201 = scmp.eq.s32.totalorder %s16, 0
      %p202 = por %p200, %p201
      %p203 = scmp.ne.s32.totalorder %s192, %s195
      %p204 = scmp.eq.s32.totalorder %s21, 1
      %p205 = por %p203, %p204
      %p206 = scmp.ne.s32.totalorder %s195, %s196
      %p207 = scmp.eq.s32.totalorder %s21, 0
      %p208 = por %p206, %p207
      %p209 = scmp.ne.s32.totalorder %s195, %s196
      %p210 = scmp.eq.s32.totalorder %s22, 1
      %p211 = por %p209, %p210
      %p213 = scmp.ne.s32.totalorder %s196, %s212
      %p214 = scmp.eq.s32.totalorder %s22, 0
      %p215 = por %p213, %p214
      %p216 = scmp.le.s32.totalorder 1, %s16
      %p217 = scmp.lt.s32.totalorder %s16, 3
      %p218 = pnand %p216, %p217
      %p219 = pneg %p218
      // Predicated region
      $region9: #{tpu_custom_call.1} parent=5 // pred_check
        _
      $region10: #{tpu_custom_call.1} parent=5 // pred_check_branch
        %221 = sbr.rel (%p218) target = $region12
      $region11: #{tpu_custom_call.1} parent=5 // pred_region
        %s222 = ssub.s32 %s16, 1
        // Predicated region
        $region13: #{tpu_custom_call.1} parent=11 // pred_check
          %p223 = pneg %p75
        $region14: #{tpu_custom_call.1} parent=11 // pred_check_branch
          %225 = sbr.rel (%p223) target = $region16
        $region15: #{tpu_custom_call.1} parent=11 // pred_region
          _
        $region16: #{tpu_custom_call.1} parent=11 // pred_fallthru
          _
        // Predicated region
        $region17: #{tpu_custom_call.1} parent=11 // pred_check
          %p226 = pneg %p96
        $region18: #{tpu_custom_call.1} parent=11 // pred_check_branch
          %228 = sbr.rel (%p226) target = $region20
        $region19: #{tpu_custom_call.1} parent=11 // pred_region
          _
        $region20: #{tpu_custom_call.1} parent=11 // pred_fallthru
          _
        // Predicated region
        $region21: #{tpu_custom_call.1} parent=11 // pred_check
          %p229 = pneg %p117
        $region22: #{tpu_custom_call.1} parent=11 // pred_check_branch
          %231 = sbr.rel (%p229) target = $region24
        $region23: #{tpu_custom_call.1} parent=11 // pred_region
          _
        $region24: #{tpu_custom_call.1} parent=11 // pred_fallthru
          _
        // Predicated region
        $region25: #{tpu_custom_call.1} parent=11 // pred_check
          %p232 = pneg %p138
        $region26: #{tpu_custom_call.1} parent=11 // pred_check_branch
          %234 = sbr.rel (%p232) target = $region28
        $region27: #{tpu_custom_call.1} parent=11 // pred_region
          _
        $region28: #{tpu_custom_call.1} parent=11 // pred_fallthru
          _
        // Predicated region
        $region29: #{tpu_custom_call.1} parent=11 // pred_check
          %p235 = pneg %p159
        $region30: #{tpu_custom_call.1} parent=11 // pred_check_branch
          %237 = sbr.rel (%p235) target = $region32
        $region31: #{tpu_custom_call.1} parent=11 // pred_region
          _
        $region32: #{tpu_custom_call.1} parent=11 // pred_fallthru
          _
        // Predicated region
        $region33: #{tpu_custom_call.1} parent=11 // pred_check
          %p238 = pneg %p180
        $region34: #{tpu_custom_call.1} parent=11 // pred_check_branch
          %240 = sbr.rel (%p238) target = $region36
        $region35: #{tpu_custom_call.1} parent=11 // pred_region
          _
        $region36: #{tpu_custom_call.1} parent=11 // pred_fallthru
          _
      $region12: #{tpu_custom_call.1} parent=5 // pred_fallthru
        _
      %p241 = scmp.lt.s32.totalorder %s16, 2
      // Predicated region
      $region37: #{tpu_custom_call.1} parent=5 // pred_check
        %p242 = pneg %p241
      $region38: #{tpu_custom_call.1} parent=5 // pred_check_branch
        %244 = sbr.rel (%p242) target = $region40
      $region39: #{tpu_custom_call.1} parent=5 // pred_region
        // Predicated region
        $region41: #{tpu_custom_call.1} parent=39 // pred_check
          %p245 = pneg %p48
        $region42: #{tpu_custom_call.1} parent=39 // pred_check_branch
          %247 = sbr.rel (%p245) target = $region44
        $region43: #{tpu_custom_call.1} parent=39 // pred_region
          %p248 = scmp.lt.s32.totalorder %s23, 1
          %s249 = scalar_select %p248, %s23, 1
          %s250 = smul.addr %s249, 32
          %s251 = smul.addr %s250, 4
          %s252 = scalar_lea.vmem %s0, %s251
        $region44: #{tpu_custom_call.1} parent=39 // pred_fallthru
          _
      $region40: #{tpu_custom_call.1} parent=5 // pred_fallthru
        _
      %p253 = scmp.le.s32.totalorder 1, %s16
      %p254 = scmp.lt.s32.totalorder %s16, 3
      %p255 = pnand %p253, %p254
      %p256 = pneg %p255
      // Predicated region
      $region45: #{tpu_custom_call.1} parent=5 // pred_check
        _
      $region46: #{tpu_custom_call.1} parent=5 // pred_check_branch
        %258 = sbr.rel (%p255) target = $region48
      $region47: #{tpu_custom_call.1} parent=5 // pred_region
        %s259 = ssub.s32 %s16, 1
        %p260 = scmp.lt.s32.totalorder %s25, 1
        %s261 = scalar_select %p260, %s25, 1
        %s262 = smul.addr %s261, 32
        %s263 = smul.addr %s262, 4
        %s264 = scalar_lea.vmem %s0, %s263
        %p265 = pneg %p54
        %p266 = pneg %p51
        %p267 = pneg %p75
        %p268 = pneg %p72
        %p269 = pneg %p96
        %p270 = pneg %p93
        %p271 = pneg %p117
        %p272 = pneg %p114
        %p273 = pneg %p138
        %p274 = pneg %p135
        %p275 = pneg %p159
        %p276 = pneg %p156
        %p277 = pneg %p180
        %p278 = pneg %p177
        %p279 = pneg %p208
        %p280 = pneg %p205
        %s281 = sand.u32 %s195, 1
        %s282 = scalar_lea.sflag [#allocation4], %s281
        %s283 = sand.u32 %s195, 1
        %s284 = smul.addr %s283, 128
        %s285 = scalar_lea.vmem [#allocation3], %s284
        %p286 = scmp.lt.s32.totalorder %s25, 1
        %s287 = scalar_select %p286, %s25, 1
        %s288 = smul.addr %s287, 32
        %s289 = smul.addr %s288, 4
        %s290 = scalar_lea.vmem %s0, %s289
        %s291 = smul.u32 32, %s26
        %vm295 = vcmask 261120
        %296 = vst.msk [vmem:[#allocation2] sm:$0xff] %vm295, 0
        %297 = vst.msk [vmem:[#allocation2 + $0x8] sm:$0xff] %vm295, 0
        %298 = vst.msk [vmem:[#allocation2 + $0x90] sm:$0xff] %vm295, 0
        %299 = vst.msk [vmem:[#allocation2 + $0x98] sm:$0xff] %vm295, 0
        %v300 = vld [vmem:[%s290] sm:$0xf]
        %v301 = vld [vmem:[%s290 + $0x4] sm:$0xf]
        %v302 = vld [vmem:[%s290 + $0x8] sm:$0xf]
        %v303 = vld [vmem:[%s290 + $0xc] sm:$0xf]
        %v304 = vld [vmem:[%s290 + $0x10] sm:$0xf]
        %v305 = vld [vmem:[%s290 + $0x14] sm:$0xf]
        %v306 = vld [vmem:[%s290 + $0x18] sm:$0xf]
        %v307 = vld [vmem:[%s290 + $0x1c] sm:$0xf]
        %v308 = vld [vmem:[%s290 + $0x20] sm:$0xf]
        %v309 = vld [vmem:[%s290 + $0x24] sm:$0xf]
        %v310 = vld [vmem:[%s290 + $0x28] sm:$0xf]
        %v311 = vld [vmem:[%s290 + $0x2c] sm:$0xf]
        %v312 = vld [vmem:[%s290 + $0x30] sm:$0xf]
        %v313 = vld [vmem:[%s290 + $0x34] sm:$0xf]
        %v314 = vld [vmem:[%s290 + $0x38] sm:$0xf]
        %v315 = vld [vmem:[%s290 + $0x3c] sm:$0xf]
        %v316 = vld [vmem:[%s290 + $0x40] sm:$0xf]
        %v317 = vld [vmem:[%s290 + $0x44] sm:$0xf]
        %v318 = vld [vmem:[%s290 + $0x48] sm:$0xf]
        %v319 = vld [vmem:[%s290 + $0x4c] sm:$0xf]
        %v320 = vld [vmem:[%s290 + $0x50] sm:$0xf]
        %v321 = vld [vmem:[%s290 + $0x54] sm:$0xf]
        %v322 = vld [vmem:[%s290 + $0x58] sm:$0xf]
        %v323 = vld [vmem:[%s290 + $0x5c] sm:$0xf]
        %v324 = vld [vmem:[%s290 + $0x60] sm:$0xf]
        %v325 = vld [vmem:[%s290 + $0x64] sm:$0xf]
        %v326 = vld [vmem:[%s290 + $0x68] sm:$0xf]
        %v327 = vld [vmem:[%s290 + $0x6c] sm:$0xf]
        %v328 = vld [vmem:[%s290 + $0x70] sm:$0xf]
        %v329 = vld [vmem:[%s290 + $0x74] sm:$0xf]
        %v330 = vld [vmem:[%s290 + $0x78] sm:$0xf]
        %v331 = vld [vmem:[%s290 + $0x7c] sm:$0xf]
        %v332 = vld [vmem:[%s1] sm:$0xf]
        %v333 = vld [vmem:[%s1 + $0x4] sm:$0xf]
        %v334 = vld [vmem:[%s1 + $0x8] sm:$0xf]
        %v335 = vld [vmem:[%s1 + $0xc] sm:$0xf]
        %v336 = vld [vmem:[%s1 + $0x10] sm:$0xf]
        %v337 = vld [vmem:[%s1 + $0x14] sm:$0xf]
        %v338 = vld [vmem:[%s1 + $0x18] sm:$0xf]
        %v339 = vld [vmem:[%s1 + $0x1c] sm:$0xf]
        %v340 = vld [vmem:[%s2] sm:$0x1]
        %v342 = vlaneseq
        %v343 = vshrl.u32 %v342, 7
        %v344 = vsub.s32 0, %v343
        %v345 = vrot.slane %v340, %v344
        %v379 = vunpack.c.l.b16 %v300
        %v380 = vunpack.c.l.b16 %v301
        %v381 = vunpack.c.l.b16 %v302
        %v382 = vunpack.c.l.b16 %v303
        %v383 = vunpack.c.l.b16 %v304
        %v384 = vunpack.c.l.b16 %v305
        %v385 = vunpack.c.l.b16 %v306
        %v386 = vunpack.c.l.b16 %v307
        %v387 = vunpack.c.l.b16 %v308
        %v388 = vunpack.c.l.b16 %v309
        %v389 = vunpack.c.l.b16 %v310
        %v390 = vunpack.c.l.b16 %v311
        %v391 = vunpack.c.l.b16 %v312
        %v392 = vunpack.c.l.b16 %v313
        %v393 = vunpack.c.l.b16 %v314
        %v394 = vunpack.c.l.b16 %v315
        %v395 = vunpack.c.l.b16 %v316
        %v396 = vunpack.c.l.b16 %v317
        %v397 = vunpack.c.l.b16 %v318
        %v398 = vunpack.c.l.b16 %v319
        %v399 = vunpack.c.l.b16 %v320
        %v400 = vunpack.c.l.b16 %v321
        %v401 = vunpack.c.l.b16 %v322
        %v402 = vunpack.c.l.b16 %v323
        %v403 = vunpack.c.l.b16 %v324
        %v404 = vunpack.c.l.b16 %v325
        %v405 = vunpack.c.l.b16 %v326
        %v406 = vunpack.c.l.b16 %v327
        %v407 = vunpack.c.l.b16 %v328
        %v408 = vunpack.c.l.b16 %v329
        %v409 = vunpack.c.l.b16 %v330
        %v410 = vunpack.c.l.b16 %v331
        %v411 = vpack.c.b16 %v380, %v379
        %v412 = vpack.c.b16 %v382, %v381
        %v413 = vpack.c.b16 %v384, %v383
        %v414 = vpack.c.b16 %v386, %v385
        %v415 = vpack.c.b16 %v388, %v387
        %v416 = vpack.c.b16 %v390, %v389
        %v417 = vpack.c.b16 %v392, %v391
        %v418 = vpack.c.b16 %v394, %v393
        %v419 = vpack.c.b16 %v396, %v395
        %v420 = vpack.c.b16 %v398, %v397
        %v421 = vpack.c.b16 %v400, %v399
        %v422 = vpack.c.b16 %v402, %v401
        %v423 = vpack.c.b16 %v404, %v403
        %v424 = vpack.c.b16 %v406, %v405
        %v425 = vpack.c.b16 %v408, %v407
        %v426 = vpack.c.b16 %v410, %v409
        %v435 = vunpack.c.l.b16 %v332
        %v436 = vunpack.c.l.b16 %v333
        %v437 = vunpack.c.l.b16 %v334
        %v438 = vunpack.c.l.b16 %v335
        %v439 = vunpack.c.l.b16 %v336
        %v440 = vunpack.c.l.b16 %v337
        %v441 = vunpack.c.l.b16 %v338
        %v442 = vunpack.c.l.b16 %v339
        %v443 = vpack.c.b16 %v436, %v435
        %v444 = vpack.c.b16 %v438, %v437
        %v445 = vpack.c.b16 %v440, %v439
        %v446 = vpack.c.b16 %v442, %v441
        %vm451 = vcmask 523264
        %v453 = vsel %vm451, %v411, 0
        %v456 = vsel %vm451, %v412, 0
        %v459 = vsel %vm451, %v413, 0
        %v462 = vsel %vm451, %v414, 0
        %v465 = vsel %vm451, %v415, 0
        %v468 = vsel %vm451, %v416, 0
        %v471 = vsel %vm451, %v417, 0
        %v474 = vsel %vm451, %v418, 0
        %v477 = vsel %vm451, %v419, 0
        %v480 = vsel %vm451, %v420, 0
        %v483 = vsel %vm451, %v421, 0
        %v486 = vsel %vm451, %v422, 0
        %v489 = vsel %vm451, %v423, 0
        %v492 = vsel %vm451, %v424, 0
        %v495 = vsel %vm451, %v425, 0
        %v498 = vsel %vm451, %v426, 0
        %500 = vmatprep.subr.bf16.mxu0 0
        %501 = vmatpush1.bf16.msra.mxu0 %v443
        %502 = vmatprep.subr.bf16.mxu0 0
        %503 = vmatpush1.bf16.msra.mxu0 %v444
        %504 = vmatprep.subr.bf16.mxu0 0
        %505 = vmatpush1.bf16.msra.mxu0 %v445
        %506 = vmatprep.subr.bf16.mxu0 0
        %507 = vmatpush1.bf16.msra.mxu0 %v446
        %508 = vmatprep.subr.bf16.mxu0 0
        %509 = vmatpush1.bf16.msra.mxu0 0
        %510 = vmatprep.subr.bf16.mxu0 0
        %511 = vmatpush1.bf16.msra.mxu0 0
        %512 = vmatprep.subr.bf16.mxu0 0
        %513 = vmatpush1.bf16.msra.mxu0 0
        %514 = vmatprep.subr.bf16.mxu0 0
        %515 = vmatpush1.bf16.msra.mxu0 0
        %516 = vmatprep.subr.bf16.mxu0 0
        %517 = vmatpush1.bf16.msra.mxu0 0
        %518 = vmatprep.subr.bf16.mxu0 0
        %519 = vmatpush1.bf16.msra.mxu0 0
        %520 = vmatprep.subr.bf16.mxu0 0
        %521 = vmatpush1.bf16.msra.mxu0 0
        %522 = vmatprep.subr.bf16.mxu0 0
        %523 = vmatpush1.bf16.msra.mxu0 0
        %524 = vmatprep.subr.bf16.mxu0 0
        %525 = vmatpush1.bf16.msra.mxu0 0
        %526 = vmatprep.subr.bf16.mxu0 0
        %527 = vmatpush1.bf16.msra.mxu0 0
        %528 = vmatprep.subr.bf16.mxu0 0
        %529 = vmatpush1.bf16.msra.mxu0 0
        %530 = vmatprep.subr.bf16.mxu0 0
        %531 = vmatpush1.bf16.msra.mxu0 0
        %532 = vmatprep.mubr.bf16.mxu0 0
        %533 = vmatmul.mubr.bf16.gmra.mrb[0].mxu0 %v453
        %v534 = vpop.f32.mrb[0].mxu0
        %v535 = vadd.f32 %v345, %v534
        %v536 = vpop.f32.mrb[0].mxu0
        %v537 = vpop.f32.mrb[0].mxu0
        %v538 = vadd.f32 %v345, %v537
        %v539 = vpop.f32.mrb[0].mxu0
        %540 = vmatprep.mubr.bf16.mxu0 0
        %541 = vmatmul.mubr.bf16.gmra.mrb[0].mxu0 %v456
        %v542 = vpop.f32.mrb[0].mxu0
        %v543 = vadd.f32 %v345, %v542
        %v544 = vpop.f32.mrb[0].mxu0
        %v545 = vpop.f32.mrb[0].mxu0
        %v546 = vadd.f32 %v345, %v545
        %v547 = vpop.f32.mrb[0].mxu0
        %548 = vmatprep.mubr.bf16.mxu0 0
        %549 = vmatmul.mubr.bf16.gmra.mrb[0].mxu0 %v459
        %v550 = vpop.f32.mrb[0].mxu0
        %v551 = vadd.f32 %v345, %v550
        %v552 = vpop.f32.mrb[0].mxu0
        %v553 = vpop.f32.mrb[0].mxu0
        %v554 = vadd.f32 %v345, %v553
        %v555 = vpop.f32.mrb[0].mxu0
        %556 = vmatprep.mubr.bf16.mxu0 0
        %557 = vmatmul.mubr.bf16.gmra.mrb[0].mxu0 %v462
        %v558 = vpop.f32.mrb[0].mxu0
        %v559 = vadd.f32 %v345, %v558
        %v560 = vpop.f32.mrb[0].mxu0
        %v561 = vpop.f32.mrb[0].mxu0
        %v562 = vadd.f32 %v345, %v561
        %v563 = vpop.f32.mrb[0].mxu0
        %564 = vmatprep.mubr.bf16.mxu0 0
        %565 = vmatmul.mubr.bf16.gmra.mrb[0].mxu0 %v465
        %v566 = vpop.f32.mrb[0].mxu0
        %v567 = vadd.f32 %v345, %v566
        %v568 = vpop.f32.mrb[0].mxu0
        %v569 = vpop.f32.mrb[0].mxu0
        %v570 = vadd.f32 %v345, %v569
        %v571 = vpop.f32.mrb[0].mxu0
        %572 = vmatprep.mubr.bf16.mxu0 0
        %573 = vmatmul.mubr.bf16.gmra.mrb[0].mxu0 %v468
        %v574 = vpop.f32.mrb[0].mxu0
        %v575 = vadd.f32 %v345, %v574
        %v576 = vpop.f32.mrb[0].mxu0
        %v577 = vpop.f32.mrb[0].mxu0
        %v578 = vadd.f32 %v345, %v577
        %v579 = vpop.f32.mrb[0].mxu0
        %580 = vmatprep.mubr.bf16.mxu0 0
        %581 = vmatmul.mubr.bf16.gmra.mrb[0].mxu0 %v471
        %v582 = vpop.f32.mrb[0].mxu0
        %v583 = vadd.f32 %v345, %v582
        %v584 = vpop.f32.mrb[0].mxu0
        %v585 = vpop.f32.mrb[0].mxu0
        %v586 = vadd.f32 %v345, %v585
        %v587 = vpop.f32.mrb[0].mxu0
        %588 = vmatprep.mubr.bf16.mxu0 0
        %589 = vmatmul.mubr.bf16.gmra.mrb[0].mxu0 %v474
        %v590 = vpop.f32.mrb[0].mxu0
        %v591 = vadd.f32 %v345, %v590
        %v592 = vpop.f32.mrb[0].mxu0
        %v593 = vpop.f32.mrb[0].mxu0
        %v594 = vadd.f32 %v345, %v593
        %v595 = vpop.f32.mrb[0].mxu0
        %596 = vmatprep.mubr.bf16.mxu0 0
        %597 = vmatmul.mubr.bf16.gmra.mrb[0].mxu0 %v477
        %v598 = vpop.f32.mrb[0].mxu0
        %v599 = vadd.f32 %v345, %v598
        %v600 = vpop.f32.mrb[0].mxu0
        %v601 = vpop.f32.mrb[0].mxu0
        %v602 = vadd.f32 %v345, %v601
        %v603 = vpop.f32.mrb[0].mxu0
        %604 = vmatprep.mubr.bf16.mxu0 0
        %605 = vmatmul.mubr.bf16.gmra.mrb[0].mxu0 %v480
        %v606 = vpop.f32.mrb[0].mxu0
        %v607 = vadd.f32 %v345, %v606
        %v608 = vpop.f32.mrb[0].mxu0
        %v609 = vpop.f32.mrb[0].mxu0
        %v610 = vadd.f32 %v345, %v609
        %v611 = vpop.f32.mrb[0].mxu0
        %612 = vmatprep.mubr.bf16.mxu0 0
        %613 = vmatmul.mubr.bf16.gmra.mrb[0].mxu0 %v483
        %v614 = vpop.f32.mrb[0].mxu0
        %v615 = vadd.f32 %v345, %v614
        %v616 = vpop.f32.mrb[0].mxu0
        %v617 = vpop.f32.mrb[0].mxu0
        %v618 = vadd.f32 %v345, %v617
        %v619 = vpop.f32.mrb[0].mxu0
        %620 = vmatprep.mubr.bf16.mxu0 0
        %621 = vmatmul.mubr.bf16.gmra.mrb[0].mxu0 %v486
        %v622 = vpop.f32.mrb[0].mxu0
        %v623 = vadd.f32 %v345, %v622
        %v624 = vpop.f32.mrb[0].mxu0
        %v625 = vpop.f32.mrb[0].mxu0
        %v626 = vadd.f32 %v345, %v625
        %v627 = vpop.f32.mrb[0].mxu0
        %628 = vmatprep.mubr.bf16.mxu0 0
        %629 = vmatmul.mubr.bf16.gmra.mrb[0].mxu0 %v489
        %v630 = vpop.f32.mrb[0].mxu0
        %v631 = vadd.f32 %v345, %v630
        %v632 = vpop.f32.mrb[0].mxu0
        %v633 = vpop.f32.mrb[0].mxu0
        %v634 = vadd.f32 %v345, %v633
        %v635 = vpop.f32.mrb[0].mxu0
        %636 = vmatprep.mubr.bf16.mxu0 0
        %637 = vmatmul.mubr.bf16.gmra.mrb[0].mxu0 %v492
        %v638 = vpop.f32.mrb[0].mxu0
        %v639 = vadd.f32 %v345, %v638
        %v640 = vpop.f32.mrb[0].mxu0
        %v641 = vpop.f32.mrb[0].mxu0
        %v642 = vadd.f32 %v345, %v641
        %v643 = vpop.f32.mrb[0].mxu0
        %644 = vmatprep.mubr.bf16.mxu0 0
        %645 = vmatmul.mubr.bf16.gmra.mrb[0].mxu0 %v495
        %v646 = vpop.f32.mrb[0].mxu0
        %v647 = vadd.f32 %v345, %v646
        %v648 = vpop.f32.mrb[0].mxu0
        %v649 = vpop.f32.mrb[0].mxu0
        %v650 = vadd.f32 %v345, %v649
        %v651 = vpop.f32.mrb[0].mxu0
        %652 = vmatprep.mubr.bf16.mxu0 0
        %653 = vmatmul.mubr.bf16.gmra.mrb[0].mxu0 %v498
        %v654 = vpop.f32.mrb[0].mxu0
        %v655 = vadd.f32 %v345, %v654
        %v656 = vpop.f32.mrb[0].mxu0
        %v657 = vpop.f32.mrb[0].mxu0
        %v658 = vadd.f32 %v345, %v657
        %v659 = vpop.f32.mrb[0].mxu0
        %660 = vdwg.mxu0
        %v661 = vmax.f32 %v535, 0.0
        %v662 = vmax.f32 %v538, 0.0
        %v663 = vmax.f32 %v543, 0.0
        %v664 = vmax.f32 %v546, 0.0
        %v665 = vmax.f32 %v551, 0.0
        %v666 = vmax.f32 %v554, 0.0
        %v667 = vmax.f32 %v559, 0.0
        %v668 = vmax.f32 %v562, 0.0
        %v669 = vmax.f32 %v567, 0.0
        %v670 = vmax.f32 %v570, 0.0
        %v671 = vmax.f32 %v575, 0.0
        %v672 = vmax.f32 %v578, 0.0
        %v673 = vmax.f32 %v583, 0.0
        %v674 = vmax.f32 %v586, 0.0
        %v675 = vmax.f32 %v591, 0.0
        %v676 = vmax.f32 %v594, 0.0
        %v677 = vmax.f32 %v599, 0.0
        %v678 = vmax.f32 %v602, 0.0
        %v679 = vmax.f32 %v607, 0.0
        %v680 = vmax.f32 %v610, 0.0
        %v681 = vmax.f32 %v615, 0.0
        %v682 = vmax.f32 %v618, 0.0
        %v683 = vmax.f32 %v623, 0.0
        %v684 = vmax.f32 %v626, 0.0
        %v685 = vmax.f32 %v631, 0.0
        %v686 = vmax.f32 %v634, 0.0
        %v687 = vmax.f32 %v639, 0.0
        %v688 = vmax.f32 %v642, 0.0
        %v689 = vmax.f32 %v647, 0.0
        %v690 = vmax.f32 %v650, 0.0
        %v691 = vmax.f32 %v655, 0.0
        %v692 = vmax.f32 %v658, 0.0
        %v693 = vpack.c.bf16 %v662, %v661
        %v694 = vpack.c.bf16 %v664, %v663
        %v695 = vpack.c.bf16 %v666, %v665
        %v696 = vpack.c.bf16 %v668, %v667
        %v697 = vpack.c.bf16 %v670, %v669
        %v698 = vpack.c.bf16 %v672, %v671
        %v699 = vpack.c.bf16 %v674, %v673
        %v700 = vpack.c.bf16 %v676, %v675
        %v701 = vpack.c.bf16 %v678, %v677
        %v702 = vpack.c.bf16 %v680, %v679
        %v703 = vpack.c.bf16 %v682, %v681
        %v704 = vpack.c.bf16 %v684, %v683
        %v705 = vpack.c.bf16 %v686, %v685
        %v706 = vpack.c.bf16 %v688, %v687
        %v707 = vpack.c.bf16 %v690, %v689
        %v708 = vpack.c.bf16 %v692, %v691
        %709 = vst.msk [vmem:[#allocation2 + $0x10] sm:$0xff] %vm295, %v693
        %710 = vst.msk [vmem:[#allocation2 + $0x18] sm:$0xff] %vm295, %v694
        %711 = vst.msk [vmem:[#allocation2 + $0x20] sm:$0xff] %vm295, %v695
        %712 = vst.msk [vmem:[#allocation2 + $0x28] sm:$0xff] %vm295, %v696
        %713 = vst.msk [vmem:[#allocation2 + $0x30] sm:$0xff] %vm295, %v697
        %714 = vst.msk [vmem:[#allocation2 + $0x38] sm:$0xff] %vm295, %v698
        %715 = vst.msk [vmem:[#allocation2 + $0x40] sm:$0xff] %vm295, %v699
        %716 = vst.msk [vmem:[#allocation2 + $0x48] sm:$0xff] %vm295, %v700
        %717 = vst.msk [vmem:[#allocation2 + $0x50] sm:$0xff] %vm295, %v701
        %718 = vst.msk [vmem:[#allocation2 + $0x58] sm:$0xff] %vm295, %v702
        %719 = vst.msk [vmem:[#allocation2 + $0x60] sm:$0xff] %vm295, %v703
        %720 = vst.msk [vmem:[#allocation2 + $0x68] sm:$0xff] %vm295, %v704
        %721 = vst.msk [vmem:[#allocation2 + $0x70] sm:$0xff] %vm295, %v705
        %722 = vst.msk [vmem:[#allocation2 + $0x78] sm:$0xff] %vm295, %v706
        %723 = vst.msk [vmem:[#allocation2 + $0x80] sm:$0xff] %vm295, %v707
        %724 = vst.msk [vmem:[#allocation2 + $0x88] sm:$0xff] %vm295, %v708
        %v725 = vld [vmem:[#allocation2] sm:$0xff]
        %v726 = vld [vmem:[#allocation2 + $0x8] sm:$0xff]
        %v727 = vld [vmem:[#allocation2 + $0x10] sm:$0xff]
        %v728 = vld [vmem:[#allocation2 + $0x18] sm:$0xff]
        %v729 = vld [vmem:[#allocation2 + $0x20] sm:$0xff]
        %v730 = vld [vmem:[#allocation2 + $0x28] sm:$0xff]
        %v731 = vld [vmem:[#allocation2 + $0x30] sm:$0xff]
        %v732 = vld [vmem:[#allocation2 + $0x38] sm:$0xff]
        %v733 = vld [vmem:[#allocation2 + $0x40] sm:$0xff]
        %v734 = vld [vmem:[#allocation2 + $0x48] sm:$0xff]
        %v735 = vld [vmem:[#allocation2 + $0x50] sm:$0xff]
        %v736 = vld [vmem:[#allocation2 + $0x58] sm:$0xff]
        %v737 = vld [vmem:[#allocation2 + $0x60] sm:$0xff]
        %v738 = vld [vmem:[#allocation2 + $0x68] sm:$0xff]
        %v739 = vld [vmem:[#allocation2 + $0x70] sm:$0xff]
        %v740 = vld [vmem:[#allocation2 + $0x78] sm:$0xff]
        %v741 = vld [vmem:[#allocation2 + $0x80] sm:$0xff]
        %v742 = vld [vmem:[#allocation2 + $0x88] sm:$0xff]
        %v743 = vld [vmem:[#allocation2 + $0x90] sm:$0xff]
        %v744 = vld [vmem:[#allocation2 + $0x98] sm:$0xff]
        %v745 = vld [vmem:[%s290] sm:$0xf]
        %v746 = vld [vmem:[%s290 + $0x4] sm:$0xf]
        %v747 = vld [vmem:[%s290 + $0x8] sm:$0xf]
        %v748 = vld [vmem:[%s290 + $0xc] sm:$0xf]
        %v749 = vld [vmem:[%s290 + $0x10] sm:$0xf]
        %v750 = vld [vmem:[%s290 + $0x14] sm:$0xf]
        %v751 = vld [vmem:[%s290 + $0x18] sm:$0xf]
        %v752 = vld [vmem:[%s290 + $0x1c] sm:$0xf]
        %v753 = vld [vmem:[%s290 + $0x20] sm:$0xf]
        %v754 = vld [vmem:[%s290 + $0x24] sm:$0xf]
        %v755 = vld [vmem:[%s290 + $0x28] sm:$0xf]
        %v756 = vld [vmem:[%s290 + $0x2c] sm:$0xf]
        %v757 = vld [vmem:[%s290 + $0x30] sm:$0xf]
        %v758 = vld [vmem:[%s290 + $0x34] sm:$0xf]
        %v759 = vld [vmem:[%s290 + $0x38] sm:$0xf]
        %v760 = vld [vmem:[%s290 + $0x3c] sm:$0xf]
        %v761 = vld [vmem:[%s290 + $0x40] sm:$0xf]
        %v762 = vld [vmem:[%s290 + $0x44] sm:$0xf]
        %v763 = vld [vmem:[%s290 + $0x48] sm:$0xf]
        %v764 = vld [vmem:[%s290 + $0x4c] sm:$0xf]
        %v765 = vld [vmem:[%s290 + $0x50] sm:$0xf]
        %v766 = vld [vmem:[%s290 + $0x54] sm:$0xf]
        %v767 = vld [vmem:[%s290 + $0x58] sm:$0xf]
        %v768 = vld [vmem:[%s290 + $0x5c] sm:$0xf]
        %v769 = vld [vmem:[%s290 + $0x60] sm:$0xf]
        %v770 = vld [vmem:[%s290 + $0x64] sm:$0xf]
        %v771 = vld [vmem:[%s290 + $0x68] sm:$0xf]
        %v772 = vld [vmem:[%s290 + $0x6c] sm:$0xf]
        %v773 = vld [vmem:[%s290 + $0x70] sm:$0xf]
        %v774 = vld [vmem:[%s290 + $0x74] sm:$0xf]
        %v775 = vld [vmem:[%s290 + $0x78] sm:$0xf]
        %v776 = vld [vmem:[%s290 + $0x7c] sm:$0xf]
        %v777 = vlaneseq
        %v778 = vshrl.u32 %v777, 7
        %v779 = vadd.s32 %v778, 8
        %v780 = vadd.s32 %v778, 16
        %v781 = vadd.s32 %v778, 24
        %v782 = vadd.s32 %v778, 32
        %v783 = vadd.s32 %v778, 40
        %v784 = vadd.s32 %v778, 48
        %v785 = vadd.s32 %v778, 56
        %v786 = vadd.s32 %v778, 64
        %v787 = vadd.s32 %v778, 72
        %v788 = vadd.s32 %v778, 80
        %v789 = vadd.s32 %v778, 88
        %v790 = vadd.s32 %v778, 96
        %v791 = vadd.s32 %v778, 104
        %v792 = vadd.s32 %v778, 112
        %v793 = vadd.s32 %v778, 120
        %v794 = vadd.s32 %v778, 128
        %v795 = vadd.s32 %v778, 136
        %v796 = vadd.s32 %v778, 144
        %v797 = vadd.s32 %v778, 152
        %v798 = vadd.s32 %v778, 160
        %v799 = vadd.s32 %v778, 168
        %v800 = vadd.s32 %v778, 176
        %v801 = vadd.s32 %v778, 184
        %v802 = vadd.s32 %v778, 192
        %v803 = vadd.s32 %v778, 200
        %v804 = vadd.s32 %v778, 208
        %v805 = vadd.s32 %v778, 216
        %v806 = vadd.s32 %v778, 224
        %v807 = vadd.s32 %v778, 232
        %v808 = vadd.s32 %v778, 240
        %v809 = vadd.s32 %v778, 248
        %vm810 = vcmp.lt.s32.totalorder %v778, 0
        %v811 = vsub.s32 0, %v778
        %v812 = vsel %vm810, %v811, %v778
        %v813 = vshrl.u32 %v812, 4
        %v814 = vand.u32 %v812, 15
        %v815 = vsub.s32 0, %v814
        %v816 = vsel %vm810, %v815, %v814
        %vm817 = vcmp.lt.s32.totalorder %v779, 0
        %v818 = vsub.s32 0, %v779
        %v819 = vsel %vm817, %v818, %v779
        %v820 = vshrl.u32 %v819, 4
        %v821 = vand.u32 %v819, 15
        %v822 = vsub.s32 0, %v821
        %v823 = vsel %vm817, %v822, %v821
        %vm824 = vcmp.lt.s32.totalorder %v780, 0
        %v825 = vsub.s32 0, %v780
        %v826 = vsel %vm824, %v825, %v780
        %v827 = vshrl.u32 %v826, 4
        %v828 = vand.u32 %v826, 15
        %v829 = vsub.s32 0, %v828
        %v830 = vsel %vm824, %v829, %v828
        %vm831 = vcmp.lt.s32.totalorder %v781, 0
        %v832 = vsub.s32 0, %v781
        %v833 = vsel %vm831, %v832, %v781
        %v834 = vshrl.u32 %v833, 4
        %v835 = vand.u32 %v833, 15
        %v836 = vsub.s32 0, %v835
        %v837 = vsel %vm831, %v836, %v835
        %vm838 = vcmp.lt.s32.totalorder %v782, 0
        %v839 = vsub.s32 0, %v782
        %v840 = vsel %vm838, %v839, %v782
        %v841 = vshrl.u32 %v840, 4
        %v842 = vand.u32 %v840, 15
        %v843 = vsub.s32 0, %v842
        %v844 = vsel %vm838, %v843, %v842
        %vm845 = vcmp.lt.s32.totalorder %v783, 0
        %v846 = vsub.s32 0, %v783
        %v847 = vsel %vm845, %v846, %v783
        %v848 = vshrl.u32 %v847, 4
        %v849 = vand.u32 %v847, 15
        %v850 = vsub.s32 0, %v849
        %v851 = vsel %vm845, %v850, %v849
        %vm852 = vcmp.lt.s32.totalorder %v784, 0
        %v853 = vsub.s32 0, %v784
        %v854 = vsel %vm852, %v853, %v784
        %v855 = vshrl.u32 %v854, 4
        %v856 = vand.u32 %v854, 15
        %v857 = vsub.s32 0, %v856
        %v858 = vsel %vm852, %v857, %v856
        %vm859 = vcmp.lt.s32.totalorder %v785, 0
        %v860 = vsub.s32 0, %v785
        %v861 = vsel %vm859, %v860, %v785
        %v862 = vshrl.u32 %v861, 4
        %v863 = vand.u32 %v861, 15
        %v864 = vsub.s32 0, %v863
        %v865 = vsel %vm859, %v864, %v863
        %vm866 = vcmp.lt.s32.totalorder %v786, 0
        %v867 = vsub.s32 0, %v786
        %v868 = vsel %vm866, %v867, %v786
        %v869 = vshrl.u32 %v868, 4
        %v870 = vand.u32 %v868, 15
        %v871 = vsub.s32 0, %v870
        %v872 = vsel %vm866, %v871, %v870
        %vm873 = vcmp.lt.s32.totalorder %v787, 0
        %v874 = vsub.s32 0, %v787
        %v875 = vsel %vm873, %v874, %v787
        %v876 = vshrl.u32 %v875, 4
        %v877 = vand.u32 %v875, 15
        %v878 = vsub.s32 0, %v877
        %v879 = vsel %vm873, %v878, %v877
        %vm880 = vcmp.lt.s32.totalorder %v788, 0
        %v881 = vsub.s32 0, %v788
        %v882 = vsel %vm880, %v881, %v788
        %v883 = vshrl.u32 %v882, 4
        %v884 = vand.u32 %v882, 15
        %v885 = vsub.s32 0, %v884
        %v886 = vsel %vm880, %v885, %v884
        %vm887 = vcmp.lt.s32.totalorder %v789, 0
        %v888 = vsub.s32 0, %v789
        %v889 = vsel %vm887, %v888, %v789
        %v890 = vshrl.u32 %v889, 4
        %v891 = vand.u32 %v889, 15
        %v892 = vsub.s32 0, %v891
        %v893 = vsel %vm887, %v892, %v891
        %vm894 = vcmp.lt.s32.totalorder %v790, 0
        %v895 = vsub.s32 0, %v790
        %v896 = vsel %vm894, %v895, %v790
        %v897 = vshrl.u32 %v896, 4
        %v898 = vand.u32 %v896, 15
        %v899 = vsub.s32 0, %v898
        %v900 = vsel %vm894, %v899, %v898
        %vm901 = vcmp.lt.s32.totalorder %v791, 0
        %v902 = vsub.s32 0, %v791
        %v903 = vsel %vm901, %v902, %v791
        %v904 = vshrl.u32 %v903, 4
        %v905 = vand.u32 %v903, 15
        %v906 = vsub.s32 0, %v905
        %v907 = vsel %vm901, %v906, %v905
        %vm908 = vcmp.lt.s32.totalorder %v792, 0
        %v909 = vsub.s32 0, %v792
        %v910 = vsel %vm908, %v909, %v792
        %v911 = vshrl.u32 %v910, 4
        %v912 = vand.u32 %v910, 15
        %v913 = vsub.s32 0, %v912
        %v914 = vsel %vm908, %v913, %v912
        %vm915 = vcmp.lt.s32.totalorder %v793, 0
        %v916 = vsub.s32 0, %v793
        %v917 = vsel %vm915, %v916, %v793
        %v918 = vshrl.u32 %v917, 4
        %v919 = vand.u32 %v917, 15
        %v920 = vsub.s32 0, %v919
        %v921 = vsel %vm915, %v920, %v919
        %vm922 = vcmp.lt.s32.totalorder %v794, 0
        %v923 = vsub.s32 0, %v794
        %v924 = vsel %vm922, %v923, %v794
        %v925 = vshrl.u32 %v924, 4
        %v926 = vand.u32 %v924, 15
        %v927 = vsub.s32 0, %v926
        %v928 = vsel %vm922, %v927, %v926
        %vm929 = vcmp.lt.s32.totalorder %v795, 0
        %v930 = vsub.s32 0, %v795
        %v931 = vsel %vm929, %v930, %v795
        %v932 = vshrl.u32 %v931, 4
        %v933 = vand.u32 %v931, 15
        %v934 = vsub.s32 0, %v933
        %v935 = vsel %vm929, %v934, %v933
        %vm936 = vcmp.lt.s32.totalorder %v796, 0
        %v937 = vsub.s32 0, %v796
        %v938 = vsel %vm936, %v937, %v796
        %v939 = vshrl.u32 %v938, 4
        %v940 = vand.u32 %v938, 15
        %v941 = vsub.s32 0, %v940
        %v942 = vsel %vm936, %v941, %v940
        %vm943 = vcmp.lt.s32.totalorder %v797, 0
        %v944 = vsub.s32 0, %v797
        %v945 = vsel %vm943, %v944, %v797
        %v946 = vshrl.u32 %v945, 4
        %v947 = vand.u32 %v945, 15
        %v948 = vsub.s32 0, %v947
        %v949 = vsel %vm943, %v948, %v947
        %vm950 = vcmp.lt.s32.totalorder %v798, 0
        %v951 = vsub.s32 0, %v798
        %v952 = vsel %vm950, %v951, %v798
        %v953 = vshrl.u32 %v952, 4
        %v954 = vand.u32 %v952, 15
        %v955 = vsub.s32 0, %v954
        %v956 = vsel %vm950, %v955, %v954
        %vm957 = vcmp.lt.s32.totalorder %v799, 0
        %v958 = vsub.s32 0, %v799
        %v959 = vsel %vm957, %v958, %v799
        %v960 = vshrl.u32 %v959, 4
        %v961 = vand.u32 %v959, 15
        %v962 = vsub.s32 0, %v961
        %v963 = vsel %vm957, %v962, %v961
        %vm964 = vcmp.lt.s32.totalorder %v800, 0
        %v965 = vsub.s32 0, %v800
        %v966 = vsel %vm964, %v965, %v800
        %v967 = vshrl.u32 %v966, 4
        %v968 = vand.u32 %v966, 15
        %v969 = vsub.s32 0, %v968
        %v970 = vsel %vm964, %v969, %v968
        %vm971 = vcmp.lt.s32.totalorder %v801, 0
        %v972 = vsub.s32 0, %v801
        %v973 = vsel %vm971, %v972, %v801
        %v974 = vshrl.u32 %v973, 4
        %v975 = vand.u32 %v973, 15
        %v976 = vsub.s32 0, %v975
        %v977 = vsel %vm971, %v976, %v975
        %vm978 = vcmp.lt.s32.totalorder %v802, 0
        %v979 = vsub.s32 0, %v802
        %v980 = vsel %vm978, %v979, %v802
        %v981 = vshrl.u32 %v980, 4
        %v982 = vand.u32 %v980, 15
        %v983 = vsub.s32 0, %v982
        %v984 = vsel %vm978, %v983, %v982
        %vm985 = vcmp.lt.s32.totalorder %v803, 0
        %v986 = vsub.s32 0, %v803
        %v987 = vsel %vm985, %v986, %v803
        %v988 = vshrl.u32 %v987, 4
        %v989 = vand.u32 %v987, 15
        %v990 = vsub.s32 0, %v989
        %v991 = vsel %vm985, %v990, %v989
        %vm992 = vcmp.lt.s32.totalorder %v804, 0
        %v993 = vsub.s32 0, %v804
        %v994 = vsel %vm992, %v993, %v804
        %v995 = vshrl.u32 %v994, 4
        %v996 = vand.u32 %v994, 15
        %v997 = vsub.s32 0, %v996
        %v998 = vsel %vm992, %v997, %v996
        %vm999 = vcmp.lt.s32.totalorder %v805, 0
        %v1000 = vsub.s32 0, %v805
        %v1001 = vsel %vm999, %v1000, %v805
        %v1002 = vshrl.u32 %v1001, 4
        %v1003 = vand.u32 %v1001, 15
        %v1004 = vsub.s32 0, %v1003
        %v1005 = vsel %vm999, %v1004, %v1003
        %vm1006 = vcmp.lt.s32.totalorder %v806, 0
        %v1007 = vsub.s32 0, %v806
        %v1008 = vsel %vm1006, %v1007, %v806
        %v1009 = vshrl.u32 %v1008, 4
        %v1010 = vand.u32 %v1008, 15
        %v1011 = vsub.s32 0, %v1010
        %v1012 = vsel %vm1006, %v1011, %v1010
        %vm1013 = vcmp.lt.s32.totalorder %v807, 0
        %v1014 = vsub.s32 0, %v807
        %v1015 = vsel %vm1013, %v1014, %v807
        %v1016 = vshrl.u32 %v1015, 4
        %v1017 = vand.u32 %v1015, 15
        %v1018 = vsub.s32 0, %v1017
        %v1019 = vsel %vm1013, %v1018, %v1017
        %vm1020 = vcmp.lt.s32.totalorder %v808, 0
        %v1021 = vsub.s32 0, %v808
        %v1022 = vsel %vm1020, %v1021, %v808
        %v1023 = vshrl.u32 %v1022, 4
        %v1024 = vand.u32 %v1022, 15
        %v1025 = vsub.s32 0, %v1024
        %v1026 = vsel %vm1020, %v1025, %v1024
        %vm1027 = vcmp.lt.s32.totalorder %v809, 0
        %v1028 = vsub.s32 0, %v809
        %v1029 = vsel %vm1027, %v1028, %v809
        %v1030 = vshrl.u32 %v1029, 4
        %v1031 = vand.u32 %v1029, 15
        %v1032 = vsub.s32 0, %v1031
        %v1033 = vsel %vm1027, %v1032, %v1031
        %vm1034 = vcmp.ne.s32.totalorder %v816, 0
        %vm1035 = vcmp.ne.s32.totalorder %v823, 0
        %vm1036 = vcmp.ne.s32.totalorder %v830, 0
        %vm1037 = vcmp.ne.s32.totalorder %v837, 0
        %vm1038 = vcmp.ne.s32.totalorder %v844, 0
        %vm1039 = vcmp.ne.s32.totalorder %v851, 0
        %vm1040 = vcmp.ne.s32.totalorder %v858, 0
        %vm1041 = vcmp.ne.s32.totalorder %v865, 0
        %vm1042 = vcmp.ne.s32.totalorder %v872, 0
        %vm1043 = vcmp.ne.s32.totalorder %v879, 0
        %vm1044 = vcmp.ne.s32.totalorder %v886, 0
        %vm1045 = vcmp.ne.s32.totalorder %v893, 0
        %vm1046 = vcmp.ne.s32.totalorder %v900, 0
        %vm1047 = vcmp.ne.s32.totalorder %v907, 0
        %vm1048 = vcmp.ne.s32.totalorder %v914, 0
        %vm1049 = vcmp.ne.s32.totalorder %v921, 0
        %vm1050 = vcmp.ne.s32.totalorder %v928, 0
        %vm1051 = vcmp.ne.s32.totalorder %v935, 0
        %vm1052 = vcmp.ne.s32.totalorder %v942, 0
        %vm1053 = vcmp.ne.s32.totalorder %v949, 0
        %vm1054 = vcmp.ne.s32.totalorder %v956, 0
        %vm1055 = vcmp.ne.s32.totalorder %v963, 0
        %vm1056 = vcmp.ne.s32.totalorder %v970, 0
        %vm1057 = vcmp.ne.s32.totalorder %v977, 0
        %vm1058 = vcmp.ne.s32.totalorder %v984, 0
        %vm1059 = vcmp.ne.s32.totalorder %v991, 0
        %vm1060 = vcmp.ne.s32.totalorder %v998, 0
        %vm1061 = vcmp.ne.s32.totalorder %v1005, 0
        %vm1062 = vcmp.ne.s32.totalorder %v1012, 0
        %vm1063 = vcmp.ne.s32.totalorder %v1019, 0
        %vm1064 = vcmp.ne.s32.totalorder %v1026, 0
        %vm1065 = vcmp.ne.s32.totalorder %v1033, 0
        %vm1066 = vcmp.lt.s32.totalorder %v816, 0
        %vm1067 = vcmp.lt.s32.totalorder %v823, 0
        %vm1068 = vcmp.lt.s32.totalorder %v830, 0
        %vm1069 = vcmp.lt.s32.totalorder %v837, 0
        %vm1070 = vcmp.lt.s32.totalorder %v844, 0
        %vm1071 = vcmp.lt.s32.totalorder %v851, 0
        %vm1072 = vcmp.lt.s32.totalorder %v858, 0
        %vm1073 = vcmp.lt.s32.totalorder %v865, 0
        %vm1074 = vcmp.lt.s32.totalorder %v872, 0
        %vm1075 = vcmp.lt.s32.totalorder %v879, 0
        %vm1076 = vcmp.lt.s32.totalorder %v886, 0
        %vm1077 = vcmp.lt.s32.totalorder %v893, 0
        %vm1078 = vcmp.lt.s32.totalorder %v900, 0
        %vm1079 = vcmp.lt.s32.totalorder %v907, 0
        %vm1080 = vcmp.lt.s32.totalorder %v914, 0
        %vm1081 = vcmp.lt.s32.totalorder %v921, 0
        %vm1082 = vcmp.lt.s32.totalorder %v928, 0
        %vm1083 = vcmp.lt.s32.totalorder %v935, 0
        %vm1084 = vcmp.lt.s32.totalorder %v942, 0
        %vm1085 = vcmp.lt.s32.totalorder %v949, 0
        %vm1086 = vcmp.lt.s32.totalorder %v956, 0
        %vm1087 = vcmp.lt.s32.totalorder %v963, 0
        %vm1088 = vcmp.lt.s32.totalorder %v970, 0
        %vm1089 = vcmp.lt.s32.totalorder %v977, 0
        %vm1090 = vcmp.lt.s32.totalorder %v984, 0
        %vm1091 = vcmp.lt.s32.totalorder %v991, 0
        %vm1092 = vcmp.lt.s32.totalorder %v998, 0
        %vm1093 = vcmp.lt.s32.totalorder %v1005, 0
        %vm1094 = vcmp.lt.s32.totalorder %v1012, 0
        %vm1095 = vcmp.lt.s32.totalorder %v1019, 0
        %vm1096 = vcmp.lt.s32.totalorder %v1026, 0
        %vm1097 = vcmp.lt.s32.totalorder %v1033, 0
        %vm1098 = vmand %vm1066, %vm1034
        %vm1099 = vmand %vm1067, %vm1035
        %vm1100 = vmand %vm1068, %vm1036
        %vm1101 = vmand %vm1069, %vm1037
        %vm1102 = vmand %vm1070, %vm1038
        %vm1103 = vmand %vm1071, %vm1039
        %vm1104 = vmand %vm1072, %vm1040
        %vm1105 = vmand %vm1073, %vm1041
        %vm1106 = vmand %vm1074, %vm1042
        %vm1107 = vmand %vm1075, %vm1043
        %vm1108 = vmand %vm1076, %vm1044
        %vm1109 = vmand %vm1077, %vm1045
        %vm1110 = vmand %vm1078, %vm1046
        %vm1111 = vmand %vm1079, %vm1047
        %vm1112 = vmand %vm1080, %vm1048
        %vm1113 = vmand %vm1081, %vm1049
        %vm1114 = vmand %vm1082, %vm1050
        %vm1115 = vmand %vm1083, %vm1051
        %vm1116 = vmand %vm1084, %vm1052
        %vm1117 = vmand %vm1085, %vm1053
        %vm1118 = vmand %vm1086, %vm1054
        %vm1119 = vmand %vm1087, %vm1055
        %vm1120 = vmand %vm1088, %vm1056
        %vm1121 = vmand %vm1089, %vm1057
        %vm1122 = vmand %vm1090, %vm1058
        %vm1123 = vmand %vm1091, %vm1059
        %vm1124 = vmand %vm1092, %vm1060
        %vm1125 = vmand %vm1093, %vm1061
        %vm1126 = vmand %vm1094, %vm1062
        %vm1127 = vmand %vm1095, %vm1063
        %vm1128 = vmand %vm1096, %vm1064
        %vm1129 = vmand %vm1097, %vm1065
        %v1130 = vadd.s32 %v816, 16
        %v1131 = vadd.s32 %v823, 16
        %v1132 = vadd.s32 %v830, 16
        %v1133 = vadd.s32 %v837, 16
        %v1134 = vadd.s32 %v844, 16
        %v1135 = vadd.s32 %v851, 16
        %v1136 = vadd.s32 %v858, 16
        %v1137 = vadd.s32 %v865, 16
        %v1138 = vadd.s32 %v872, 16
        %v1139 = vadd.s32 %v879, 16
        %v1140 = vadd.s32 %v886, 16
        %v1141 = vadd.s32 %v893, 16
        %v1142 = vadd.s32 %v900, 16
        %v1143 = vadd.s32 %v907, 16
        %v1144 = vadd.s32 %v914, 16
        %v1145 = vadd.s32 %v921, 16
        %v1146 = vadd.s32 %v928, 16
        %v1147 = vadd.s32 %v935, 16
        %v1148 = vadd.s32 %v942, 16
        %v1149 = vadd.s32 %v949, 16
        %v1150 = vadd.s32 %v956, 16
        %v1151 = vadd.s32 %v963, 16
        %v1152 = vadd.s32 %v970, 16
        %v1153 = vadd.s32 %v977, 16
        %v1154 = vadd.s32 %v984, 16
        %v1155 = vadd.s32 %v991, 16
        %v1156 = vadd.s32 %v998, 16
        %v1157 = vadd.s32 %v1005, 16
        %v1158 = vadd.s32 %v1012, 16
        %v1159 = vadd.s32 %v1019, 16
        %v1160 = vadd.s32 %v1026, 16
        %v1161 = vadd.s32 %v1033, 16
        %v1162 = vsel %vm1098, %v1130, %v816
        %v1163 = vsel %vm1099, %v1131, %v823
        %v1164 = vsel %vm1100, %v1132, %v830
        %v1165 = vsel %vm1101, %v1133, %v837
        %v1166 = vsel %vm1102, %v1134, %v844
        %v1167 = vsel %vm1103, %v1135, %v851
        %v1168 = vsel %vm1104, %v1136, %v858
        %v1169 = vsel %vm1105, %v1137, %v865
        %v1170 = vsel %vm1106, %v1138, %v872
        %v1171 = vsel %vm1107, %v1139, %v879
        %v1172 = vsel %vm1108, %v1140, %v886
        %v1173 = vsel %vm1109, %v1141, %v893
        %v1174 = vsel %vm1110, %v1142, %v900
        %v1175 = vsel %vm1111, %v1143, %v907
        %v1176 = vsel %vm1112, %v1144, %v914
        %v1177 = vsel %vm1113, %v1145, %v921
        %v1178 = vsel %vm1114, %v1146, %v928
        %v1179 = vsel %vm1115, %v1147, %v935
        %v1180 = vsel %vm1116, %v1148, %v942
        %v1181 = vsel %vm1117, %v1149, %v949
        %v1182 = vsel %vm1118, %v1150, %v956
        %v1183 = vsel %vm1119, %v1151, %v963
        %v1184 = vsel %vm1120, %v1152, %v970
        %v1185 = vsel %vm1121, %v1153, %v977
        %v1186 = vsel %vm1122, %v1154, %v984
        %v1187 = vsel %vm1123, %v1155, %v991
        %v1188 = vsel %vm1124, %v1156, %v998
        %v1189 = vsel %vm1125, %v1157, %v1005
        %v1190 = vsel %vm1126, %v1158, %v1012
        %v1191 = vsel %vm1127, %v1159, %v1019
        %v1192 = vsel %vm1128, %v1160, %v1026
        %v1193 = vsel %vm1129, %v1161, %v1033
        %vm1194 = vcmp.ge.s32.totalorder %v1162, 1
        %vm1195 = vcmp.ge.s32.totalorder %v1163, 1
        %vm1196 = vcmp.ge.s32.totalorder %v1164, 1
        %vm1197 = vcmp.ge.s32.totalorder %v1165, 1
        %vm1198 = vcmp.ge.s32.totalorder %v1166, 1
        %vm1199 = vcmp.ge.s32.totalorder %v1167, 1
        %vm1200 = vcmp.ge.s32.totalorder %v1168, 1
        %vm1201 = vcmp.ge.s32.totalorder %v1169, 1
        %vm1202 = vcmp.ge.s32.totalorder %v1170, 1
        %vm1203 = vcmp.ge.s32.totalorder %v1171, 1
        %vm1204 = vcmp.ge.s32.totalorder %v1172, 1
        %vm1205 = vcmp.ge.s32.totalorder %v1173, 1
        %vm1206 = vcmp.ge.s32.totalorder %v1174, 1
        %vm1207 = vcmp.ge.s32.totalorder %v1175, 1
        %vm1208 = vcmp.ge.s32.totalorder %v1176, 1
        %vm1209 = vcmp.ge.s32.totalorder %v1177, 1
        %vm1210 = vcmp.ge.s32.totalorder %v1178, 1
        %vm1211 = vcmp.ge.s32.totalorder %v1179, 1
        %vm1212 = vcmp.ge.s32.totalorder %v1180, 1
        %vm1213 = vcmp.ge.s32.totalorder %v1181, 1
        %vm1214 = vcmp.ge.s32.totalorder %v1182, 1
        %vm1215 = vcmp.ge.s32.totalorder %v1183, 1
        %vm1216 = vcmp.ge.s32.totalorder %v1184, 1
        %vm1217 = vcmp.ge.s32.totalorder %v1185, 1
        %vm1218 = vcmp.ge.s32.totalorder %v1186, 1
        %vm1219 = vcmp.ge.s32.totalorder %v1187, 1
        %vm1220 = vcmp.ge.s32.totalorder %v1188, 1
        %vm1221 = vcmp.ge.s32.totalorder %v1189, 1
        %vm1222 = vcmp.ge.s32.totalorder %v1190, 1
        %vm1223 = vcmp.ge.s32.totalorder %v1191, 1
        %vm1224 = vcmp.ge.s32.totalorder %v1192, 1
        %vm1225 = vcmp.ge.s32.totalorder %v1193, 1
        %vm1226 = vmpackc.low %vm1194, %vm1194
        %vm1227 = vmpackc.low %vm1195, %vm1195
        %vm1228 = vmpackc.low %vm1196, %vm1196
        %vm1229 = vmpackc.low %vm1197, %vm1197
        %vm1230 = vmpackc.low %vm1198, %vm1198
        %vm1231 = vmpackc.low %vm1199, %vm1199
        %vm1232 = vmpackc.low %vm1200, %vm1200
        %vm1233 = vmpackc.low %vm1201, %vm1201
        %vm1234 = vmpackc.low %vm1202, %vm1202
        %vm1235 = vmpackc.low %vm1203, %vm1203
        %vm1236 = vmpackc.low %vm1204, %vm1204
        %vm1237 = vmpackc.low %vm1205, %vm1205
        %vm1238 = vmpackc.low %vm1206, %vm1206
        %vm1239 = vmpackc.low %vm1207, %vm1207
        %vm1240 = vmpackc.low %vm1208, %vm1208
        %vm1241 = vmpackc.low %vm1209, %vm1209
        %vm1242 = vmpackc.low %vm1210, %vm1210
        %vm1243 = vmpackc.low %vm1211, %vm1211
        %vm1244 = vmpackc.low %vm1212, %vm1212
        %vm1245 = vmpackc.low %vm1213, %vm1213
        %vm1246 = vmpackc.low %vm1214, %vm1214
        %vm1247 = vmpackc.low %vm1215, %vm1215
        %vm1248 = vmpackc.low %vm1216, %vm1216
        %vm1249 = vmpackc.low %vm1217, %vm1217
        %vm1250 = vmpackc.low %vm1218, %vm1218
        %vm1251 = vmpackc.low %vm1219, %vm1219
        %vm1252 = vmpackc.low %vm1220, %vm1220
        %vm1253 = vmpackc.low %vm1221, %vm1221
        %vm1254 = vmpackc.low %vm1222, %vm1222
        %vm1255 = vmpackc.low %vm1223, %vm1223
        %vm1256 = vmpackc.low %vm1224, %vm1224
        %vm1257 = vmpackc.low %vm1225, %vm1225
        %v1258 = vsel %vm1226, 65537, 0
        %v1259 = vsel %vm1227, 65537, 0
        %v1260 = vsel %vm1228, 65537, 0
        %v1261 = vsel %vm1229, 65537, 0
        %v1262 = vsel %vm1230, 65537, 0
        %v1263 = vsel %vm1231, 65537, 0
        %v1264 = vsel %vm1232, 65537, 0
        %v1265 = vsel %vm1233, 65537, 0
        %v1266 = vsel %vm1234, 65537, 0
        %v1267 = vsel %vm1235, 65537, 0
        %v1268 = vsel %vm1236, 65537, 0
        %v1269 = vsel %vm1237, 65537, 0
        %v1270 = vsel %vm1238, 65537, 0
        %v1271 = vsel %vm1239, 65537, 0
        %v1272 = vsel %vm1240, 65537, 0
        %v1273 = vsel %vm1241, 65537, 0
        %v1274 = vsel %vm1242, 65537, 0
        %v1275 = vsel %vm1243, 65537, 0
        %v1276 = vsel %vm1244, 65537, 0
        %v1277 = vsel %vm1245, 65537, 0
        %v1278 = vsel %vm1246, 65537, 0
        %v1279 = vsel %vm1247, 65537, 0
        %v1280 = vsel %vm1248, 65537, 0
        %v1281 = vsel %vm1249, 65537, 0
        %v1282 = vsel %vm1250, 65537, 0
        %v1283 = vsel %vm1251, 65537, 0
        %v1284 = vsel %vm1252, 65537, 0
        %v1285 = vsel %vm1253, 65537, 0
        %v1286 = vsel %vm1254, 65537, 0
        %v1287 = vsel %vm1255, 65537, 0
        %v1288 = vsel %vm1256, 65537, 0
        %v1289 = vsel %vm1257, 65537, 0
        %v1290 = vunpack.c.l.b16 %v1258
        %v1291 = vunpack.c.l.b16 %v1259
        %v1292 = vunpack.c.l.b16 %v1260
        %v1293 = vunpack.c.l.b16 %v1261
        %v1294 = vunpack.c.l.b16 %v1262
        %v1295 = vunpack.c.l.b16 %v1263
        %v1296 = vunpack.c.l.b16 %v1264
        %v1297 = vunpack.c.l.b16 %v1265
        %v1298 = vunpack.c.l.b16 %v1266
        %v1299 = vunpack.c.l.b16 %v1267
        %v1300 = vunpack.c.l.b16 %v1268
        %v1301 = vunpack.c.l.b16 %v1269
        %v1302 = vunpack.c.l.b16 %v1270
        %v1303 = vunpack.c.l.b16 %v1271
        %v1304 = vunpack.c.l.b16 %v1272
        %v1305 = vunpack.c.l.b16 %v1273
        %v1306 = vunpack.c.l.b16 %v1274
        %v1307 = vunpack.c.l.b16 %v1275
        %v1308 = vunpack.c.l.b16 %v1276
        %v1309 = vunpack.c.l.b16 %v1277
        %v1310 = vunpack.c.l.b16 %v1278
        %v1311 = vunpack.c.l.b16 %v1279
        %v1312 = vunpack.c.l.b16 %v1280
        %v1313 = vunpack.c.l.b16 %v1281
        %v1314 = vunpack.c.l.b16 %v1282
        %v1315 = vunpack.c.l.b16 %v1283
        %v1316 = vunpack.c.l.b16 %v1284
        %v1317 = vunpack.c.l.b16 %v1285
        %v1318 = vunpack.c.l.b16 %v1286
        %v1319 = vunpack.c.l.b16 %v1287
        %v1320 = vunpack.c.l.b16 %v1288
        %v1321 = vunpack.c.l.b16 %v1289
        %v1322 = vpack.c.b16 %v1291, %v1290
        %v1323 = vpack.c.b16 %v1293, %v1292
        %v1324 = vpack.c.b16 %v1295, %v1294
        %v1325 = vpack.c.b16 %v1297, %v1296
        %v1326 = vpack.c.b16 %v1299, %v1298
        %v1327 = vpack.c.b16 %v1301, %v1300
        %v1328 = vpack.c.b16 %v1303, %v1302
        %v1329 = vpack.c.b16 %v1305, %v1304
        %v1330 = vpack.c.b16 %v1307, %v1306
        %v1331 = vpack.c.b16 %v1309, %v1308
        %v1332 = vpack.c.b16 %v1311, %v1310
        %v1333 = vpack.c.b16 %v1313, %v1312
        %v1334 = vpack.c.b16 %v1315, %v1314
        %v1335 = vpack.c.b16 %v1317, %v1316
        %v1336 = vpack.c.b16 %v1319, %v1318
        %v1337 = vpack.c.b16 %v1321, %v1320
        %vm1338 = vsmask.f32 7424
        %v1340 = vshll.u32 %v1322, 16
        %v1342 = vrot.slane %v1340, 1
        %v1343 = vshrl.u32 %v1322, 16
        %v1345 = vor.u32 %v1343, %v1342
        %v1347 = vshll.u32 %v1323, 16
        %v1349 = vrot.slane %v1347, 1
        %v1350 = vsel %vm1338, %v1345, %v1349
        %v1351 = vshrl.u32 %v1323, 16
        %v1353 = vor.u32 %v1351, %v1349
        %v1355 = vshll.u32 %v1324, 16
        %v1357 = vrot.slane %v1355, 1
        %v1358 = vsel %vm1338, %v1353, %v1357
        %v1359 = vshrl.u32 %v1324, 16
        %v1361 = vor.u32 %v1359, %v1357
        %v1363 = vshll.u32 %v1325, 16
        %v1365 = vrot.slane %v1363, 1
        %v1366 = vsel %vm1338, %v1361, %v1365
        %v1367 = vshrl.u32 %v1325, 16
        %v1369 = vor.u32 %v1367, %v1365
        %v1371 = vshll.u32 %v1326, 16
        %v1373 = vrot.slane %v1371, 1
        %v1374 = vsel %vm1338, %v1369, %v1373
        %v1375 = vshrl.u32 %v1326, 16
        %v1377 = vor.u32 %v1375, %v1373
        %v1379 = vshll.u32 %v1327, 16
        %v1381 = vrot.slane %v1379, 1
        %v1382 = vsel %vm1338, %v1377, %v1381
        %v1383 = vshrl.u32 %v1327, 16
        %v1385 = vor.u32 %v1383, %v1381
        %v1387 = vshll.u32 %v1328, 16
        %v1389 = vrot.slane %v1387, 1
        %v1390 = vsel %vm1338, %v1385, %v1389
        %v1391 = vshrl.u32 %v1328, 16
        %v1393 = vor.u32 %v1391, %v1389
        %v1395 = vshll.u32 %v1329, 16
        %v1397 = vrot.slane %v1395, 1
        %v1398 = vsel %vm1338, %v1393, %v1397
        %v1399 = vshrl.u32 %v1329, 16
        %v1401 = vor.u32 %v1399, %v1397
        %v1403 = vshll.u32 %v1330, 16
        %v1405 = vrot.slane %v1403, 1
        %v1406 = vsel %vm1338, %v1401, %v1405
        %v1407 = vshrl.u32 %v1330, 16
        %v1409 = vor.u32 %v1407, %v1405
        %v1411 = vshll.u32 %v1331, 16
        %v1413 = vrot.slane %v1411, 1
        %v1414 = vsel %vm1338, %v1409, %v1413
        %v1415 = vshrl.u32 %v1331, 16
        %v1417 = vor.u32 %v1415, %v1413
        %v1419 = vshll.u32 %v1332, 16
        %v1421 = vrot.slane %v1419, 1
        %v1422 = vsel %vm1338, %v1417, %v1421
        %v1423 = vshrl.u32 %v1332, 16
        %v1425 = vor.u32 %v1423, %v1421
        %v1427 = vshll.u32 %v1333, 16
        %v1429 = vrot.slane %v1427, 1
        %v1430 = vsel %vm1338, %v1425, %v1429
        %v1431 = vshrl.u32 %v1333, 16
        %v1433 = vor.u32 %v1431, %v1429
        %v1435 = vshll.u32 %v1334, 16
        %v1437 = vrot.slane %v1435, 1
        %v1438 = vsel %vm1338, %v1433, %v1437
        %v1439 = vshrl.u32 %v1334, 16
        %v1441 = vor.u32 %v1439, %v1437
        %v1443 = vshll.u32 %v1335, 16
        %v1445 = vrot.slane %v1443, 1
        %v1446 = vsel %vm1338, %v1441, %v1445
        %v1447 = vshrl.u32 %v1335, 16
        %v1449 = vor.u32 %v1447, %v1445
        %v1451 = vshll.u32 %v1336, 16
        %v1453 = vrot.slane %v1451, 1
        %v1454 = vsel %vm1338, %v1449, %v1453
        %v1455 = vshrl.u32 %v1336, 16
        %v1457 = vor.u32 %v1455, %v1453
        %v1459 = vshll.u32 %v1337, 16
        %v1461 = vrot.slane %v1459, 1
        %v1462 = vsel %vm1338, %v1457, %v1461
        %v1463 = vshrl.u32 %v1337, 16
        %v1465 = vor.u32 %v1463, %v1461
        %vm1466 = vcmp.ne.s16.totalorder %v1342, 0
        %vm1467 = vcmp.ne.s16.totalorder %v1350, 0
        %vm1468 = vcmp.ne.s16.totalorder %v1358, 0
        %vm1469 = vcmp.ne.s16.totalorder %v1366, 0
        %vm1470 = vcmp.ne.s16.totalorder %v1374, 0
        %vm1471 = vcmp.ne.s16.totalorder %v1382, 0
        %vm1472 = vcmp.ne.s16.totalorder %v1390, 0
        %vm1473 = vcmp.ne.s16.totalorder %v1398, 0
        %vm1474 = vcmp.ne.s16.totalorder %v1406, 0
        %vm1475 = vcmp.ne.s16.totalorder %v1414, 0
        %vm1476 = vcmp.ne.s16.totalorder %v1422, 0
        %vm1477 = vcmp.ne.s16.totalorder %v1430, 0
        %vm1478 = vcmp.ne.s16.totalorder %v1438, 0
        %vm1479 = vcmp.ne.s16.totalorder %v1446, 0
        %vm1480 = vcmp.ne.s16.totalorder %v1454, 0
        %vm1481 = vcmp.ne.s16.totalorder %v1462, 0
        %vm1482 = vcmp.ne.s16.totalorder %v1465, 0
        %v1483 = vsel %vm1466, %v725, 0
        %v1484 = vsel %vm1467, %v726, 0
        %v1485 = vsel %vm1468, %v727, 0
        %v1486 = vsel %vm1469, %v728, 0
        %v1487 = vsel %vm1470, %v729, 0
        %v1488 = vsel %vm1471, %v730, 0
        %v1489 = vsel %vm1472, %v731, 0
        %v1490 = vsel %vm1473, %v732, 0
        %v1491 = vsel %vm1474, %v733, 0
        %v1492 = vsel %vm1475, %v734, 0
        %v1493 = vsel %vm1476, %v735, 0
        %v1494 = vsel %vm1477, %v736, 0
        %v1495 = vsel %vm1478, %v737, 0
        %v1496 = vsel %vm1479, %v738, 0
        %v1497 = vsel %vm1480, %v739, 0
        %v1498 = vsel %vm1481, %v740, 0
        %v1499 = vsel %vm1482, %v741, 0
        %vm1500 = vcmp.le.s32.totalorder %v1162, 14
        %vm1501 = vcmp.le.s32.totalorder %v1163, 14
        %vm1502 = vcmp.le.s32.totalorder %v1164, 14
        %vm1503 = vcmp.le.s32.totalorder %v1165, 14
        %vm1504 = vcmp.le.s32.totalorder %v1166, 14
        %vm1505 = vcmp.le.s32.totalorder %v1167, 14
        %vm1506 = vcmp.le.s32.totalorder %v1168, 14
        %vm1507 = vcmp.le.s32.totalorder %v1169, 14
        %vm1508 = vcmp.le.s32.totalorder %v1170, 14
        %vm1509 = vcmp.le.s32.totalorder %v1171, 14
        %vm1510 = vcmp.le.s32.totalorder %v1172, 14
        %vm1511 = vcmp.le.s32.totalorder %v1173, 14
        %vm1512 = vcmp.le.s32.totalorder %v1174, 14
        %vm1513 = vcmp.le.s32.totalorder %v1175, 14
        %vm1514 = vcmp.le.s32.totalorder %v1176, 14
        %vm1515 = vcmp.le.s32.totalorder %v1177, 14
        %vm1516 = vcmp.le.s32.totalorder %v1178, 14
        %vm1517 = vcmp.le.s32.totalorder %v1179, 14
        %vm1518 = vcmp.le.s32.totalorder %v1180, 14
        %vm1519 = vcmp.le.s32.totalorder %v1181, 14
        %vm1520 = vcmp.le.s32.totalorder %v1182, 14
        %vm1521 = vcmp.le.s32.totalorder %v1183, 14
        %vm1522 = vcmp.le.s32.totalorder %v1184, 14
        %vm1523 = vcmp.le.s32.totalorder %v1185, 14
        %vm1524 = vcmp.le.s32.totalorder %v1186, 14
        %vm1525 = vcmp.le.s32.totalorder %v1187, 14
        %vm1526 = vcmp.le.s32.totalorder %v1188, 14
        %vm1527 = vcmp.le.s32.totalorder %v1189, 14
        %vm1528 = vcmp.le.s32.totalorder %v1190, 14
        %vm1529 = vcmp.le.s32.totalorder %v1191, 14
        %vm1530 = vcmp.le.s32.totalorder %v1192, 14
        %vm1531 = vcmp.le.s32.totalorder %v1193, 14
        %vm1532 = vmpackc.low %vm1500, %vm1500
        %vm1533 = vmpackc.low %vm1501, %vm1501
        %vm1534 = vmpackc.low %vm1502, %vm1502
        %vm1535 = vmpackc.low %vm1503, %vm1503
        %vm1536 = vmpackc.low %vm1504, %vm1504
        %vm1537 = vmpackc.low %vm1505, %vm1505
        %vm1538 = vmpackc.low %vm1506, %vm1506
        %vm1539 = vmpackc.low %vm1507, %vm1507
        %vm1540 = vmpackc.low %vm1508, %vm1508
        %vm1541 = vmpackc.low %vm1509, %vm1509
        %vm1542 = vmpackc.low %vm1510, %vm1510
        %vm1543 = vmpackc.low %vm1511, %vm1511
        %vm1544 = vmpackc.low %vm1512, %vm1512
        %vm1545 = vmpackc.low %vm1513, %vm1513
        %vm1546 = vmpackc.low %vm1514, %vm1514
        %vm1547 = vmpackc.low %vm1515, %vm1515
        %vm1548 = vmpackc.low %vm1516, %vm1516
        %vm1549 = vmpackc.low %vm1517, %vm1517
        %vm1550 = vmpackc.low %vm1518, %vm1518
        %vm1551 = vmpackc.low %vm1519, %vm1519
        %vm1552 = vmpackc.low %vm1520, %vm1520
        %vm1553 = vmpackc.low %vm1521, %vm1521
        %vm1554 = vmpackc.low %vm1522, %vm1522
        %vm1555 = vmpackc.low %vm1523, %vm1523
        %vm1556 = vmpackc.low %vm1524, %vm1524
        %vm1557 = vmpackc.low %vm1525, %vm1525
        %vm1558 = vmpackc.low %vm1526, %vm1526
        %vm1559 = vmpackc.low %vm1527, %vm1527
        %vm1560 = vmpackc.low %vm1528, %vm1528
        %vm1561 = vmpackc.low %vm1529, %vm1529
        %vm1562 = vmpackc.low %vm1530, %vm1530
        %vm1563 = vmpackc.low %vm1531, %vm1531
        %v1564 = vsel %vm1532, 65537, 0
        %v1565 = vsel %vm1533, 65537, 0
        %v1566 = vsel %vm1534, 65537, 0
        %v1567 = vsel %vm1535, 65537, 0
        %v1568 = vsel %vm1536, 65537, 0
        %v1569 = vsel %vm1537, 65537, 0
        %v1570 = vsel %vm1538, 65537, 0
        %v1571 = vsel %vm1539, 65537, 0
        %v1572 = vsel %vm1540, 65537, 0
        %v1573 = vsel %vm1541, 65537, 0
        %v1574 = vsel %vm1542, 65537, 0
        %v1575 = vsel %vm1543, 65537, 0
        %v1576 = vsel %vm1544, 65537, 0
        %v1577 = vsel %vm1545, 65537, 0
        %v1578 = vsel %vm1546, 65537, 0
        %v1579 = vsel %vm1547, 65537, 0
        %v1580 = vsel %vm1548, 65537, 0
        %v1581 = vsel %vm1549, 65537, 0
        %v1582 = vsel %vm1550, 65537, 0
        %v1583 = vsel %vm1551, 65537, 0
        %v1584 = vsel %vm1552, 65537, 0
        %v1585 = vsel %vm1553, 65537, 0
        %v1586 = vsel %vm1554, 65537, 0
        %v1587 = vsel %vm1555, 65537, 0
        %v1588 = vsel %vm1556, 65537, 0
        %v1589 = vsel %vm1557, 65537, 0
        %v1590 = vsel %vm1558, 65537, 0
        %v1591 = vsel %vm1559, 65537, 0
        %v1592 = vsel %vm1560, 65537, 0
        %v1593 = vsel %vm1561, 65537, 0
        %v1594 = vsel %vm1562, 65537, 0
        %v1595 = vsel %vm1563, 65537, 0
        %v1596 = vunpack.c.l.b16 %v1564
        %v1597 = vunpack.c.l.b16 %v1565
        %v1598 = vunpack.c.l.b16 %v1566
        %v1599 = vunpack.c.l.b16 %v1567
        %v1600 = vunpack.c.l.b16 %v1568
        %v1601 = vunpack.c.l.b16 %v1569
        %v1602 = vunpack.c.l.b16 %v1570
        %v1603 = vunpack.c.l.b16 %v1571
        %v1604 = vunpack.c.l.b16 %v1572
        %v1605 = vunpack.c.l.b16 %v1573
        %v1606 = vunpack.c.l.b16 %v1574
        %v1607 = vunpack.c.l.b16 %v1575
        %v1608 = vunpack.c.l.b16 %v1576
        %v1609 = vunpack.c.l.b16 %v1577
        %v1610 = vunpack.c.l.b16 %v1578
        %v1611 = vunpack.c.l.b16 %v1579
        %v1612 = vunpack.c.l.b16 %v1580
        %v1613 = vunpack.c.l.b16 %v1581
        %v1614 = vunpack.c.l.b16 %v1582
        %v1615 = vunpack.c.l.b16 %v1583
        %v1616 = vunpack.c.l.b16 %v1584
        %v1617 = vunpack.c.l.b16 %v1585
        %v1618 = vunpack.c.l.b16 %v1586
        %v1619 = vunpack.c.l.b16 %v1587
        %v1620 = vunpack.c.l.b16 %v1588
        %v1621 = vunpack.c.l.b16 %v1589
        %v1622 = vunpack.c.l.b16 %v1590
        %v1623 = vunpack.c.l.b16 %v1591
        %v1624 = vunpack.c.l.b16 %v1592
        %v1625 = vunpack.c.l.b16 %v1593
        %v1626 = vunpack.c.l.b16 %v1594
        %v1627 = vunpack.c.l.b16 %v1595
        %v1628 = vpack.c.b16 %v1597, %v1596
        %v1629 = vpack.c.b16 %v1599, %v1598
        %v1630 = vpack.c.b16 %v1601, %v1600
        %v1631 = vpack.c.b16 %v1603, %v1602
        %v1632 = vpack.c.b16 %v1605, %v1604
        %v1633 = vpack.c.b16 %v1607, %v1606
        %v1634 = vpack.c.b16 %v1609, %v1608
        %v1635 = vpack.c.b16 %v1611, %v1610
        %v1636 = vpack.c.b16 %v1613, %v1612
        %v1637 = vpack.c.b16 %v1615, %v1614
        %v1638 = vpack.c.b16 %v1617, %v1616
        %v1639 = vpack.c.b16 %v1619, %v1618
        %v1640 = vpack.c.b16 %v1621, %v1620
        %v1641 = vpack.c.b16 %v1623, %v1622
        %v1642 = vpack.c.b16 %v1625, %v1624
        %v1643 = vpack.c.b16 %v1627, %v1626
        %vm1644 = vsmask.f32 256
        %v1646 = vshrl.u32 %v1628, 16
        %v1648 = vrot.slane %v1646, 7
        %v1649 = vshll.u32 %v1628, 16
        %v1651 = vor.u32 %v1648, %v1649
        %v1653 = vshrl.u32 %v1629, 16
        %v1655 = vrot.slane %v1653, 7
        %v1656 = vshll.u32 %v1629, 16
        %v1658 = vor.u32 %v1655, %v1656
        %v1659 = vsel %vm1644, %v1648, %v1658
        %v1661 = vshrl.u32 %v1630, 16
        %v1663 = vrot.slane %v1661, 7
        %v1664 = vshll.u32 %v1630, 16
        %v1666 = vor.u32 %v1663, %v1664
        %v1667 = vsel %vm1644, %v1655, %v1666
        %v1669 = vshrl.u32 %v1631, 16
        %v1671 = vrot.slane %v1669, 7
        %v1672 = vshll.u32 %v1631, 16
        %v1674 = vor.u32 %v1671, %v1672
        %v1675 = vsel %vm1644, %v1663, %v1674
        %v1677 = vshrl.u32 %v1632, 16
        %v1679 = vrot.slane %v1677, 7
        %v1680 = vshll.u32 %v1632, 16
        %v1682 = vor.u32 %v1679, %v1680
        %v1683 = vsel %vm1644, %v1671, %v1682
        %v1685 = vshrl.u32 %v1633, 16
        %v1687 = vrot.slane %v1685, 7
        %v1688 = vshll.u32 %v1633, 16
        %v1690 = vor.u32 %v1687, %v1688
        %v1691 = vsel %vm1644, %v1679, %v1690
        %v1693 = vshrl.u32 %v1634, 16
        %v1695 = vrot.slane %v1693, 7
        %v1696 = vshll.u32 %v1634, 16
        %v1698 = vor.u32 %v1695, %v1696
        %v1699 = vsel %vm1644, %v1687, %v1698
        %v1701 = vshrl.u32 %v1635, 16
        %v1703 = vrot.slane %v1701, 7
        %v1704 = vshll.u32 %v1635, 16
        %v1706 = vor.u32 %v1703, %v1704
        %v1707 = vsel %vm1644, %v1695, %v1706
        %v1709 = vshrl.u32 %v1636, 16
        %v1711 = vrot.slane %v1709, 7
        %v1712 = vshll.u32 %v1636, 16
        %v1714 = vor.u32 %v1711, %v1712
        %v1715 = vsel %vm1644, %v1703, %v1714
        %v1717 = vshrl.u32 %v1637, 16
        %v1719 = vrot.slane %v1717, 7
        %v1720 = vshll.u32 %v1637, 16
        %v1722 = vor.u32 %v1719, %v1720
        %v1723 = vsel %vm1644, %v1711, %v1722
        %v1725 = vshrl.u32 %v1638, 16
        %v1727 = vrot.slane %v1725, 7
        %v1728 = vshll.u32 %v1638, 16
        %v1730 = vor.u32 %v1727, %v1728
        %v1731 = vsel %vm1644, %v1719, %v1730
        %v1733 = vshrl.u32 %v1639, 16
        %v1735 = vrot.slane %v1733, 7
        %v1736 = vshll.u32 %v1639, 16
        %v1738 = vor.u32 %v1735, %v1736
        %v1739 = vsel %vm1644, %v1727, %v1738
        %v1741 = vshrl.u32 %v1640, 16
        %v1743 = vrot.slane %v1741, 7
        %v1744 = vshll.u32 %v1640, 16
        %v1746 = vor.u32 %v1743, %v1744
        %v1747 = vsel %vm1644, %v1735, %v1746
        %v1749 = vshrl.u32 %v1641, 16
        %v1751 = vrot.slane %v1749, 7
        %v1752 = vshll.u32 %v1641, 16
        %v1754 = vor.u32 %v1751, %v1752
        %v1755 = vsel %vm1644, %v1743, %v1754
        %v1757 = vshrl.u32 %v1642, 16
        %v1759 = vrot.slane %v1757, 7
        %v1760 = vshll.u32 %v1642, 16
        %v1762 = vor.u32 %v1759, %v1760
        %v1763 = vsel %vm1644, %v1751, %v1762
        %v1765 = vshrl.u32 %v1643, 16
        %v1767 = vrot.slane %v1765, 7
        %v1768 = vshll.u32 %v1643, 16
        %v1770 = vor.u32 %v1767, %v1768
        %v1771 = vsel %vm1644, %v1759, %v1770
        %vm1772 = vcmp.ne.s16.totalorder %v1651, 0
        %vm1773 = vcmp.ne.s16.totalorder %v1659, 0
        %vm1774 = vcmp.ne.s16.totalorder %v1667, 0
        %vm1775 = vcmp.ne.s16.totalorder %v1675, 0
        %vm1776 = vcmp.ne.s16.totalorder %v1683, 0
        %vm1777 = vcmp.ne.s16.totalorder %v1691, 0
        %vm1778 = vcmp.ne.s16.totalorder %v1699, 0
        %vm1779 = vcmp.ne.s16.totalorder %v1707, 0
        %vm1780 = vcmp.ne.s16.totalorder %v1715, 0
        %vm1781 = vcmp.ne.s16.totalorder %v1723, 0
        %vm1782 = vcmp.ne.s16.totalorder %v1731, 0
        %vm1783 = vcmp.ne.s16.totalorder %v1739, 0
        %vm1784 = vcmp.ne.s16.totalorder %v1747, 0
        %vm1785 = vcmp.ne.s16.totalorder %v1755, 0
        %vm1786 = vcmp.ne.s16.totalorder %v1763, 0
        %vm1787 = vcmp.ne.s16.totalorder %v1771, 0
        %vm1788 = vcmp.ne.s16.totalorder %v1767, 0
        %v1789 = vsel %vm1772, %v726, 0
        %v1790 = vsel %vm1773, %v727, 0
        %v1791 = vsel %vm1774, %v728, 0
        %v1792 = vsel %vm1775, %v729, 0
        %v1793 = vsel %vm1776, %v730, 0
        %v1794 = vsel %vm1777, %v731, 0
        %v1795 = vsel %vm1778, %v732, 0
        %v1796 = vsel %vm1779, %v733, 0
        %v1797 = vsel %vm1780, %v734, 0
        %v1798 = vsel %vm1781, %v735, 0
        %v1799 = vsel %vm1782, %v736, 0
        %v1800 = vsel %vm1783, %v737, 0
        %v1801 = vsel %vm1784, %v738, 0
        %v1802 = vsel %vm1785, %v739, 0
        %v1803 = vsel %vm1786, %v740, 0
        %v1804 = vsel %vm1787, %v741, 0
        %v1805 = vsel %vm1788, %v742, 0
        %v1806 = vsel %vm1466, %v726, 0
        %v1807 = vsel %vm1467, %v727, 0
        %v1808 = vsel %vm1468, %v728, 0
        %v1809 = vsel %vm1469, %v729, 0
        %v1810 = vsel %vm1470, %v730, 0
        %v1811 = vsel %vm1471, %v731, 0
        %v1812 = vsel %vm1472, %v732, 0
        %v1813 = vsel %vm1473, %v733, 0
        %v1814 = vsel %vm1474, %v734, 0
        %v1815 = vsel %vm1475, %v735, 0
        %v1816 = vsel %vm1476, %v736, 0
        %v1817 = vsel %vm1477, %v737, 0
        %v1818 = vsel %vm1478, %v738, 0
        %v1819 = vsel %vm1479, %v739, 0
        %v1820 = vsel %vm1480, %v740, 0
        %v1821 = vsel %vm1481, %v741, 0
        %v1822 = vsel %vm1482, %v742, 0
        %v1823 = vsel %vm1772, %v727, 0
        %v1824 = vsel %vm1773, %v728, 0
        %v1825 = vsel %vm1774, %v729, 0
        %v1826 = vsel %vm1775, %v730, 0
        %v1827 = vsel %vm1776, %v731, 0
        %v1828 = vsel %vm1777, %v732, 0
        %v1829 = vsel %vm1778, %v733, 0
        %v1830 = vsel %vm1779, %v734, 0
        %v1831 = vsel %vm1780, %v735, 0
        %v1832 = vsel %vm1781, %v736, 0
        %v1833 = vsel %vm1782, %v737, 0
        %v1834 = vsel %vm1783, %v738, 0
        %v1835 = vsel %vm1784, %v739, 0
        %v1836 = vsel %vm1785, %v740, 0
        %v1837 = vsel %vm1786, %v741, 0
        %v1838 = vsel %vm1787, %v742, 0
        %v1839 = vsel %vm1788, %v743, 0
        %v1840 = vsel %vm1466, %v727, 0
        %v1841 = vsel %vm1467, %v728, 0
        %v1842 = vsel %vm1468, %v729, 0
        %v1843 = vsel %vm1469, %v730, 0
        %v1844 = vsel %vm1470, %v731, 0
        %v1845 = vsel %vm1471, %v732, 0
        %v1846 = vsel %vm1472, %v733, 0
        %v1847 = vsel %vm1473, %v734, 0
        %v1848 = vsel %vm1474, %v735, 0
        %v1849 = vsel %vm1475, %v736, 0
        %v1850 = vsel %vm1476, %v737, 0
        %v1851 = vsel %vm1477, %v738, 0
        %v1852 = vsel %vm1478, %v739, 0
        %v1853 = vsel %vm1479, %v740, 0
        %v1854 = vsel %vm1480, %v741, 0
        %v1855 = vsel %vm1481, %v742, 0
        %v1856 = vsel %vm1482, %v743, 0
        %v1857 = vsel %vm1772, %v728, 0
        %v1858 = vsel %vm1773, %v729, 0
        %v1859 = vsel %vm1774, %v730, 0
        %v1860 = vsel %vm1775, %v731, 0
        %v1861 = vsel %vm1776, %v732, 0
        %v1862 = vsel %vm1777, %v733, 0
        %v1863 = vsel %vm1778, %v734, 0
        %v1864 = vsel %vm1779, %v735, 0
        %v1865 = vsel %vm1780, %v736, 0
        %v1866 = vsel %vm1781, %v737, 0
        %v1867 = vsel %vm1782, %v738, 0
        %v1868 = vsel %vm1783, %v739, 0
        %v1869 = vsel %vm1784, %v740, 0
        %v1870 = vsel %vm1785, %v741, 0
        %v1871 = vsel %vm1786, %v742, 0
        %v1872 = vsel %vm1787, %v743, 0
        %v1873 = vsel %vm1788, %v744, 0
        %v1875 = vshll.u32 %v726, 16
        %v1877 = vrot.slane %v1875, 1
        %v1878 = vshrl.u32 %v726, 16
        %v1880 = vor.u32 %v1878, %v1877
        %v1882 = vshll.u32 %v727, 16
        %v1884 = vrot.slane %v1882, 1
        %v1885 = vsel %vm1338, %v1880, %v1884
        %v1886 = vshrl.u32 %v727, 16
        %v1888 = vor.u32 %v1886, %v1884
        %v1890 = vshll.u32 %v728, 16
        %v1892 = vrot.slane %v1890, 1
        %v1893 = vsel %vm1338, %v1888, %v1892
        %v1894 = vshrl.u32 %v728, 16
        %v1896 = vor.u32 %v1894, %v1892
        %v1898 = vshll.u32 %v729, 16
        %v1900 = vrot.slane %v1898, 1
        %v1901 = vsel %vm1338, %v1896, %v1900
        %v1902 = vshrl.u32 %v729, 16
        %v1904 = vor.u32 %v1902, %v1900
        %v1906 = vshll.u32 %v730, 16
        %v1908 = vrot.slane %v1906, 1
        %v1909 = vsel %vm1338, %v1904, %v1908
        %v1910 = vshrl.u32 %v730, 16
        %v1912 = vor.u32 %v1910, %v1908
        %v1914 = vshll.u32 %v731, 16
        %v1916 = vrot.slane %v1914, 1
        %v1917 = vsel %vm1338, %v1912, %v1916
        %v1918 = vshrl.u32 %v731, 16
        %v1920 = vor.u32 %v1918, %v1916
        %v1922 = vshll.u32 %v732, 16
        %v1924 = vrot.slane %v1922, 1
        %v1925 = vsel %vm1338, %v1920, %v1924
        %v1926 = vshrl.u32 %v732, 16
        %v1928 = vor.u32 %v1926, %v1924
        %v1930 = vshll.u32 %v733, 16
        %v1932 = vrot.slane %v1930, 1
        %v1933 = vsel %vm1338, %v1928, %v1932
        %v1934 = vshrl.u32 %v733, 16
        %v1936 = vor.u32 %v1934, %v1932
        %v1938 = vshll.u32 %v734, 16
        %v1940 = vrot.slane %v1938, 1
        %v1941 = vsel %vm1338, %v1936, %v1940
        %v1942 = vshrl.u32 %v734, 16
        %v1944 = vor.u32 %v1942, %v1940
        %v1946 = vshll.u32 %v735, 16
        %v1948 = vrot.slane %v1946, 1
        %v1949 = vsel %vm1338, %v1944, %v1948
        %v1950 = vshrl.u32 %v735, 16
        %v1952 = vor.u32 %v1950, %v1948
        %v1954 = vshll.u32 %v736, 16
        %v1956 = vrot.slane %v1954, 1
        %v1957 = vsel %vm1338, %v1952, %v1956
        %v1958 = vshrl.u32 %v736, 16
        %v1960 = vor.u32 %v1958, %v1956
        %v1962 = vshll.u32 %v737, 16
        %v1964 = vrot.slane %v1962, 1
        %v1965 = vsel %vm1338, %v1960, %v1964
        %v1966 = vshrl.u32 %v737, 16
        %v1968 = vor.u32 %v1966, %v1964
        %v1970 = vshll.u32 %v738, 16
        %v1972 = vrot.slane %v1970, 1
        %v1973 = vsel %vm1338, %v1968, %v1972
        %v1974 = vshrl.u32 %v738, 16
        %v1976 = vor.u32 %v1974, %v1972
        %v1978 = vshll.u32 %v739, 16
        %v1980 = vrot.slane %v1978, 1
        %v1981 = vsel %vm1338, %v1976, %v1980
        %v1982 = vshrl.u32 %v739, 16
        %v1984 = vor.u32 %v1982, %v1980
        %v1986 = vshll.u32 %v740, 16
        %v1988 = vrot.slane %v1986, 1
        %v1989 = vsel %vm1338, %v1984, %v1988
        %v1990 = vshrl.u32 %v740, 16
        %v1992 = vor.u32 %v1990, %v1988
        %v1994 = vshll.u32 %v741, 16
        %v1996 = vrot.slane %v1994, 1
        %v1997 = vsel %vm1338, %v1992, %v1996
        %v1998 = vshrl.u32 %v741, 16
        %v2000 = vor.u32 %v1998, %v1996
        %2001 = vrot.lane.b32.xlu0 %v1877, 32
        %v2002 = vpop.permute.xlu0 %2001
        %2003 = vrot.lane.b32.xlu0 %v1885, 32
        %v2004 = vpop.permute.xlu0 %2003
        %2005 = vrot.lane.b32.xlu0 %v1893, 32
        %v2006 = vpop.permute.xlu0 %2005
        %2007 = vrot.lane.b32.xlu0 %v1901, 32
        %v2008 = vpop.permute.xlu0 %2007
        %2009 = vrot.lane.b32.xlu0 %v1909, 32
        %v2010 = vpop.permute.xlu0 %2009
        %2011 = vrot.lane.b32.xlu0 %v1917, 32
        %v2012 = vpop.permute.xlu0 %2011
        %2013 = vrot.lane.b32.xlu0 %v1925, 32
        %v2014 = vpop.permute.xlu0 %2013
        %2015 = vrot.lane.b32.xlu0 %v1933, 32
        %v2016 = vpop.permute.xlu0 %2015
        %2017 = vrot.lane.b32.xlu0 %v1941, 32
        %v2018 = vpop.permute.xlu0 %2017
        %2019 = vrot.lane.b32.xlu0 %v1949, 32
        %v2020 = vpop.permute.xlu0 %2019
        %2021 = vrot.lane.b32.xlu0 %v1957, 32
        %v2022 = vpop.permute.xlu0 %2021
        %2023 = vrot.lane.b32.xlu0 %v1965, 32
        %v2024 = vpop.permute.xlu0 %2023
        %2025 = vrot.lane.b32.xlu0 %v1973, 32
        %v2026 = vpop.permute.xlu0 %2025
        %2027 = vrot.lane.b32.xlu0 %v1981, 32
        %v2028 = vpop.permute.xlu0 %2027
        %2029 = vrot.lane.b32.xlu0 %v1989, 32
        %v2030 = vpop.permute.xlu0 %2029
        %2031 = vrot.lane.b32.xlu0 %v1997, 32
        %v2032 = vpop.permute.xlu0 %2031
        %2033 = vrot.lane.b32.xlu0 %v2000, 32
        %v2034 = vpop.permute.xlu0 %2033
        %vm2052 = vcmask 1046528
        %v2053 = vrot.slane %v1789, 1
        %v2054 = vrot.slane %v1790, 1
        %v2055 = vsel %vm2052, %v2053, %v2054
        %v2056 = vrot.slane %v1791, 1
        %v2057 = vsel %vm2052, %v2054, %v2056
        %v2058 = vrot.slane %v1792, 1
        %v2059 = vsel %vm2052, %v2056, %v2058
        %v2060 = vrot.slane %v1793, 1
        %v2061 = vsel %vm2052, %v2058, %v2060
        %v2062 = vrot.slane %v1794, 1
        %v2063 = vsel %vm2052, %v2060, %v2062
        %v2064 = vrot.slane %v1795, 1
        %v2065 = vsel %vm2052, %v2062, %v2064
        %v2066 = vrot.slane %v1796, 1
        %v2067 = vsel %vm2052, %v2064, %v2066
        %v2068 = vrot.slane %v1797, 1
        %v2069 = vsel %vm2052, %v2066, %v2068
        %v2070 = vrot.slane %v1798, 1
        %v2071 = vsel %vm2052, %v2068, %v2070
        %v2072 = vrot.slane %v1799, 1
        %v2073 = vsel %vm2052, %v2070, %v2072
        %v2074 = vrot.slane %v1800, 1
        %v2075 = vsel %vm2052, %v2072, %v2074
        %v2076 = vrot.slane %v1801, 1
        %v2077 = vsel %vm2052, %v2074, %v2076
        %v2078 = vrot.slane %v1802, 1
        %v2079 = vsel %vm2052, %v2076, %v2078
        %v2080 = vrot.slane %v1803, 1
        %v2081 = vsel %vm2052, %v2078, %v2080
        %v2082 = vrot.slane %v1804, 1
        %v2083 = vsel %vm2052, %v2080, %v2082
        %v2084 = vrot.slane %v1805, 1
        %v2085 = vsel %vm2052, %v2082, %v2084
        %2086 = vrot.lane.b32.xlu0 %v2053, 64
        %v2087 = vpop.permute.xlu0 %2086
        %2088 = vrot.lane.b32.xlu0 %v2055, 64
        %v2089 = vpop.permute.xlu0 %2088
        %2090 = vrot.lane.b32.xlu0 %v2057, 64
        %v2091 = vpop.permute.xlu0 %2090
        %2092 = vrot.lane.b32.xlu0 %v2059, 64
        %v2093 = vpop.permute.xlu0 %2092
        %2094 = vrot.lane.b32.xlu0 %v2061, 64
        %v2095 = vpop.permute.xlu0 %2094
        %2096 = vrot.lane.b32.xlu0 %v2063, 64
        %v2097 = vpop.permute.xlu0 %2096
        %2098 = vrot.lane.b32.xlu0 %v2065, 64
        %v2099 = vpop.permute.xlu0 %2098
        %2100 = vrot.lane.b32.xlu0 %v2067, 64
        %v2101 = vpop.permute.xlu0 %2100
        %2102 = vrot.lane.b32.xlu0 %v2069, 64
        %v2103 = vpop.permute.xlu0 %2102
        %2104 = vrot.lane.b32.xlu0 %v2071, 64
        %v2105 = vpop.permute.xlu0 %2104
        %2106 = vrot.lane.b32.xlu0 %v2073, 64
        %v2107 = vpop.permute.xlu0 %2106
        %2108 = vrot.lane.b32.xlu0 %v2075, 64
        %v2109 = vpop.permute.xlu0 %2108
        %2110 = vrot.lane.b32.xlu0 %v2077, 64
        %v2111 = vpop.permute.xlu0 %2110
        %2112 = vrot.lane.b32.xlu0 %v2079, 64
        %v2113 = vpop.permute.xlu0 %2112
        %2114 = vrot.lane.b32.xlu0 %v2081, 64
        %v2115 = vpop.permute.xlu0 %2114
        %2116 = vrot.lane.b32.xlu0 %v2083, 64
        %v2117 = vpop.permute.xlu0 %2116
        %2118 = vrot.lane.b32.xlu0 %v2085, 64
        %v2119 = vpop.permute.xlu0 %2118
        %2137 = vrot.lane.b32.xlu0 %v1806, 96
        %v2138 = vpop.permute.xlu0 %2137
        %2139 = vrot.lane.b32.xlu0 %v1807, 96
        %v2140 = vpop.permute.xlu0 %2139
        %2141 = vrot.lane.b32.xlu0 %v1808, 96
        %v2142 = vpop.permute.xlu0 %2141
        %2143 = vrot.lane.b32.xlu0 %v1809, 96
        %v2144 = vpop.permute.xlu0 %2143
        %2145 = vrot.lane.b32.xlu0 %v1810, 96
        %v2146 = vpop.permute.xlu0 %2145
        %2147 = vrot.lane.b32.xlu0 %v1811, 96
        %v2148 = vpop.permute.xlu0 %2147
        %2149 = vrot.lane.b32.xlu0 %v1812, 96
        %v2150 = vpop.permute.xlu0 %2149
        %2151 = vrot.lane.b32.xlu0 %v1813, 96
        %v2152 = vpop.permute.xlu0 %2151
        %2153 = vrot.lane.b32.xlu0 %v1814, 96
        %v2154 = vpop.permute.xlu0 %2153
        %2155 = vrot.lane.b32.xlu0 %v1815, 96
        %v2156 = vpop.permute.xlu0 %2155
        %2157 = vrot.lane.b32.xlu0 %v1816, 96
        %v2158 = vpop.permute.xlu0 %2157
        %2159 = vrot.lane.b32.xlu0 %v1817, 96
        %v2160 = vpop.permute.xlu0 %2159
        %2161 = vrot.lane.b32.xlu0 %v1818, 96
        %v2162 = vpop.permute.xlu0 %2161
        %2163 = vrot.lane.b32.xlu0 %v1819, 96
        %v2164 = vpop.permute.xlu0 %2163
        %2165 = vrot.lane.b32.xlu0 %v1820, 96
        %v2166 = vpop.permute.xlu0 %2165
        %2167 = vrot.lane.b32.xlu0 %v1821, 96
        %v2168 = vpop.permute.xlu0 %2167
        %2169 = vrot.lane.b32.xlu0 %v1822, 96
        %v2170 = vpop.permute.xlu0 %2169
        %v2172 = vshll.u32 %v742, 16
        %v2174 = vrot.slane %v2172, 1
        %v2175 = vsel %vm1338, %v2000, %v2174
        %v2176 = vshrl.u32 %v742, 16
        %v2178 = vor.u32 %v2176, %v2174
        %v2196 = vrot.slane %v1823, 1
        %v2197 = vrot.slane %v1824, 1
        %v2198 = vsel %vm2052, %v2196, %v2197
        %v2199 = vrot.slane %v1825, 1
        %v2200 = vsel %vm2052, %v2197, %v2199
        %v2201 = vrot.slane %v1826, 1
        %v2202 = vsel %vm2052, %v2199, %v2201
        %v2203 = vrot.slane %v1827, 1
        %v2204 = vsel %vm2052, %v2201, %v2203
        %v2205 = vrot.slane %v1828, 1
        %v2206 = vsel %vm2052, %v2203, %v2205
        %v2207 = vrot.slane %v1829, 1
        %v2208 = vsel %vm2052, %v2205, %v2207
        %v2209 = vrot.slane %v1830, 1
        %v2210 = vsel %vm2052, %v2207, %v2209
        %v2211 = vrot.slane %v1831, 1
        %v2212 = vsel %vm2052, %v2209, %v2211
        %v2213 = vrot.slane %v1832, 1
        %v2214 = vsel %vm2052, %v2211, %v2213
        %v2215 = vrot.slane %v1833, 1
        %v2216 = vsel %vm2052, %v2213, %v2215
        %v2217 = vrot.slane %v1834, 1
        %v2218 = vsel %vm2052, %v2215, %v2217
        %v2219 = vrot.slane %v1835, 1
        %v2220 = vsel %vm2052, %v2217, %v2219
        %v2221 = vrot.slane %v1836, 1
        %v2222 = vsel %vm2052, %v2219, %v2221
        %v2223 = vrot.slane %v1837, 1
        %v2224 = vsel %vm2052, %v2221, %v2223
        %v2225 = vrot.slane %v1838, 1
        %v2226 = vsel %vm2052, %v2223, %v2225
        %v2227 = vrot.slane %v1839, 1
        %v2228 = vsel %vm2052, %v2225, %v2227
        %2229 = vrot.lane.b32.xlu0 %v2196, 32
        %v2230 = vpop.permute.xlu0 %2229
        %2231 = vrot.lane.b32.xlu0 %v2198, 32
        %v2232 = vpop.permute.xlu0 %2231
        %2233 = vrot.lane.b32.xlu0 %v2200, 32
        %v2234 = vpop.permute.xlu0 %2233
        %2235 = vrot.lane.b32.xlu0 %v2202, 32
        %v2236 = vpop.permute.xlu0 %2235
        %2237 = vrot.lane.b32.xlu0 %v2204, 32
        %v2238 = vpop.permute.xlu0 %2237
        %2239 = vrot.lane.b32.xlu0 %v2206, 32
        %v2240 = vpop.permute.xlu0 %2239
        %2241 = vrot.lane.b32.xlu0 %v2208, 32
        %v2242 = vpop.permute.xlu0 %2241
        %2243 = vrot.lane.b32.xlu0 %v2210, 32
        %v2244 = vpop.permute.xlu0 %2243
        %2245 = vrot.lane.b32.xlu0 %v2212, 32
        %v2246 = vpop.permute.xlu0 %2245
        %2247 = vrot.lane.b32.xlu0 %v2214, 32
        %v2248 = vpop.permute.xlu0 %2247
        %2249 = vrot.lane.b32.xlu0 %v2216, 32
        %v2250 = vpop.permute.xlu0 %2249
        %2251 = vrot.lane.b32.xlu0 %v2218, 32
        %v2252 = vpop.permute.xlu0 %2251
        %2253 = vrot.lane.b32.xlu0 %v2220, 32
        %v2254 = vpop.permute.xlu0 %2253
        %2255 = vrot.lane.b32.xlu0 %v2222, 32
        %v2256 = vpop.permute.xlu0 %2255
        %2257 = vrot.lane.b32.xlu0 %v2224, 32
        %v2258 = vpop.permute.xlu0 %2257
        %2259 = vrot.lane.b32.xlu0 %v2226, 32
        %v2260 = vpop.permute.xlu0 %2259
        %2261 = vrot.lane.b32.xlu0 %v2228, 32
        %v2262 = vpop.permute.xlu0 %2261
        %2280 = vrot.lane.b32.xlu0 %v1840, 64
        %v2281 = vpop.permute.xlu0 %2280
        %2282 = vrot.lane.b32.xlu0 %v1841, 64
        %v2283 = vpop.permute.xlu0 %2282
        %2284 = vrot.lane.b32.xlu0 %v1842, 64
        %v2285 = vpop.permute.xlu0 %2284
        %2286 = vrot.lane.b32.xlu0 %v1843, 64
        %v2287 = vpop.permute.xlu0 %2286
        %2288 = vrot.lane.b32.xlu0 %v1844, 64
        %v2289 = vpop.permute.xlu0 %2288
        %2290 = vrot.lane.b32.xlu0 %v1845, 64
        %v2291 = vpop.permute.xlu0 %2290
        %2292 = vrot.lane.b32.xlu0 %v1846, 64
        %v2293 = vpop.permute.xlu0 %2292
        %2294 = vrot.lane.b32.xlu0 %v1847, 64
        %v2295 = vpop.permute.xlu0 %2294
        %2296 = vrot.lane.b32.xlu0 %v1848, 64
        %v2297 = vpop.permute.xlu0 %2296
        %2298 = vrot.lane.b32.xlu0 %v1849, 64
        %v2299 = vpop.permute.xlu0 %2298
        %2300 = vrot.lane.b32.xlu0 %v1850, 64
        %v2301 = vpop.permute.xlu0 %2300
        %2302 = vrot.lane.b32.xlu0 %v1851, 64
        %v2303 = vpop.permute.xlu0 %2302
        %2304 = vrot.lane.b32.xlu0 %v1852, 64
        %v2305 = vpop.permute.xlu0 %2304
        %2306 = vrot.lane.b32.xlu0 %v1853, 64
        %v2307 = vpop.permute.xlu0 %2306
        %2308 = vrot.lane.b32.xlu0 %v1854, 64
        %v2309 = vpop.permute.xlu0 %2308
        %2310 = vrot.lane.b32.xlu0 %v1855, 64
        %v2311 = vpop.permute.xlu0 %2310
        %2312 = vrot.lane.b32.xlu0 %v1856, 64
        %v2313 = vpop.permute.xlu0 %2312
        %v2315 = vshll.u32 %v743, 16
        %v2317 = vrot.slane %v2315, 1
        %v2318 = vsel %vm1338, %v2178, %v2317
        %v2319 = vshrl.u32 %v743, 16
        %v2321 = vor.u32 %v2319, %v2317
        %2322 = vrot.lane.b32.xlu0 %v1892, 96
        %v2323 = vpop.permute.xlu0 %2322
        %2324 = vrot.lane.b32.xlu0 %v1901, 96
        %v2325 = vpop.permute.xlu0 %2324
        %2326 = vrot.lane.b32.xlu0 %v1909, 96
        %v2327 = vpop.permute.xlu0 %2326
        %2328 = vrot.lane.b32.xlu0 %v1917, 96
        %v2329 = vpop.permute.xlu0 %2328
        %2330 = vrot.lane.b32.xlu0 %v1925, 96
        %v2331 = vpop.permute.xlu0 %2330
        %2332 = vrot.lane.b32.xlu0 %v1933, 96
        %v2333 = vpop.permute.xlu0 %2332
        %2334 = vrot.lane.b32.xlu0 %v1941, 96
        %v2335 = vpop.permute.xlu0 %2334
        %2336 = vrot.lane.b32.xlu0 %v1949, 96
        %v2337 = vpop.permute.xlu0 %2336
        %2338 = vrot.lane.b32.xlu0 %v1957, 96
        %v2339 = vpop.permute.xlu0 %2338
        %2340 = vrot.lane.b32.xlu0 %v1965, 96
        %v2341 = vpop.permute.xlu0 %2340
        %2342 = vrot.lane.b32.xlu0 %v1973, 96
        %v2343 = vpop.permute.xlu0 %2342
        %2344 = vrot.lane.b32.xlu0 %v1981, 96
        %v2345 = vpop.permute.xlu0 %2344
        %2346 = vrot.lane.b32.xlu0 %v1989, 96
        %v2347 = vpop.permute.xlu0 %2346
        %2348 = vrot.lane.b32.xlu0 %v1997, 96
        %v2349 = vpop.permute.xlu0 %2348
        %2350 = vrot.lane.b32.xlu0 %v2175, 96
        %v2351 = vpop.permute.xlu0 %2350
        %2352 = vrot.lane.b32.xlu0 %v2318, 96
        %v2353 = vpop.permute.xlu0 %2352
        %2354 = vrot.lane.b32.xlu0 %v2321, 96
        %v2355 = vpop.permute.xlu0 %2354
        %v2373 = vrot.slane %v1857, 1
        %v2374 = vrot.slane %v1858, 1
        %v2375 = vsel %vm2052, %v2373, %v2374
        %v2376 = vrot.slane %v1859, 1
        %v2377 = vsel %vm2052, %v2374, %v2376
        %v2378 = vrot.slane %v1860, 1
        %v2379 = vsel %vm2052, %v2376, %v2378
        %v2380 = vrot.slane %v1861, 1
        %v2381 = vsel %vm2052, %v2378, %v2380
        %v2382 = vrot.slane %v1862, 1
        %v2383 = vsel %vm2052, %v2380, %v2382
        %v2384 = vrot.slane %v1863, 1
        %v2385 = vsel %vm2052, %v2382, %v2384
        %v2386 = vrot.slane %v1864, 1
        %v2387 = vsel %vm2052, %v2384, %v2386
        %v2388 = vrot.slane %v1865, 1
        %v2389 = vsel %vm2052, %v2386, %v2388
        %v2390 = vrot.slane %v1866, 1
        %v2391 = vsel %vm2052, %v2388, %v2390
        %v2392 = vrot.slane %v1867, 1
        %v2393 = vsel %vm2052, %v2390, %v2392
        %v2394 = vrot.slane %v1868, 1
        %v2395 = vsel %vm2052, %v2392, %v2394
        %v2396 = vrot.slane %v1869, 1
        %v2397 = vsel %vm2052, %v2394, %v2396
        %v2398 = vrot.slane %v1870, 1
        %v2399 = vsel %vm2052, %v2396, %v2398
        %v2400 = vrot.slane %v1871, 1
        %v2401 = vsel %vm2052, %v2398, %v2400
        %v2402 = vrot.slane %v1872, 1
        %v2403 = vsel %vm2052, %v2400, %v2402
        %v2404 = vrot.slane %v1873, 1
        %v2405 = vsel %vm2052, %v2402, %v2404
        %v2408 = vsel %vm295, %v1483, %v2002
        %v2411 = vsel %vm295, %v1484, %v2004
        %v2414 = vsel %vm295, %v1485, %v2006
        %v2417 = vsel %vm295, %v1486, %v2008
        %v2420 = vsel %vm295, %v1487, %v2010
        %v2423 = vsel %vm295, %v1488, %v2012
        %v2426 = vsel %vm295, %v1489, %v2014
        %v2429 = vsel %vm295, %v1490, %v2016
        %v2432 = vsel %vm295, %v1491, %v2018
        %v2435 = vsel %vm295, %v1492, %v2020
        %v2438 = vsel %vm295, %v1493, %v2022
        %v2441 = vsel %vm295, %v1494, %v2024
        %v2444 = vsel %vm295, %v1495, %v2026
        %v2447 = vsel %vm295, %v1496, %v2028
        %v2450 = vsel %vm295, %v1497, %v2030
        %v2453 = vsel %vm295, %v1498, %v2032
        %v2456 = vsel %vm295, %v1499, %v2034
        %v2458 = vsel %vm451, %v2408, %v2087
        %v2460 = vsel %vm451, %v2411, %v2089
        %v2462 = vsel %vm451, %v2414, %v2091
        %v2464 = vsel %vm451, %v2417, %v2093
        %v2466 = vsel %vm451, %v2420, %v2095
        %v2468 = vsel %vm451, %v2423, %v2097
        %v2470 = vsel %vm451, %v2426, %v2099
        %v2472 = vsel %vm451, %v2429, %v2101
        %v2474 = vsel %vm451, %v2432, %v2103
        %v2476 = vsel %vm451, %v2435, %v2105
        %v2478 = vsel %vm451, %v2438, %v2107
        %v2480 = vsel %vm451, %v2441, %v2109
        %v2482 = vsel %vm451, %v2444, %v2111
        %v2484 = vsel %vm451, %v2447, %v2113
        %v2486 = vsel %vm451, %v2450, %v2115
        %v2488 = vsel %vm451, %v2453, %v2117
        %v2490 = vsel %vm451, %v2456, %v2119
        %vm2491 = vcmask 785408
        %v2493 = vsel %vm2491, %v2458, %v2138
        %v2495 = vsel %vm2491, %v2460, %v2140
        %v2497 = vsel %vm2491, %v2462, %v2142
        %v2499 = vsel %vm2491, %v2464, %v2144
        %v2501 = vsel %vm2491, %v2466, %v2146
        %v2503 = vsel %vm2491, %v2468, %v2148
        %v2505 = vsel %vm2491, %v2470, %v2150
        %v2507 = vsel %vm2491, %v2472, %v2152
        %v2509 = vsel %vm2491, %v2474, %v2154
        %v2511 = vsel %vm2491, %v2476, %v2156
        %v2513 = vsel %vm2491, %v2478, %v2158
        %v2515 = vsel %vm2491, %v2480, %v2160
        %v2517 = vsel %vm2491, %v2482, %v2162
        %v2519 = vsel %vm2491, %v2484, %v2164
        %v2521 = vsel %vm2491, %v2486, %v2166
        %v2523 = vsel %vm2491, %v2488, %v2168
        %v2525 = vsel %vm2491, %v2490, %v2170
        %v2528 = vsel %vm295, %v1884, %v2230
        %v2531 = vsel %vm295, %v1893, %v2232
        %v2534 = vsel %vm295, %v1901, %v2234
        %v2537 = vsel %vm295, %v1909, %v2236
        %v2540 = vsel %vm295, %v1917, %v2238
        %v2543 = vsel %vm295, %v1925, %v2240
        %v2546 = vsel %vm295, %v1933, %v2242
        %v2549 = vsel %vm295, %v1941, %v2244
        %v2552 = vsel %vm295, %v1949, %v2246
        %v2555 = vsel %vm295, %v1957, %v2248
        %v2558 = vsel %vm295, %v1965, %v2250
        %v2561 = vsel %vm295, %v1973, %v2252
        %v2564 = vsel %vm295, %v1981, %v2254
        %v2567 = vsel %vm295, %v1989, %v2256
        %v2570 = vsel %vm295, %v1997, %v2258
        %v2573 = vsel %vm295, %v2175, %v2260
        %v2576 = vsel %vm295, %v2178, %v2262
        %v2578 = vsel %vm451, %v2528, %v2281
        %v2580 = vsel %vm451, %v2531, %v2283
        %v2582 = vsel %vm451, %v2534, %v2285
        %v2584 = vsel %vm451, %v2537, %v2287
        %v2586 = vsel %vm451, %v2540, %v2289
        %v2588 = vsel %vm451, %v2543, %v2291
        %v2590 = vsel %vm451, %v2546, %v2293
        %v2592 = vsel %vm451, %v2549, %v2295
        %v2594 = vsel %vm451, %v2552, %v2297
        %v2596 = vsel %vm451, %v2555, %v2299
        %v2598 = vsel %vm451, %v2558, %v2301
        %v2600 = vsel %vm451, %v2561, %v2303
        %v2602 = vsel %vm451, %v2564, %v2305
        %v2604 = vsel %vm451, %v2567, %v2307
        %v2606 = vsel %vm451, %v2570, %v2309
        %v2608 = vsel %vm451, %v2573, %v2311
        %v2610 = vsel %vm451, %v2576, %v2313
        %v2612 = vsel %vm2491, %v2578, %v2323
        %v2614 = vsel %vm2491, %v2580, %v2325
        %v2616 = vsel %vm2491, %v2582, %v2327
        %v2618 = vsel %vm2491, %v2584, %v2329
        %v2620 = vsel %vm2491, %v2586, %v2331
        %v2622 = vsel %vm2491, %v2588, %v2333
        %v2624 = vsel %vm2491, %v2590, %v2335
        %v2626 = vsel %vm2491, %v2592, %v2337
        %v2628 = vsel %vm2491, %v2594, %v2339
        %v2630 = vsel %vm2491, %v2596, %v2341
        %v2632 = vsel %vm2491, %v2598, %v2343
        %v2634 = vsel %vm2491, %v2600, %v2345
        %v2636 = vsel %vm2491, %v2602, %v2347
        %v2638 = vsel %vm2491, %v2604, %v2349
        %v2640 = vsel %vm2491, %v2606, %v2351
        %v2642 = vsel %vm2491, %v2608, %v2353
        %v2644 = vsel %vm2491, %v2610, %v2355
        %v2645 = vld [vmem:[%s3] sm:$0xf]
        %v2646 = vld [vmem:[%s3 + $0x4] sm:$0xf]
        %v2647 = vld [vmem:[%s3 + $0x8] sm:$0xf]
        %v2648 = vld [vmem:[%s3 + $0xc] sm:$0xf]
        %v2649 = vld [vmem:[%s3 + $0x10] sm:$0xf]
        %v2650 = vld [vmem:[%s3 + $0x14] sm:$0xf]
        %v2651 = vld [vmem:[%s3 + $0x18] sm:$0xf]
        %v2652 = vld [vmem:[%s3 + $0x1c] sm:$0xf]
        %v2653 = vld [vmem:[%s3 + $0x20] sm:$0xf]
        %v2654 = vld [vmem:[%s3 + $0x24] sm:$0xf]
        %v2655 = vld [vmem:[%s3 + $0x28] sm:$0xf]
        %v2656 = vld [vmem:[%s3 + $0x2c] sm:$0xf]
        %v2657 = vld [vmem:[%s3 + $0x30] sm:$0xf]
        %v2658 = vld [vmem:[%s3 + $0x34] sm:$0xf]
        %v2659 = vld [vmem:[%s3 + $0x38] sm:$0xf]
        %v2660 = vld [vmem:[%s3 + $0x3c] sm:$0xf]
        %v2661 = vld [vmem:[%s3 + $0x40] sm:$0xf]
        %v2662 = vld [vmem:[%s3 + $0x44] sm:$0xf]
        %v2663 = vld [vmem:[%s3 + $0x48] sm:$0xf]
        %v2664 = vld [vmem:[%s3 + $0x4c] sm:$0xf]
        %v2665 = vld [vmem:[%s3 + $0x50] sm:$0xf]
        %v2666 = vld [vmem:[%s3 + $0x54] sm:$0xf]
        %v2667 = vld [vmem:[%s3 + $0x58] sm:$0xf]
        %v2668 = vld [vmem:[%s3 + $0x5c] sm:$0xf]
        %v2669 = vld [vmem:[%s3 + $0x60] sm:$0xf]
        %v2670 = vld [vmem:[%s3 + $0x64] sm:$0xf]
        %v2671 = vld [vmem:[%s3 + $0x68] sm:$0xf]
        %v2672 = vld [vmem:[%s3 + $0x6c] sm:$0xf]
        %v2673 = vld [vmem:[%s3 + $0x70] sm:$0xf]
        %v2674 = vld [vmem:[%s3 + $0x74] sm:$0xf]
        %v2675 = vld [vmem:[%s3 + $0x78] sm:$0xf]
        %v2676 = vld [vmem:[%s3 + $0x7c] sm:$0xf]
        %v2677 = vld [vmem:[%s3 + $0x80] sm:$0xf]
        %v2678 = vld [vmem:[%s3 + $0x84] sm:$0xf]
        %v2679 = vld [vmem:[%s3 + $0x88] sm:$0xf]
        %v2680 = vld [vmem:[%s3 + $0x8c] sm:$0xf]
        %v2681 = vld [vmem:[%s4] sm:$0x1]
        %v2683 = vlaneseq
        %v2684 = vshrl.u32 %v2683, 7
        %v2685 = vsub.s32 0, %v2684
        %v2686 = vrot.slane %v2681, %v2685
        %v2688 = vshrl.u32 %v2493, 16
        %v2690 = vrot.slane %v2688, 7
        %v2691 = vshrl.u32 %v2495, 16
        %v2693 = vrot.slane %v2691, 7
        %v2694 = vshll.u32 %v2495, 16
        %v2696 = vor.u32 %v2693, %v2694
        %v2697 = vsel %vm1644, %v2690, %v2696
        %v2698 = vshrl.u32 %v2612, 16
        %v2700 = vrot.slane %v2698, 7
        %v2701 = vshrl.u32 %v2614, 16
        %v2703 = vrot.slane %v2701, 7
        %v2704 = vshll.u32 %v2614, 16
        %v2706 = vor.u32 %v2703, %v2704
        %v2707 = vsel %vm1644, %v2700, %v2706
        %v2709 = vshrl.u32 %v2373, 16
        %v2711 = vrot.slane %v2709, 7
        %v2713 = vshrl.u32 %v2375, 16
        %v2715 = vrot.slane %v2713, 7
        %v2716 = vshll.u32 %v2375, 16
        %v2718 = vor.u32 %v2715, %v2716
        %v2719 = vsel %vm1644, %v2711, %v2718
        %v2720 = vshrl.u32 %v2497, 16
        %v2722 = vrot.slane %v2720, 7
        %v2723 = vshll.u32 %v2497, 16
        %v2725 = vor.u32 %v2722, %v2723
        %v2726 = vsel %vm1644, %v2693, %v2725
        %v2727 = vshrl.u32 %v2616, 16
        %v2729 = vrot.slane %v2727, 7
        %v2730 = vshll.u32 %v2616, 16
        %v2732 = vor.u32 %v2729, %v2730
        %v2733 = vsel %vm1644, %v2703, %v2732
        %v2735 = vshrl.u32 %v2377, 16
        %v2737 = vrot.slane %v2735, 7
        %v2738 = vshll.u32 %v2377, 16
        %v2740 = vor.u32 %v2737, %v2738
        %v2741 = vsel %vm1644, %v2715, %v2740
        %v2742 = vshrl.u32 %v2499, 16
        %v2744 = vrot.slane %v2742, 7
        %v2745 = vshll.u32 %v2499, 16
        %v2747 = vor.u32 %v2744, %v2745
        %v2748 = vsel %vm1644, %v2722, %v2747
        %v2749 = vshrl.u32 %v2618, 16
        %v2751 = vrot.slane %v2749, 7
        %v2752 = vshll.u32 %v2618, 16
        %v2754 = vor.u32 %v2751, %v2752
        %v2755 = vsel %vm1644, %v2729, %v2754
        %v2757 = vshrl.u32 %v2379, 16
        %v2759 = vrot.slane %v2757, 7
        %v2760 = vshll.u32 %v2379, 16
        %v2762 = vor.u32 %v2759, %v2760
        %v2763 = vsel %vm1644, %v2737, %v2762
        %v2764 = vshrl.u32 %v2501, 16
        %v2766 = vrot.slane %v2764, 7
        %v2767 = vshll.u32 %v2501, 16
        %v2769 = vor.u32 %v2766, %v2767
        %v2770 = vsel %vm1644, %v2744, %v2769
        %v2771 = vshrl.u32 %v2620, 16
        %v2773 = vrot.slane %v2771, 7
        %v2774 = vshll.u32 %v2620, 16
        %v2776 = vor.u32 %v2773, %v2774
        %v2777 = vsel %vm1644, %v2751, %v2776
        %v2779 = vshrl.u32 %v2381, 16
        %v2781 = vrot.slane %v2779, 7
        %v2782 = vshll.u32 %v2381, 16
        %v2784 = vor.u32 %v2781, %v2782
        %v2785 = vsel %vm1644, %v2759, %v2784
        %v2786 = vshrl.u32 %v2503, 16
        %v2788 = vrot.slane %v2786, 7
        %v2789 = vshll.u32 %v2503, 16
        %v2791 = vor.u32 %v2788, %v2789
        %v2792 = vsel %vm1644, %v2766, %v2791
        %v2793 = vshrl.u32 %v2622, 16
        %v2795 = vrot.slane %v2793, 7
        %v2796 = vshll.u32 %v2622, 16
        %v2798 = vor.u32 %v2795, %v2796
        %v2799 = vsel %vm1644, %v2773, %v2798
        %v2801 = vshrl.u32 %v2383, 16
        %v2803 = vrot.slane %v2801, 7
        %v2804 = vshll.u32 %v2383, 16
        %v2806 = vor.u32 %v2803, %v2804
        %v2807 = vsel %vm1644, %v2781, %v2806
        %v2808 = vshrl.u32 %v2505, 16
        %v2810 = vrot.slane %v2808, 7
        %v2811 = vshll.u32 %v2505, 16
        %v2813 = vor.u32 %v2810, %v2811
        %v2814 = vsel %vm1644, %v2788, %v2813
        %v2815 = vshrl.u32 %v2624, 16
        %v2817 = vrot.slane %v2815, 7
        %v2818 = vshll.u32 %v2624, 16
        %v2820 = vor.u32 %v2817, %v2818
        %v2821 = vsel %vm1644, %v2795, %v2820
        %v2823 = vshrl.u32 %v2385, 16
        %v2825 = vrot.slane %v2823, 7
        %v2826 = vshll.u32 %v2385, 16
        %v2828 = vor.u32 %v2825, %v2826
        %v2829 = vsel %vm1644, %v2803, %v2828
        %v2830 = vshrl.u32 %v2507, 16
        %v2832 = vrot.slane %v2830, 7
        %v2833 = vshll.u32 %v2507, 16
        %v2835 = vor.u32 %v2832, %v2833
        %v2836 = vsel %vm1644, %v2810, %v2835
        %v2837 = vshrl.u32 %v2626, 16
        %v2839 = vrot.slane %v2837, 7
        %v2840 = vshll.u32 %v2626, 16
        %v2842 = vor.u32 %v2839, %v2840
        %v2843 = vsel %vm1644, %v2817, %v2842
        %v2845 = vshrl.u32 %v2387, 16
        %v2847 = vrot.slane %v2845, 7
        %v2848 = vshll.u32 %v2387, 16
        %v2850 = vor.u32 %v2847, %v2848
        %v2851 = vsel %vm1644, %v2825, %v2850
        %v2852 = vshrl.u32 %v2509, 16
        %v2854 = vrot.slane %v2852, 7
        %v2855 = vshll.u32 %v2509, 16
        %v2857 = vor.u32 %v2854, %v2855
        %v2858 = vsel %vm1644, %v2832, %v2857
        %v2859 = vshrl.u32 %v2628, 16
        %v2861 = vrot.slane %v2859, 7
        %v2862 = vshll.u32 %v2628, 16
        %v2864 = vor.u32 %v2861, %v2862
        %v2865 = vsel %vm1644, %v2839, %v2864
        %v2867 = vshrl.u32 %v2389, 16
        %v2869 = vrot.slane %v2867, 7
        %v2870 = vshll.u32 %v2389, 16
        %v2872 = vor.u32 %v2869, %v2870
        %v2873 = vsel %vm1644, %v2847, %v2872
        %v2874 = vshrl.u32 %v2511, 16
        %v2876 = vrot.slane %v2874, 7
        %v2877 = vshll.u32 %v2511, 16
        %v2879 = vor.u32 %v2876, %v2877
        %v2880 = vsel %vm1644, %v2854, %v2879
        %v2881 = vshrl.u32 %v2630, 16
        %v2883 = vrot.slane %v2881, 7
        %v2884 = vshll.u32 %v2630, 16
        %v2886 = vor.u32 %v2883, %v2884
        %v2887 = vsel %vm1644, %v2861, %v2886
        %v2889 = vshrl.u32 %v2391, 16
        %v2891 = vrot.slane %v2889, 7
        %v2892 = vshll.u32 %v2391, 16
        %v2894 = vor.u32 %v2891, %v2892
        %v2895 = vsel %vm1644, %v2869, %v2894
        %v2896 = vshrl.u32 %v2513, 16
        %v2898 = vrot.slane %v2896, 7
        %v2899 = vshll.u32 %v2513, 16
        %v2901 = vor.u32 %v2898, %v2899
        %v2902 = vsel %vm1644, %v2876, %v2901
        %v2903 = vshrl.u32 %v2632, 16
        %v2905 = vrot.slane %v2903, 7
        %v2906 = vshll.u32 %v2632, 16
        %v2908 = vor.u32 %v2905, %v2906
        %v2909 = vsel %vm1644, %v2883, %v2908
        %v2911 = vshrl.u32 %v2393, 16
        %v2913 = vrot.slane %v2911, 7
        %v2914 = vshll.u32 %v2393, 16
        %v2916 = vor.u32 %v2913, %v2914
        %v2917 = vsel %vm1644, %v2891, %v2916
        %v2918 = vshrl.u32 %v2515, 16
        %v2920 = vrot.slane %v2918, 7
        %v2921 = vshll.u32 %v2515, 16
        %v2923 = vor.u32 %v2920, %v2921
        %v2924 = vsel %vm1644, %v2898, %v2923
        %v2925 = vshrl.u32 %v2634, 16
        %v2927 = vrot.slane %v2925, 7
        %v2928 = vshll.u32 %v2634, 16
        %v2930 = vor.u32 %v2927, %v2928
        %v2931 = vsel %vm1644, %v2905, %v2930
        %v2933 = vshrl.u32 %v2395, 16
        %v2935 = vrot.slane %v2933, 7
        %v2936 = vshll.u32 %v2395, 16
        %v2938 = vor.u32 %v2935, %v2936
        %v2939 = vsel %vm1644, %v2913, %v2938
        %v2940 = vshrl.u32 %v2517, 16
        %v2942 = vrot.slane %v2940, 7
        %v2943 = vshll.u32 %v2517, 16
        %v2945 = vor.u32 %v2942, %v2943
        %v2946 = vsel %vm1644, %v2920, %v2945
        %v2947 = vshrl.u32 %v2636, 16
        %v2949 = vrot.slane %v2947, 7
        %v2950 = vshll.u32 %v2636, 16
        %v2952 = vor.u32 %v2949, %v2950
        %v2953 = vsel %vm1644, %v2927, %v2952
        %v2955 = vshrl.u32 %v2397, 16
        %v2957 = vrot.slane %v2955, 7
        %v2958 = vshll.u32 %v2397, 16
        %v2960 = vor.u32 %v2957, %v2958
        %v2961 = vsel %vm1644, %v2935, %v2960
        %v2962 = vshrl.u32 %v2519, 16
        %v2964 = vrot.slane %v2962, 7
        %v2965 = vshll.u32 %v2519, 16
        %v2967 = vor.u32 %v2964, %v2965
        %v2968 = vsel %vm1644, %v2942, %v2967
        %v2969 = vshrl.u32 %v2638, 16
        %v2971 = vrot.slane %v2969, 7
        %v2972 = vshll.u32 %v2638, 16
        %v2974 = vor.u32 %v2971, %v2972
        %v2975 = vsel %vm1644, %v2949, %v2974
        %v2977 = vshrl.u32 %v2399, 16
        %v2979 = vrot.slane %v2977, 7
        %v2980 = vshll.u32 %v2399, 16
        %v2982 = vor.u32 %v2979, %v2980
        %v2983 = vsel %vm1644, %v2957, %v2982
        %v2984 = vshrl.u32 %v2521, 16
        %v2986 = vrot.slane %v2984, 7
        %v2987 = vshll.u32 %v2521, 16
        %v2989 = vor.u32 %v2986, %v2987
        %v2990 = vsel %vm1644, %v2964, %v2989
        %v2991 = vshrl.u32 %v2640, 16
        %v2993 = vrot.slane %v2991, 7
        %v2994 = vshll.u32 %v2640, 16
        %v2996 = vor.u32 %v2993, %v2994
        %v2997 = vsel %vm1644, %v2971, %v2996
        %v2999 = vshrl.u32 %v2401, 16
        %v3001 = vrot.slane %v2999, 7
        %v3002 = vshll.u32 %v2401, 16
        %v3004 = vor.u32 %v3001, %v3002
        %v3005 = vsel %vm1644, %v2979, %v3004
        %v3006 = vshrl.u32 %v2523, 16
        %v3008 = vrot.slane %v3006, 7
        %v3009 = vshll.u32 %v2523, 16
        %v3011 = vor.u32 %v3008, %v3009
        %v3012 = vsel %vm1644, %v2986, %v3011
        %v3013 = vshrl.u32 %v2642, 16
        %v3015 = vrot.slane %v3013, 7
        %v3016 = vshll.u32 %v2642, 16
        %v3018 = vor.u32 %v3015, %v3016
        %v3019 = vsel %vm1644, %v2993, %v3018
        %v3021 = vshrl.u32 %v2403, 16
        %v3023 = vrot.slane %v3021, 7
        %v3024 = vshll.u32 %v2403, 16
        %v3026 = vor.u32 %v3023, %v3024
        %v3027 = vsel %vm1644, %v3001, %v3026
        %v3028 = vshrl.u32 %v2525, 16
        %v3030 = vrot.slane %v3028, 7
        %v3031 = vshll.u32 %v2525, 16
        %v3033 = vor.u32 %v3030, %v3031
        %v3034 = vsel %vm1644, %v3008, %v3033
        %v3035 = vshrl.u32 %v2644, 16
        %v3037 = vrot.slane %v3035, 7
        %v3038 = vshll.u32 %v2644, 16
        %v3040 = vor.u32 %v3037, %v3038
        %v3041 = vsel %vm1644, %v3015, %v3040
        %v3043 = vshrl.u32 %v2405, 16
        %v3045 = vrot.slane %v3043, 7
        %v3046 = vshll.u32 %v2405, 16
        %v3048 = vor.u32 %v3045, %v3046
        %v3049 = vsel %vm1644, %v3023, %v3048
        %v3118 = vunpack.c.l.b16 %v2645
        %v3119 = vunpack.c.l.b16 %v2646
        %v3120 = vunpack.c.l.b16 %v2647
        %v3121 = vunpack.c.l.b16 %v2648
        %v3122 = vunpack.c.l.b16 %v2649
        %v3123 = vunpack.c.l.b16 %v2650
        %v3124 = vunpack.c.l.b16 %v2651
        %v3125 = vunpack.c.l.b16 %v2652
        %v3126 = vunpack.c.l.b16 %v2653
        %v3127 = vunpack.c.l.b16 %v2654
        %v3128 = vunpack.c.l.b16 %v2655
        %v3129 = vunpack.c.l.b16 %v2656
        %v3130 = vunpack.c.l.b16 %v2657
        %v3131 = vunpack.c.l.b16 %v2658
        %v3132 = vunpack.c.l.b16 %v2659
        %v3133 = vunpack.c.l.b16 %v2660
        %v3134 = vunpack.c.l.b16 %v2661
        %v3135 = vunpack.c.l.b16 %v2662
        %v3136 = vunpack.c.l.b16 %v2663
        %v3137 = vunpack.c.l.b16 %v2664
        %v3138 = vunpack.c.l.b16 %v2665
        %v3139 = vunpack.c.l.b16 %v2666
        %v3140 = vunpack.c.l.b16 %v2667
        %v3141 = vunpack.c.l.b16 %v2668
        %v3142 = vunpack.c.l.b16 %v2669
        %v3143 = vunpack.c.l.b16 %v2670
        %v3144 = vunpack.c.l.b16 %v2671
        %v3145 = vunpack.c.l.b16 %v2672
        %v3146 = vunpack.c.l.b16 %v2673
        %v3147 = vunpack.c.l.b16 %v2674
        %v3148 = vunpack.c.l.b16 %v2675
        %v3149 = vunpack.c.l.b16 %v2676
        %v3150 = vunpack.c.l.b16 %v2677
        %v3151 = vunpack.c.l.b16 %v2678
        %v3152 = vunpack.c.l.b16 %v2679
        %v3153 = vunpack.c.l.b16 %v2680
        %v3154 = vpack.c.b16 %v3119, %v3118
        %v3155 = vpack.c.b16 %v3121, %v3120
        %v3156 = vpack.c.b16 %v3123, %v3122
        %v3157 = vpack.c.b16 %v3125, %v3124
        %v3158 = vpack.c.b16 %v3127, %v3126
        %v3159 = vpack.c.b16 %v3129, %v3128
        %v3160 = vpack.c.b16 %v3131, %v3130
        %v3161 = vpack.c.b16 %v3133, %v3132
        %v3162 = vpack.c.b16 %v3135, %v3134
        %v3163 = vpack.c.b16 %v3137, %v3136
        %v3164 = vpack.c.b16 %v3139, %v3138
        %v3165 = vpack.c.b16 %v3141, %v3140
        %v3166 = vpack.c.b16 %v3143, %v3142
        %v3167 = vpack.c.b16 %v3145, %v3144
        %v3168 = vpack.c.b16 %v3147, %v3146
        %v3169 = vpack.c.b16 %v3149, %v3148
        %v3170 = vpack.c.b16 %v3151, %v3150
        %v3171 = vpack.c.b16 %v3153, %v3152
        %v3191 = vsel %vm295, %v2719, 0
        %v3194 = vsel %vm295, %v2741, 0
        %v3197 = vsel %vm295, %v2763, 0
        %v3200 = vsel %vm295, %v2785, 0
        %v3203 = vsel %vm295, %v2807, 0
        %v3206 = vsel %vm295, %v2829, 0
        %v3209 = vsel %vm295, %v2851, 0
        %v3212 = vsel %vm295, %v2873, 0
        %v3215 = vsel %vm295, %v2895, 0
        %v3218 = vsel %vm295, %v2917, 0
        %v3221 = vsel %vm295, %v2939, 0
        %v3224 = vsel %vm295, %v2961, 0
        %v3227 = vsel %vm295, %v2983, 0
        %v3230 = vsel %vm295, %v3005, 0
        %v3233 = vsel %vm295, %v3027, 0
        %v3236 = vsel %vm295, %v3049, 0
        %3238 = vmatprep.subr.bf16.mxu0 0
        %3239 = vmatpush1.bf16.msra.mxu0 %v3154
        %3240 = vmatprep.subr.bf16.mxu0 0
        %3241 = vmatpush1.bf16.msra.mxu0 %v3155
        %3242 = vmatprep.subr.bf16.mxu0 0
        %3243 = vmatpush1.bf16.msra.mxu0 %v3156
        %3244 = vmatprep.subr.bf16.mxu0 0
        %3245 = vmatpush1.bf16.msra.mxu0 %v3157
        %3246 = vmatprep.subr.bf16.mxu0 0
        %3247 = vmatpush1.bf16.msra.mxu0 %v3158
        %3248 = vmatprep.subr.bf16.mxu0 0
        %3249 = vmatpush1.bf16.msra.mxu0 %v3159
        %3250 = vmatprep.subr.bf16.mxu0 0
        %3251 = vmatpush1.bf16.msra.mxu0 %v3160
        %3252 = vmatprep.subr.bf16.mxu0 0
        %3253 = vmatpush1.bf16.msra.mxu0 %v3161
        %3254 = vmatprep.subr.bf16.mxu0 0
        %3255 = vmatpush1.bf16.msra.mxu0 %v3162
        %3256 = vmatprep.subr.bf16.mxu0 0
        %3257 = vmatpush1.bf16.msra.mxu0 %v3163
        %3258 = vmatprep.subr.bf16.mxu0 0
        %3259 = vmatpush1.bf16.msra.mxu0 %v3164
        %3260 = vmatprep.subr.bf16.mxu0 0
        %3261 = vmatpush1.bf16.msra.mxu0 %v3165
        %3262 = vmatprep.subr.bf16.mxu0 0
        %3263 = vmatpush1.bf16.msra.mxu0 %v3166
        %3264 = vmatprep.subr.bf16.mxu0 0
        %3265 = vmatpush1.bf16.msra.mxu0 %v3167
        %3266 = vmatprep.subr.bf16.mxu0 0
        %3267 = vmatpush1.bf16.msra.mxu0 %v3168
        %3268 = vmatprep.subr.bf16.mxu0 0
        %3269 = vmatpush1.bf16.msra.mxu0 %v3169
        %3270 = vmatprep.mubr.bf16.mxu0 %v2707
        %3271 = vmatmul.mubr.bf16.gmra.mrb[0].mxu0 %v2697
        %v3272 = vpop.f32.mrb[0].mxu0
        %v3273 = vadd.f32 %v2686, %v3272
        %v3274 = vpop.f32.mrb[0].mxu0
        %v3275 = vpop.f32.mrb[0].mxu0
        %v3276 = vadd.f32 %v2686, %v3275
        %v3277 = vpop.f32.mrb[0].mxu0
        %3278 = vmatprep.mubr.bf16.mxu0 %v2733
        %3279 = vmatmul.mubr.bf16.gmra.mrb[0].mxu0 %v2726
        %v3280 = vpop.f32.mrb[0].mxu0
        %v3281 = vadd.f32 %v2686, %v3280
        %v3282 = vpop.f32.mrb[0].mxu0
        %v3283 = vpop.f32.mrb[0].mxu0
        %v3284 = vadd.f32 %v2686, %v3283
        %v3285 = vpop.f32.mrb[0].mxu0
        %3286 = vmatprep.mubr.bf16.mxu0 %v2755
        %3287 = vmatmul.mubr.bf16.gmra.mrb[0].mxu0 %v2748
        %v3288 = vpop.f32.mrb[0].mxu0
        %v3289 = vadd.f32 %v2686, %v3288
        %v3290 = vpop.f32.mrb[0].mxu0
        %v3291 = vpop.f32.mrb[0].mxu0
        %v3292 = vadd.f32 %v2686, %v3291
        %v3293 = vpop.f32.mrb[0].mxu0
        %3294 = vmatprep.mubr.bf16.mxu0 %v2777
        %3295 = vmatmul.mubr.bf16.gmra.mrb[0].mxu0 %v2770
        %v3296 = vpop.f32.mrb[0].mxu0
        %v3297 = vadd.f32 %v2686, %v3296
        %v3298 = vpop.f32.mrb[0].mxu0
        %v3299 = vpop.f32.mrb[0].mxu0
        %v3300 = vadd.f32 %v2686, %v3299
        %v3301 = vpop.f32.mrb[0].mxu0
        %3302 = vmatprep.mubr.bf16.mxu0 %v2799
        %3303 = vmatmul.mubr.bf16.gmra.mrb[0].mxu0 %v2792
        %v3304 = vpop.f32.mrb[0].mxu0
        %v3305 = vadd.f32 %v2686, %v3304
        %v3306 = vpop.f32.mrb[0].mxu0
        %v3307 = vpop.f32.mrb[0].mxu0
        %v3308 = vadd.f32 %v2686, %v3307
        %v3309 = vpop.f32.mrb[0].mxu0
        %3310 = vmatprep.mubr.bf16.mxu0 %v2821
        %3311 = vmatmul.mubr.bf16.gmra.mrb[0].mxu0 %v2814
        %v3312 = vpop.f32.mrb[0].mxu0
        %v3313 = vadd.f32 %v2686, %v3312
        %v3314 = vpop.f32.mrb[0].mxu0
        %v3315 = vpop.f32.mrb[0].mxu0
        %v3316 = vadd.f32 %v2686, %v3315
        %v3317 = vpop.f32.mrb[0].mxu0
        %3318 = vmatprep.mubr.bf16.mxu0 %v2843
        %3319 = vmatmul.mubr.bf16.gmra.mrb[0].mxu0 %v2836
        %v3320 = vpop.f32.mrb[0].mxu0
        %v3321 = vadd.f32 %v2686, %v3320
        %v3322 = vpop.f32.mrb[0].mxu0
        %v3323 = vpop.f32.mrb[0].mxu0
        %v3324 = vadd.f32 %v2686, %v3323
        %v3325 = vpop.f32.mrb[0].mxu0
        %3326 = vmatprep.mubr.bf16.mxu0 %v2865
        %3327 = vmatmul.mubr.bf16.gmra.mrb[0].mxu0 %v2858
        %v3328 = vpop.f32.mrb[0].mxu0
        %v3329 = vadd.f32 %v2686, %v3328
        %v3330 = vpop.f32.mrb[0].mxu0
        %v3331 = vpop.f32.mrb[0].mxu0
        %v3332 = vadd.f32 %v2686, %v3331
        %v3333 = vpop.f32.mrb[0].mxu0
        %3334 = vmatprep.mubr.bf16.mxu0 %v2887
        %3335 = vmatmul.mubr.bf16.gmra.mrb[0].mxu0 %v2880
        %v3336 = vpop.f32.mrb[0].mxu0
        %v3337 = vadd.f32 %v2686, %v3336
        %v3338 = vpop.f32.mrb[0].mxu0
        %v3339 = vpop.f32.mrb[0].mxu0
        %v3340 = vadd.f32 %v2686, %v3339
        %v3341 = vpop.f32.mrb[0].mxu0
        %3342 = vmatprep.mubr.bf16.mxu0 %v2909
        %3343 = vmatmul.mubr.bf16.gmra.mrb[0].mxu0 %v2902
        %v3344 = vpop.f32.mrb[0].mxu0
        %v3345 = vadd.f32 %v2686, %v3344
        %v3346 = vpop.f32.mrb[0].mxu0
        %v3347 = vpop.f32.mrb[0].mxu0
        %v3348 = vadd.f32 %v2686, %v3347
        %v3349 = vpop.f32.mrb[0].mxu0
        %3350 = vmatprep.mubr.bf16.mxu0 %v2931
        %3351 = vmatmul.mubr.bf16.gmra.mrb[0].mxu0 %v2924
        %v3352 = vpop.f32.mrb[0].mxu0
        %v3353 = vadd.f32 %v2686, %v3352
        %v3354 = vpop.f32.mrb[0].mxu0
        %v3355 = vpop.f32.mrb[0].mxu0
        %v3356 = vadd.f32 %v2686, %v3355
        %v3357 = vpop.f32.mrb[0].mxu0
        %3358 = vmatprep.mubr.bf16.mxu0 %v2953
        %3359 = vmatmul.mubr.bf16.gmra.mrb[0].mxu0 %v2946
        %v3360 = vpop.f32.mrb[0].mxu0
        %v3361 = vadd.f32 %v2686, %v3360
        %v3362 = vpop.f32.mrb[0].mxu0
        %v3363 = vpop.f32.mrb[0].mxu0
        %v3364 = vadd.f32 %v2686, %v3363
        %v3365 = vpop.f32.mrb[0].mxu0
        %3366 = vmatprep.mubr.bf16.mxu0 %v2975
        %3367 = vmatmul.mubr.bf16.gmra.mrb[0].mxu0 %v2968
        %v3368 = vpop.f32.mrb[0].mxu0
        %v3369 = vadd.f32 %v2686, %v3368
        %v3370 = vpop.f32.mrb[0].mxu0
        %v3371 = vpop.f32.mrb[0].mxu0
        %v3372 = vadd.f32 %v2686, %v3371
        %v3373 = vpop.f32.mrb[0].mxu0
        %3374 = vmatprep.mubr.bf16.mxu0 %v2997
        %3375 = vmatmul.mubr.bf16.gmra.mrb[0].mxu0 %v2990
        %v3376 = vpop.f32.mrb[0].mxu0
        %v3377 = vadd.f32 %v2686, %v3376
        %v3378 = vpop.f32.mrb[0].mxu0
        %v3379 = vpop.f32.mrb[0].mxu0
        %v3380 = vadd.f32 %v2686, %v3379
        %v3381 = vpop.f32.mrb[0].mxu0
        %3382 = vmatprep.mubr.bf16.mxu0 %v3019
        %3383 = vmatmul.mubr.bf16.gmra.mrb[0].mxu0 %v3012
        %v3384 = vpop.f32.mrb[0].mxu0
        %v3385 = vadd.f32 %v2686, %v3384
        %v3386 = vpop.f32.mrb[0].mxu0
        %v3387 = vpop.f32.mrb[0].mxu0
        %v3388 = vadd.f32 %v2686, %v3387
        %v3389 = vpop.f32.mrb[0].mxu0
        %3390 = vmatprep.mubr.bf16.mxu0 %v3041
        %3391 = vmatmul.mubr.bf16.gmra.mrb[0].mxu0 %v3034
        %v3392 = vpop.f32.mrb[0].mxu0
        %v3393 = vadd.f32 %v2686, %v3392
        %v3394 = vpop.f32.mrb[0].mxu0
        %v3395 = vpop.f32.mrb[0].mxu0
        %v3396 = vadd.f32 %v2686, %v3395
        %v3397 = vpop.f32.mrb[0].mxu0
        %3398 = vdwg.mxu0
        %3399 = vmatprep.subr.bf16.mxu0 0
        %3400 = vmatpush1.bf16.msra.mxu0 %v3170
        %3401 = vmatprep.subr.bf16.mxu0 0
        %3402 = vmatpush1.bf16.msra.mxu0 %v3171
        %3403 = vmatprep.subr.bf16.mxu0 0
        %3404 = vmatpush1.bf16.msra.mxu0 0
        %3405 = vmatprep.subr.bf16.mxu0 0
        %3406 = vmatpush1.bf16.msra.mxu0 0
        %3407 = vmatprep.subr.bf16.mxu0 0
        %3408 = vmatpush1.bf16.msra.mxu0 0
        %3409 = vmatprep.subr.bf16.mxu0 0
        %3410 = vmatpush1.bf16.msra.mxu0 0
        %3411 = vmatprep.subr.bf16.mxu0 0
        %3412 = vmatpush1.bf16.msra.mxu0 0
        %3413 = vmatprep.subr.bf16.mxu0 0
        %3414 = vmatpush1.bf16.msra.mxu0 0
        %3415 = vmatprep.subr.bf16.mxu0 0
        %3416 = vmatpush1.bf16.msra.mxu0 0
        %3417 = vmatprep.subr.bf16.mxu0 0
        %3418 = vmatpush1.bf16.msra.mxu0 0
        %3419 = vmatprep.subr.bf16.mxu0 0
        %3420 = vmatpush1.bf16.msra.mxu0 0
        %3421 = vmatprep.subr.bf16.mxu0 0
        %3422 = vmatpush1.bf16.msra.mxu0 0
        %3423 = vmatprep.subr.bf16.mxu0 0
        %3424 = vmatpush1.bf16.msra.mxu0 0
        %3425 = vmatprep.subr.bf16.mxu0 0
        %3426 = vmatpush1.bf16.msra.mxu0 0
        %3427 = vmatprep.subr.bf16.mxu0 0
        %3428 = vmatpush1.bf16.msra.mxu0 0
        %3429 = vmatprep.subr.bf16.mxu0 0
        %3430 = vmatpush1.bf16.msra.mxu0 0
        %3431 = vmatprep.mubr.bf16.mxu0 0
        %3432 = vmatmul.mubr.bf16.gmra.mrb[0].mxu0 %v3191
        %v3433 = vpop.f32.mrb[0].mxu0
        %v3434 = vadd.f32 %v3273, %v3433
        %v3435 = vpop.f32.mrb[0].mxu0
        %v3436 = vpop.f32.mrb[0].mxu0
        %v3437 = vadd.f32 %v3276, %v3436
        %v3438 = vpop.f32.mrb[0].mxu0
        %3439 = vmatprep.mubr.bf16.mxu0 0
        %3440 = vmatmul.mubr.bf16.gmra.mrb[0].mxu0 %v3194
        %v3441 = vpop.f32.mrb[0].mxu0
        %v3442 = vadd.f32 %v3281, %v3441
        %v3443 = vpop.f32.mrb[0].mxu0
        %v3444 = vpop.f32.mrb[0].mxu0
        %v3445 = vadd.f32 %v3284, %v3444
        %v3446 = vpop.f32.mrb[0].mxu0
        %3447 = vmatprep.mubr.bf16.mxu0 0
        %3448 = vmatmul.mubr.bf16.gmra.mrb[0].mxu0 %v3197
        %v3449 = vpop.f32.mrb[0].mxu0
        %v3450 = vadd.f32 %v3289, %v3449
        %v3451 = vpop.f32.mrb[0].mxu0
        %v3452 = vpop.f32.mrb[0].mxu0
        %v3453 = vadd.f32 %v3292, %v3452
        %v3454 = vpop.f32.mrb[0].mxu0
        %3455 = vmatprep.mubr.bf16.mxu0 0
        %3456 = vmatmul.mubr.bf16.gmra.mrb[0].mxu0 %v3200
        %v3457 = vpop.f32.mrb[0].mxu0
        %v3458 = vadd.f32 %v3297, %v3457
        %v3459 = vpop.f32.mrb[0].mxu0
        %v3460 = vpop.f32.mrb[0].mxu0
        %v3461 = vadd.f32 %v3300, %v3460
        %v3462 = vpop.f32.mrb[0].mxu0
        %3463 = vmatprep.mubr.bf16.mxu0 0
        %3464 = vmatmul.mubr.bf16.gmra.mrb[0].mxu0 %v3203
        %v3465 = vpop.f32.mrb[0].mxu0
        %v3466 = vadd.f32 %v3305, %v3465
        %v3467 = vpop.f32.mrb[0].mxu0
        %v3468 = vpop.f32.mrb[0].mxu0
        %v3469 = vadd.f32 %v3308, %v3468
        %v3470 = vpop.f32.mrb[0].mxu0
        %3471 = vmatprep.mubr.bf16.mxu0 0
        %3472 = vmatmul.mubr.bf16.gmra.mrb[0].mxu0 %v3206
        %v3473 = vpop.f32.mrb[0].mxu0
        %v3474 = vadd.f32 %v3313, %v3473
        %v3475 = vpop.f32.mrb[0].mxu0
        %v3476 = vpop.f32.mrb[0].mxu0
        %v3477 = vadd.f32 %v3316, %v3476
        %v3478 = vpop.f32.mrb[0].mxu0
        %3479 = vmatprep.mubr.bf16.mxu0 0
        %3480 = vmatmul.mubr.bf16.gmra.mrb[0].mxu0 %v3209
        %v3481 = vpop.f32.mrb[0].mxu0
        %v3482 = vadd.f32 %v3321, %v3481
        %v3483 = vpop.f32.mrb[0].mxu0
        %v3484 = vpop.f32.mrb[0].mxu0
        %v3485 = vadd.f32 %v3324, %v3484
        %v3486 = vpop.f32.mrb[0].mxu0
        %3487 = vmatprep.mubr.bf16.mxu0 0
        %3488 = vmatmul.mubr.bf16.gmra.mrb[0].mxu0 %v3212
        %v3489 = vpop.f32.mrb[0].mxu0
        %v3490 = vadd.f32 %v3329, %v3489
        %v3491 = vpop.f32.mrb[0].mxu0
        %v3492 = vpop.f32.mrb[0].mxu0
        %v3493 = vadd.f32 %v3332, %v3492
        %v3494 = vpop.f32.mrb[0].mxu0
        %3495 = vmatprep.mubr.bf16.mxu0 0
        %3496 = vmatmul.mubr.bf16.gmra.mrb[0].mxu0 %v3215
        %v3497 = vpop.f32.mrb[0].mxu0
        %v3498 = vadd.f32 %v3337, %v3497
        %v3499 = vpop.f32.mrb[0].mxu0
        %v3500 = vpop.f32.mrb[0].mxu0
        %v3501 = vadd.f32 %v3340, %v3500
        %v3502 = vpop.f32.mrb[0].mxu0
        %3503 = vmatprep.mubr.bf16.mxu0 0
        %3504 = vmatmul.mubr.bf16.gmra.mrb[0].mxu0 %v3218
        %v3505 = vpop.f32.mrb[0].mxu0
        %v3506 = vadd.f32 %v3345, %v3505
        %v3507 = vpop.f32.mrb[0].mxu0
        %v3508 = vpop.f32.mrb[0].mxu0
        %v3509 = vadd.f32 %v3348, %v3508
        %v3510 = vpop.f32.mrb[0].mxu0
        %3511 = vmatprep.mubr.bf16.mxu0 0
        %3512 = vmatmul.mubr.bf16.gmra.mrb[0].mxu0 %v3221
        %v3513 = vpop.f32.mrb[0].mxu0
        %v3514 = vadd.f32 %v3353, %v3513
        %v3515 = vpop.f32.mrb[0].mxu0
        %v3516 = vpop.f32.mrb[0].mxu0
        %v3517 = vadd.f32 %v3356, %v3516
        %v3518 = vpop.f32.mrb[0].mxu0
        %3519 = vmatprep.mubr.bf16.mxu0 0
        %3520 = vmatmul.mubr.bf16.gmra.mrb[0].mxu0 %v3224
        %v3521 = vpop.f32.mrb[0].mxu0
        %v3522 = vadd.f32 %v3361, %v3521
        %v3523 = vpop.f32.mrb[0].mxu0
        %v3524 = vpop.f32.mrb[0].mxu0
        %v3525 = vadd.f32 %v3364, %v3524
        %v3526 = vpop.f32.mrb[0].mxu0
        %3527 = vmatprep.mubr.bf16.mxu0 0
        %3528 = vmatmul.mubr.bf16.gmra.mrb[0].mxu0 %v3227
        %v3529 = vpop.f32.mrb[0].mxu0
        %v3530 = vadd.f32 %v3369, %v3529
        %v3531 = vpop.f32.mrb[0].mxu0
        %v3532 = vpop.f32.mrb[0].mxu0
        %v3533 = vadd.f32 %v3372, %v3532
        %v3534 = vpop.f32.mrb[0].mxu0
        %3535 = vmatprep.mubr.bf16.mxu0 0
        %3536 = vmatmul.mubr.bf16.gmra.mrb[0].mxu0 %v3230
        %v3537 = vpop.f32.mrb[0].mxu0
        %v3538 = vadd.f32 %v3377, %v3537
        %v3539 = vpop.f32.mrb[0].mxu0
        %v3540 = vpop.f32.mrb[0].mxu0
        %v3541 = vadd.f32 %v3380, %v3540
        %v3542 = vpop.f32.mrb[0].mxu0
        %3543 = vmatprep.mubr.bf16.mxu0 0
        %3544 = vmatmul.mubr.bf16.gmra.mrb[0].mxu0 %v3233
        %v3545 = vpop.f32.mrb[0].mxu0
        %v3546 = vadd.f32 %v3385, %v3545
        %v3547 = vpop.f32.mrb[0].mxu0
        %v3548 = vpop.f32.mrb[0].mxu0
        %v3549 = vadd.f32 %v3388, %v3548
        %v3550 = vpop.f32.mrb[0].mxu0
        %3551 = vmatprep.mubr.bf16.mxu0 0
        %3552 = vmatmul.mubr.bf16.gmra.mrb[0].mxu0 %v3236
        %v3553 = vpop.f32.mrb[0].mxu0
        %v3554 = vadd.f32 %v3393, %v3553
        %v3555 = vpop.f32.mrb[0].mxu0
        %v3556 = vpop.f32.mrb[0].mxu0
        %v3557 = vadd.f32 %v3396, %v3556
        %v3558 = vpop.f32.mrb[0].mxu0
        %3559 = vdwg.mxu0
        %v3560 = vmax.f32 %v3434, 0.0
        %v3561 = vmax.f32 %v3437, 0.0
        %v3562 = vmax.f32 %v3442, 0.0
        %v3563 = vmax.f32 %v3445, 0.0
        %v3564 = vmax.f32 %v3450, 0.0
        %v3565 = vmax.f32 %v3453, 0.0
        %v3566 = vmax.f32 %v3458, 0.0
        %v3567 = vmax.f32 %v3461, 0.0
        %v3568 = vmax.f32 %v3466, 0.0
        %v3569 = vmax.f32 %v3469, 0.0
        %v3570 = vmax.f32 %v3474, 0.0
        %v3571 = vmax.f32 %v3477, 0.0
        %v3572 = vmax.f32 %v3482, 0.0
        %v3573 = vmax.f32 %v3485, 0.0
        %v3574 = vmax.f32 %v3490, 0.0
        %v3575 = vmax.f32 %v3493, 0.0
        %v3576 = vmax.f32 %v3498, 0.0
        %v3577 = vmax.f32 %v3501, 0.0
        %v3578 = vmax.f32 %v3506, 0.0
        %v3579 = vmax.f32 %v3509, 0.0
        %v3580 = vmax.f32 %v3514, 0.0
        %v3581 = vmax.f32 %v3517, 0.0
        %v3582 = vmax.f32 %v3522, 0.0
        %v3583 = vmax.f32 %v3525, 0.0
        %v3584 = vmax.f32 %v3530, 0.0
        %v3585 = vmax.f32 %v3533, 0.0
        %v3586 = vmax.f32 %v3538, 0.0
        %v3587 = vmax.f32 %v3541, 0.0
        %v3588 = vmax.f32 %v3546, 0.0
        %v3589 = vmax.f32 %v3549, 0.0
        %v3590 = vmax.f32 %v3554, 0.0
        %v3591 = vmax.f32 %v3557, 0.0
        %v3592 = vpack.c.bf16 %v3561, %v3560
        %v3593 = vpack.c.bf16 %v3563, %v3562
        %v3594 = vpack.c.bf16 %v3565, %v3564
        %v3595 = vpack.c.bf16 %v3567, %v3566
        %v3596 = vpack.c.bf16 %v3569, %v3568
        %v3597 = vpack.c.bf16 %v3571, %v3570
        %v3598 = vpack.c.bf16 %v3573, %v3572
        %v3599 = vpack.c.bf16 %v3575, %v3574
        %v3600 = vpack.c.bf16 %v3577, %v3576
        %v3601 = vpack.c.bf16 %v3579, %v3578
        %v3602 = vpack.c.bf16 %v3581, %v3580
        %v3603 = vpack.c.bf16 %v3583, %v3582
        %v3604 = vpack.c.bf16 %v3585, %v3584
        %v3605 = vpack.c.bf16 %v3587, %v3586
        %v3606 = vpack.c.bf16 %v3589, %v3588
        %v3607 = vpack.c.bf16 %v3591, %v3590
        %v3640 = vunpack.c.l.b16 %v745
        %v3641 = vunpack.c.l.b16 %v746
        %v3642 = vunpack.c.l.b16 %v747
        %v3643 = vunpack.c.l.b16 %v748
        %v3644 = vunpack.c.l.b16 %v749
        %v3645 = vunpack.c.l.b16 %v750
        %v3646 = vunpack.c.l.b16 %v751
        %v3647 = vunpack.c.l.b16 %v752
        %v3648 = vunpack.c.l.b16 %v753
        %v3649 = vunpack.c.l.b16 %v754
        %v3650 = vunpack.c.l.b16 %v755
        %v3651 = vunpack.c.l.b16 %v756
        %v3652 = vunpack.c.l.b16 %v757
        %v3653 = vunpack.c.l.b16 %v758
        %v3654 = vunpack.c.l.b16 %v759
        %v3655 = vunpack.c.l.b16 %v760
        %v3656 = vunpack.c.l.b16 %v761
        %v3657 = vunpack.c.l.b16 %v762
        %v3658 = vunpack.c.l.b16 %v763
        %v3659 = vunpack.c.l.b16 %v764
        %v3660 = vunpack.c.l.b16 %v765
        %v3661 = vunpack.c.l.b16 %v766
        %v3662 = vunpack.c.l.b16 %v767
        %v3663 = vunpack.c.l.b16 %v768
        %v3664 = vunpack.c.l.b16 %v769
        %v3665 = vunpack.c.l.b16 %v770
        %v3666 = vunpack.c.l.b16 %v771
        %v3667 = vunpack.c.l.b16 %v772
        %v3668 = vunpack.c.l.b16 %v773
        %v3669 = vunpack.c.l.b16 %v774
        %v3670 = vunpack.c.l.b16 %v775
        %v3671 = vunpack.c.l.b16 %v776
        %v3672 = vpack.c.b16 %v3641, %v3640
        %v3673 = vpack.c.b16 %v3643, %v3642
        %v3674 = vpack.c.b16 %v3645, %v3644
        %v3675 = vpack.c.b16 %v3647, %v3646
        %v3676 = vpack.c.b16 %v3649, %v3648
        %v3677 = vpack.c.b16 %v3651, %v3650
        %v3678 = vpack.c.b16 %v3653, %v3652
        %v3679 = vpack.c.b16 %v3655, %v3654
        %v3680 = vpack.c.b16 %v3657, %v3656
        %v3681 = vpack.c.b16 %v3659, %v3658
        %v3682 = vpack.c.b16 %v3661, %v3660
        %v3683 = vpack.c.b16 %v3663, %v3662
        %v3684 = vpack.c.b16 %v3665, %v3664
        %v3685 = vpack.c.b16 %v3667, %v3666
        %v3686 = vpack.c.b16 %v3669, %v3668
        %v3687 = vpack.c.b16 %v3671, %v3670
        %3688 = vrot.lane.b32.xlu0 %v3672, 32
        %v3689 = vpop.permute.xlu0 %3688
        %3690 = vrot.lane.b32.xlu0 %v3673, 32
        %v3691 = vpop.permute.xlu0 %3690
        %3692 = vrot.lane.b32.xlu0 %v3674, 32
        %v3693 = vpop.permute.xlu0 %3692
        %3694 = vrot.lane.b32.xlu0 %v3675, 32
        %v3695 = vpop.permute.xlu0 %3694
        %3696 = vrot.lane.b32.xlu0 %v3676, 32
        %v3697 = vpop.permute.xlu0 %3696
        %3698 = vrot.lane.b32.xlu0 %v3677, 32
        %v3699 = vpop.permute.xlu0 %3698
        %3700 = vrot.lane.b32.xlu0 %v3678, 32
        %v3701 = vpop.permute.xlu0 %3700
        %3702 = vrot.lane.b32.xlu0 %v3679, 32
        %v3703 = vpop.permute.xlu0 %3702
        %3704 = vrot.lane.b32.xlu0 %v3680, 32
        %v3705 = vpop.permute.xlu0 %3704
        %3706 = vrot.lane.b32.xlu0 %v3681, 32
        %v3707 = vpop.permute.xlu0 %3706
        %3708 = vrot.lane.b32.xlu0 %v3682, 32
        %v3709 = vpop.permute.xlu0 %3708
        %3710 = vrot.lane.b32.xlu0 %v3683, 32
        %v3711 = vpop.permute.xlu0 %3710
        %3712 = vrot.lane.b32.xlu0 %v3684, 32
        %v3713 = vpop.permute.xlu0 %3712
        %3714 = vrot.lane.b32.xlu0 %v3685, 32
        %v3715 = vpop.permute.xlu0 %3714
        %3716 = vrot.lane.b32.xlu0 %v3686, 32
        %v3717 = vpop.permute.xlu0 %3716
        %3718 = vrot.lane.b32.xlu0 %v3687, 32
        %v3719 = vpop.permute.xlu0 %3718
        %v3722 = vsel %vm295, %v3592, %v3689
        %v3725 = vsel %vm295, %v3593, %v3691
        %v3728 = vsel %vm295, %v3594, %v3693
        %v3731 = vsel %vm295, %v3595, %v3695
        %v3734 = vsel %vm295, %v3596, %v3697
        %v3737 = vsel %vm295, %v3597, %v3699
        %v3740 = vsel %vm295, %v3598, %v3701
        %v3743 = vsel %vm295, %v3599, %v3703
        %v3746 = vsel %vm295, %v3600, %v3705
        %v3749 = vsel %vm295, %v3601, %v3707
        %v3752 = vsel %vm295, %v3602, %v3709
        %v3755 = vsel %vm295, %v3603, %v3711
        %v3758 = vsel %vm295, %v3604, %v3713
        %v3761 = vsel %vm295, %v3605, %v3715
        %v3764 = vsel %vm295, %v3606, %v3717
        %v3767 = vsel %vm295, %v3607, %v3719
        %v3768 = vld [vmem:[%s5] sm:$0xf]
        %v3769 = vld [vmem:[%s5 + $0x4] sm:$0xf]
        %v3770 = vld [vmem:[%s5 + $0x8] sm:$0xf]
        %v3771 = vld [vmem:[%s5 + $0xc] sm:$0xf]
        %v3772 = vld [vmem:[%s5 + $0x10] sm:$0xf]
        %v3773 = vld [vmem:[%s5 + $0x14] sm:$0xf]
        %v3774 = vld [vmem:[%s5 + $0x18] sm:$0xf]
        %v3775 = vld [vmem:[%s5 + $0x1c] sm:$0xf]
        %v3776 = vld [vmem:[%s5 + $0x20] sm:$0xf]
        %v3777 = vld [vmem:[%s5 + $0x24] sm:$0xf]
        %v3778 = vld [vmem:[%s5 + $0x28] sm:$0xf]
        %v3779 = vld [vmem:[%s5 + $0x2c] sm:$0xf]
        %v3780 = vld [vmem:[%s6] sm:$0x1]
        %v3782 = vlaneseq
        %v3783 = vshrl.u32 %v3782, 7
        %v3784 = vsub.s32 0, %v3783
        %v3785 = vrot.slane %v3780, %v3784
        %v3799 = vunpack.c.l.b16 %v3768
        %v3800 = vunpack.c.l.b16 %v3769
        %v3801 = vunpack.c.l.b16 %v3770
        %v3802 = vunpack.c.l.b16 %v3771
        %v3803 = vunpack.c.l.b16 %v3772
        %v3804 = vunpack.c.l.b16 %v3773
        %v3805 = vunpack.c.l.b16 %v3774
        %v3806 = vunpack.c.l.b16 %v3775
        %v3807 = vunpack.c.l.b16 %v3776
        %v3808 = vunpack.c.l.b16 %v3777
        %v3809 = vunpack.c.l.b16 %v3778
        %v3810 = vunpack.c.l.b16 %v3779
        %v3811 = vpack.c.b16 %v3800, %v3799
        %v3812 = vpack.c.b16 %v3802, %v3801
        %v3813 = vpack.c.b16 %v3804, %v3803
        %v3814 = vpack.c.b16 %v3806, %v3805
        %v3815 = vpack.c.b16 %v3808, %v3807
        %v3816 = vpack.c.b16 %v3810, %v3809
        %v3823 = vsel %vm2491, %v3722, 0
        %v3825 = vsel %vm2491, %v3725, 0
        %v3827 = vsel %vm2491, %v3728, 0
        %v3829 = vsel %vm2491, %v3731, 0
        %v3831 = vsel %vm2491, %v3734, 0
        %v3833 = vsel %vm2491, %v3737, 0
        %v3835 = vsel %vm2491, %v3740, 0
        %v3837 = vsel %vm2491, %v3743, 0
        %v3839 = vsel %vm2491, %v3746, 0
        %v3841 = vsel %vm2491, %v3749, 0
        %v3843 = vsel %vm2491, %v3752, 0
        %v3845 = vsel %vm2491, %v3755, 0
        %v3847 = vsel %vm2491, %v3758, 0
        %v3849 = vsel %vm2491, %v3761, 0
        %v3851 = vsel %vm2491, %v3764, 0
        %v3853 = vsel %vm2491, %v3767, 0
        %3855 = vmatprep.subr.bf16.mxu0 0
        %3856 = vmatpush1.bf16.msra.mxu0 %v3811
        %3857 = vmatprep.subr.bf16.mxu0 0
        %3858 = vmatpush1.bf16.msra.mxu0 %v3812
        %3859 = vmatprep.subr.bf16.mxu0 0
        %3860 = vmatpush1.bf16.msra.mxu0 %v3813
        %3861 = vmatprep.subr.bf16.mxu0 0
        %3862 = vmatpush1.bf16.msra.mxu0 %v3814
        %3863 = vmatprep.subr.bf16.mxu0 0
        %3864 = vmatpush1.bf16.msra.mxu0 %v3815
        %3865 = vmatprep.subr.bf16.mxu0 0
        %3866 = vmatpush1.bf16.msra.mxu0 %v3816
        %3867 = vmatprep.subr.bf16.mxu0 0
        %3868 = vmatpush1.bf16.msra.mxu0 0
        %3869 = vmatprep.subr.bf16.mxu0 0
        %3870 = vmatpush1.bf16.msra.mxu0 0
        %3871 = vmatprep.subr.bf16.mxu0 0
        %3872 = vmatpush1.bf16.msra.mxu0 0
        %3873 = vmatprep.subr.bf16.mxu0 0
        %3874 = vmatpush1.bf16.msra.mxu0 0
        %3875 = vmatprep.subr.bf16.mxu0 0
        %3876 = vmatpush1.bf16.msra.mxu0 0
        %3877 = vmatprep.subr.bf16.mxu0 0
        %3878 = vmatpush1.bf16.msra.mxu0 0
        %3879 = vmatprep.subr.bf16.mxu0 0
        %3880 = vmatpush1.bf16.msra.mxu0 0
        %3881 = vmatprep.subr.bf16.mxu0 0
        %3882 = vmatpush1.bf16.msra.mxu0 0
        %3883 = vmatprep.subr.bf16.mxu0 0
        %3884 = vmatpush1.bf16.msra.mxu0 0
        %3885 = vmatprep.subr.bf16.mxu0 0
        %3886 = vmatpush1.bf16.msra.mxu0 0
        %3887 = vmatprep.mubr.bf16.mxu0 0
        %3888 = vmatmul.mubr.bf16.gmra.mrb[0].mxu0 %v3823
        %v3889 = vpop.f32.mrb[0].mxu0
        %v3890 = vadd.f32 %v3785, %v3889
        %v3891 = vpop.f32.mrb[0].mxu0
        %v3892 = vpop.f32.mrb[0].mxu0
        %v3893 = vadd.f32 %v3785, %v3892
        %v3894 = vpop.f32.mrb[0].mxu0
        %3895 = vmatprep.mubr.bf16.mxu0 0
        %3896 = vmatmul.mubr.bf16.gmra.mrb[0].mxu0 %v3825
        %v3897 = vpop.f32.mrb[0].mxu0
        %v3898 = vadd.f32 %v3785, %v3897
        %v3899 = vpop.f32.mrb[0].mxu0
        %v3900 = vpop.f32.mrb[0].mxu0
        %v3901 = vadd.f32 %v3785, %v3900
        %v3902 = vpop.f32.mrb[0].mxu0
        %3903 = vmatprep.mubr.bf16.mxu0 0
        %3904 = vmatmul.mubr.bf16.gmra.mrb[0].mxu0 %v3827
        %v3905 = vpop.f32.mrb[0].mxu0
        %v3906 = vadd.f32 %v3785, %v3905
        %v3907 = vpop.f32.mrb[0].mxu0
        %v3908 = vpop.f32.mrb[0].mxu0
        %v3909 = vadd.f32 %v3785, %v3908
        %v3910 = vpop.f32.mrb[0].mxu0
        %3911 = vmatprep.mubr.bf16.mxu0 0
        %3912 = vmatmul.mubr.bf16.gmra.mrb[0].mxu0 %v3829
        %v3913 = vpop.f32.mrb[0].mxu0
        %v3914 = vadd.f32 %v3785, %v3913
        %v3915 = vpop.f32.mrb[0].mxu0
        %v3916 = vpop.f32.mrb[0].mxu0
        %v3917 = vadd.f32 %v3785, %v3916
        %v3918 = vpop.f32.mrb[0].mxu0
        %3919 = vmatprep.mubr.bf16.mxu0 0
        %3920 = vmatmul.mubr.bf16.gmra.mrb[0].mxu0 %v3831
        %v3921 = vpop.f32.mrb[0].mxu0
        %v3922 = vadd.f32 %v3785, %v3921
        %v3923 = vpop.f32.mrb[0].mxu0
        %v3924 = vpop.f32.mrb[0].mxu0
        %v3925 = vadd.f32 %v3785, %v3924
        %v3926 = vpop.f32.mrb[0].mxu0
        %3927 = vmatprep.mubr.bf16.mxu0 0
        %3928 = vmatmul.mubr.bf16.gmra.mrb[0].mxu0 %v3833
        %v3929 = vpop.f32.mrb[0].mxu0
        %v3930 = vadd.f32 %v3785, %v3929
        %v3931 = vpop.f32.mrb[0].mxu0
        %v3932 = vpop.f32.mrb[0].mxu0
        %v3933 = vadd.f32 %v3785, %v3932
        %v3934 = vpop.f32.mrb[0].mxu0
        %3935 = vmatprep.mubr.bf16.mxu0 0
        %3936 = vmatmul.mubr.bf16.gmra.mrb[0].mxu0 %v3835
        %v3937 = vpop.f32.mrb[0].mxu0
        %v3938 = vadd.f32 %v3785, %v3937
        %v3939 = vpop.f32.mrb[0].mxu0
        %v3940 = vpop.f32.mrb[0].mxu0
        %v3941 = vadd.f32 %v3785, %v3940
        %v3942 = vpop.f32.mrb[0].mxu0
        %3943 = vmatprep.mubr.bf16.mxu0 0
        %3944 = vmatmul.mubr.bf16.gmra.mrb[0].mxu0 %v3837
        %v3945 = vpop.f32.mrb[0].mxu0
        %v3946 = vadd.f32 %v3785, %v3945
        %v3947 = vpop.f32.mrb[0].mxu0
        %v3948 = vpop.f32.mrb[0].mxu0
        %v3949 = vadd.f32 %v3785, %v3948
        %v3950 = vpop.f32.mrb[0].mxu0
        %3951 = vmatprep.mubr.bf16.mxu0 0
        %3952 = vmatmul.mubr.bf16.gmra.mrb[0].mxu0 %v3839
        %v3953 = vpop.f32.mrb[0].mxu0
        %v3954 = vadd.f32 %v3785, %v3953
        %v3955 = vpop.f32.mrb[0].mxu0
        %v3956 = vpop.f32.mrb[0].mxu0
        %v3957 = vadd.f32 %v3785, %v3956
        %v3958 = vpop.f32.mrb[0].mxu0
        %3959 = vmatprep.mubr.bf16.mxu0 0
        %3960 = vmatmul.mubr.bf16.gmra.mrb[0].mxu0 %v3841
        %v3961 = vpop.f32.mrb[0].mxu0
        %v3962 = vadd.f32 %v3785, %v3961
        %v3963 = vpop.f32.mrb[0].mxu0
        %v3964 = vpop.f32.mrb[0].mxu0
        %v3965 = vadd.f32 %v3785, %v3964
        %v3966 = vpop.f32.mrb[0].mxu0
        %3967 = vmatprep.mubr.bf16.mxu0 0
        %3968 = vmatmul.mubr.bf16.gmra.mrb[0].mxu0 %v3843
        %v3969 = vpop.f32.mrb[0].mxu0
        %v3970 = vadd.f32 %v3785, %v3969
        %v3971 = vpop.f32.mrb[0].mxu0
        %v3972 = vpop.f32.mrb[0].mxu0
        %v3973 = vadd.f32 %v3785, %v3972
        %v3974 = vpop.f32.mrb[0].mxu0
        %3975 = vmatprep.mubr.bf16.mxu0 0
        %3976 = vmatmul.mubr.bf16.gmra.mrb[0].mxu0 %v3845
        %v3977 = vpop.f32.mrb[0].mxu0
        %v3978 = vadd.f32 %v3785, %v3977
        %v3979 = vpop.f32.mrb[0].mxu0
        %v3980 = vpop.f32.mrb[0].mxu0
        %v3981 = vadd.f32 %v3785, %v3980
        %v3982 = vpop.f32.mrb[0].mxu0
        %3983 = vmatprep.mubr.bf16.mxu0 0
        %3984 = vmatmul.mubr.bf16.gmra.mrb[0].mxu0 %v3847
        %v3985 = vpop.f32.mrb[0].mxu0
        %v3986 = vadd.f32 %v3785, %v3985
        %v3987 = vpop.f32.mrb[0].mxu0
        %v3988 = vpop.f32.mrb[0].mxu0
        %v3989 = vadd.f32 %v3785, %v3988
        %v3990 = vpop.f32.mrb[0].mxu0
        %3991 = vmatprep.mubr.bf16.mxu0 0
        %3992 = vmatmul.mubr.bf16.gmra.mrb[0].mxu0 %v3849
        %v3993 = vpop.f32.mrb[0].mxu0
        %v3994 = vadd.f32 %v3785, %v3993
        %v3995 = vpop.f32.mrb[0].mxu0
        %v3996 = vpop.f32.mrb[0].mxu0
        %v3997 = vadd.f32 %v3785, %v3996
        %v3998 = vpop.f32.mrb[0].mxu0
        %3999 = vmatprep.mubr.bf16.mxu0 0
        %4000 = vmatmul.mubr.bf16.gmra.mrb[0].mxu0 %v3851
        %v4001 = vpop.f32.mrb[0].mxu0
        %v4002 = vadd.f32 %v3785, %v4001
        %v4003 = vpop.f32.mrb[0].mxu0
        %v4004 = vpop.f32.mrb[0].mxu0
        %v4005 = vadd.f32 %v3785, %v4004
        %v4006 = vpop.f32.mrb[0].mxu0
        %4007 = vmatprep.mubr.bf16.mxu0 0
        %4008 = vmatmul.mubr.bf16.gmra.mrb[0].mxu0 %v3853
        %v4009 = vpop.f32.mrb[0].mxu0
        %v4010 = vadd.f32 %v3785, %v4009
        %v4011 = vpop.f32.mrb[0].mxu0
        %v4012 = vpop.f32.mrb[0].mxu0
        %v4013 = vadd.f32 %v3785, %v4012
        %v4014 = vpop.f32.mrb[0].mxu0
        %4015 = vdwg.mxu0
        %v4016 = vmax.f32 %v3890, 0.0
        %v4017 = vmax.f32 %v3893, 0.0
        %v4018 = vmax.f32 %v3898, 0.0
        %v4019 = vmax.f32 %v3901, 0.0
        %v4020 = vmax.f32 %v3906, 0.0
        %v4021 = vmax.f32 %v3909, 0.0
        %v4022 = vmax.f32 %v3914, 0.0
        %v4023 = vmax.f32 %v3917, 0.0
        %v4024 = vmax.f32 %v3922, 0.0
        %v4025 = vmax.f32 %v3925, 0.0
        %v4026 = vmax.f32 %v3930, 0.0
        %v4027 = vmax.f32 %v3933, 0.0
        %v4028 = vmax.f32 %v3938, 0.0
        %v4029 = vmax.f32 %v3941, 0.0
        %v4030 = vmax.f32 %v3946, 0.0
        %v4031 = vmax.f32 %v3949, 0.0
        %v4032 = vmax.f32 %v3954, 0.0
        %v4033 = vmax.f32 %v3957, 0.0
        %v4034 = vmax.f32 %v3962, 0.0
        %v4035 = vmax.f32 %v3965, 0.0
        %v4036 = vmax.f32 %v3970, 0.0
        %v4037 = vmax.f32 %v3973, 0.0
        %v4038 = vmax.f32 %v3978, 0.0
        %v4039 = vmax.f32 %v3981, 0.0
        %v4040 = vmax.f32 %v3986, 0.0
        %v4041 = vmax.f32 %v3989, 0.0
        %v4042 = vmax.f32 %v3994, 0.0
        %v4043 = vmax.f32 %v3997, 0.0
        %v4044 = vmax.f32 %v4002, 0.0
        %v4045 = vmax.f32 %v4005, 0.0
        %v4046 = vmax.f32 %v4010, 0.0
        %v4047 = vmax.f32 %v4013, 0.0
        %v4048 = vpack.c.bf16 %v4017, %v4016
        %v4049 = vpack.c.bf16 %v4019, %v4018
        %v4050 = vpack.c.bf16 %v4021, %v4020
        %v4051 = vpack.c.bf16 %v4023, %v4022
        %v4052 = vpack.c.bf16 %v4025, %v4024
        %v4053 = vpack.c.bf16 %v4027, %v4026
        %v4054 = vpack.c.bf16 %v4029, %v4028
        %v4055 = vpack.c.bf16 %v4031, %v4030
        %v4056 = vpack.c.bf16 %v4033, %v4032
        %v4057 = vpack.c.bf16 %v4035, %v4034
        %v4058 = vpack.c.bf16 %v4037, %v4036
        %v4059 = vpack.c.bf16 %v4039, %v4038
        %v4060 = vpack.c.bf16 %v4041, %v4040
        %v4061 = vpack.c.bf16 %v4043, %v4042
        %v4062 = vpack.c.bf16 %v4045, %v4044
        %v4063 = vpack.c.bf16 %v4047, %v4046
        %v4080 = vunpack.c.l.b16 %v4048
        %v4081 = vunpack.c.h.b16 %v4048
        %v4082 = vunpack.c.l.b16 %v4049
        %v4083 = vunpack.c.h.b16 %v4049
        %v4084 = vunpack.c.l.b16 %v4050
        %v4085 = vunpack.c.h.b16 %v4050
        %v4086 = vunpack.c.l.b16 %v4051
        %v4087 = vunpack.c.h.b16 %v4051
        %v4088 = vunpack.c.l.b16 %v4052
        %v4089 = vunpack.c.h.b16 %v4052
        %v4090 = vunpack.c.l.b16 %v4053
        %v4091 = vunpack.c.h.b16 %v4053
        %v4092 = vunpack.c.l.b16 %v4054
        %v4093 = vunpack.c.h.b16 %v4054
        %v4094 = vunpack.c.l.b16 %v4055
        %v4095 = vunpack.c.h.b16 %v4055
        %v4096 = vunpack.c.l.b16 %v4056
        %v4097 = vunpack.c.h.b16 %v4056
        %v4098 = vunpack.c.l.b16 %v4057
        %v4099 = vunpack.c.h.b16 %v4057
        %v4100 = vunpack.c.l.b16 %v4058
        %v4101 = vunpack.c.h.b16 %v4058
        %v4102 = vunpack.c.l.b16 %v4059
        %v4103 = vunpack.c.h.b16 %v4059
        %v4104 = vunpack.c.l.b16 %v4060
        %v4105 = vunpack.c.h.b16 %v4060
        %v4106 = vunpack.c.l.b16 %v4061
        %v4107 = vunpack.c.h.b16 %v4061
        %v4108 = vunpack.c.l.b16 %v4062
        %v4109 = vunpack.c.h.b16 %v4062
        %v4110 = vunpack.c.l.b16 %v4063
        %v4111 = vunpack.c.h.b16 %v4063
        %v4112 = vpack.c.b16 %v4080, %v4080
        %v4113 = vpack.c.b16 %v4081, %v4081
        %v4114 = vpack.c.b16 %v4082, %v4082
        %v4115 = vpack.c.b16 %v4083, %v4083
        %v4116 = vpack.c.b16 %v4084, %v4084
        %v4117 = vpack.c.b16 %v4085, %v4085
        %v4118 = vpack.c.b16 %v4086, %v4086
        %v4119 = vpack.c.b16 %v4087, %v4087
        %v4120 = vpack.c.b16 %v4088, %v4088
        %v4121 = vpack.c.b16 %v4089, %v4089
        %v4122 = vpack.c.b16 %v4090, %v4090
        %v4123 = vpack.c.b16 %v4091, %v4091
        %v4124 = vpack.c.b16 %v4092, %v4092
        %v4125 = vpack.c.b16 %v4093, %v4093
        %v4126 = vpack.c.b16 %v4094, %v4094
        %v4127 = vpack.c.b16 %v4095, %v4095
        %v4128 = vpack.c.b16 %v4096, %v4096
        %v4129 = vpack.c.b16 %v4097, %v4097
        %v4130 = vpack.c.b16 %v4098, %v4098
        %v4131 = vpack.c.b16 %v4099, %v4099
        %v4132 = vpack.c.b16 %v4100, %v4100
        %v4133 = vpack.c.b16 %v4101, %v4101
        %v4134 = vpack.c.b16 %v4102, %v4102
        %v4135 = vpack.c.b16 %v4103, %v4103
        %v4136 = vpack.c.b16 %v4104, %v4104
        %v4137 = vpack.c.b16 %v4105, %v4105
        %v4138 = vpack.c.b16 %v4106, %v4106
        %v4139 = vpack.c.b16 %v4107, %v4107
        %v4140 = vpack.c.b16 %v4108, %v4108
        %v4141 = vpack.c.b16 %v4109, %v4109
        %v4142 = vpack.c.b16 %v4110, %v4110
        %v4143 = vpack.c.b16 %v4111, %v4111
        %4176 = vst [vmem:[%s285] sm:$0xf] %v4112
        %4177 = vst [vmem:[%s285 + $0x4] sm:$0xf] %v4113
        %4178 = vst [vmem:[%s285 + $0x8] sm:$0xf] %v4114
        %4179 = vst [vmem:[%s285 + $0xc] sm:$0xf] %v4115
        %4180 = vst [vmem:[%s285 + $0x10] sm:$0xf] %v4116
        %4181 = vst [vmem:[%s285 + $0x14] sm:$0xf] %v4117
        %4182 = vst [vmem:[%s285 + $0x18] sm:$0xf] %v4118
        %4183 = vst [vmem:[%s285 + $0x1c] sm:$0xf] %v4119
        %4184 = vst [vmem:[%s285 + $0x20] sm:$0xf] %v4120
        %4185 = vst [vmem:[%s285 + $0x24] sm:$0xf] %v4121
        %4186 = vst [vmem:[%s285 + $0x28] sm:$0xf] %v4122
        %4187 = vst [vmem:[%s285 + $0x2c] sm:$0xf] %v4123
        %4188 = vst [vmem:[%s285 + $0x30] sm:$0xf] %v4124
        %4189 = vst [vmem:[%s285 + $0x34] sm:$0xf] %v4125
        %4190 = vst [vmem:[%s285 + $0x38] sm:$0xf] %v4126
        %4191 = vst [vmem:[%s285 + $0x3c] sm:$0xf] %v4127
        %4192 = vst [vmem:[%s285 + $0x40] sm:$0xf] %v4128
        %4193 = vst [vmem:[%s285 + $0x44] sm:$0xf] %v4129
        %4194 = vst [vmem:[%s285 + $0x48] sm:$0xf] %v4130
        %4195 = vst [vmem:[%s285 + $0x4c] sm:$0xf] %v4131
        %4196 = vst [vmem:[%s285 + $0x50] sm:$0xf] %v4132
        %4197 = vst [vmem:[%s285 + $0x54] sm:$0xf] %v4133
        %4198 = vst [vmem:[%s285 + $0x58] sm:$0xf] %v4134
        %4199 = vst [vmem:[%s285 + $0x5c] sm:$0xf] %v4135
        %4200 = vst [vmem:[%s285 + $0x60] sm:$0xf] %v4136
        %4201 = vst [vmem:[%s285 + $0x64] sm:$0xf] %v4137
        %4202 = vst [vmem:[%s285 + $0x68] sm:$0xf] %v4138
        %4203 = vst [vmem:[%s285 + $0x6c] sm:$0xf] %v4139
        %4204 = vst [vmem:[%s285 + $0x70] sm:$0xf] %v4140
        %4205 = vst [vmem:[%s285 + $0x74] sm:$0xf] %v4141
        %4206 = vst [vmem:[%s285 + $0x78] sm:$0xf] %v4142
        %4207 = vst [vmem:[%s285 + $0x7c] sm:$0xf] %v4143
        %s4208 = sand.u32 %s195, 1
        %s4209 = scalar_lea.sflag [#allocation4], %s4208
        %s4210 = sand.u32 %s195, 1
        %s4211 = smul.addr %s4210, 128
        %s4212 = scalar_lea.vmem [#allocation3], %s4211
        // Predicated region
        $region49: #{tpu_custom_call.1} parent=47 // pred_check
          %p4213 = pneg %p205
        $region50: #{tpu_custom_call.1} parent=47 // pred_check_branch
          %4215 = sbr.rel (%p4213) target = $region52
        $region51: #{tpu_custom_call.1} parent=47 // pred_region
          %s4216 = smul.u32 32, %s26
          %s4218 = ssub.s32 2048, 2048
          %4219 = vsyncadd %s4209, %s4218
          %s4220 = smul.addr %s25, 32
          %s4221 = sadd.s32 %s4216, %s4220
          %s4222 = smul.addr %s4221, 64
          %s4223 = scalar_lea.hbm %s7, %s4222
          %s4224 = sshll.u32 %s4212, 4
          %s4225 = int_to_ptr.vmem [resolvable:$true] %s4224
          %4230 = dma.vmem_to_hbm [thread:$0]  %s4225, 2048, %s4223, %s4209, 64, 64, 4
        $region52: #{tpu_custom_call.1} parent=47 // pred_fallthru
          _
      $region48: #{tpu_custom_call.1} parent=5 // pred_fallthru
        _
      %p4231 = scmp.le.s32.totalorder 2, %s16
      // Predicated region
      $region53: #{tpu_custom_call.1} parent=5 // pred_check
        %p4232 = pneg %p4231
      $region54: #{tpu_custom_call.1} parent=5 // pred_check_branch
        %4234 = sbr.rel (%p4232) target = $region56
      $region55: #{tpu_custom_call.1} parent=5 // pred_region
        %s4235 = ssub.s32 %s16, 2
        // Predicated region
        $region57: #{tpu_custom_call.1} parent=55 // pred_check
          %p4236 = pneg %p211
        $region58: #{tpu_custom_call.1} parent=55 // pred_check_branch
          %4238 = sbr.rel (%p4236) target = $region60
        $region59: #{tpu_custom_call.1} parent=55 // pred_region
          %s4239 = sand.u32 %s196, 1
          %s4240 = scalar_lea.sflag [#allocation4], %s4239
          %s4241 = sand.u32 %s196, 1
          %s4242 = smul.addr %s4241, 128
          %s4243 = scalar_lea.vmem [#allocation3], %s4242
          %4244 = dma.done %s4240, 2048
        $region60: #{tpu_custom_call.1} parent=55 // pred_fallthru
          _
      $region56: #{tpu_custom_call.1} parent=5 // pred_fallthru
        _
    $region6: #{tpu_custom_call.1} parent=1 // loop_footer
      %s20 = sadd.s32 1, %s16
    $region7: #{tpu_custom_call.1} parent=1 // loop_footer_branch
      %15 = sbr.rel target = $region3
    $region8: #{tpu_custom_call.1} parent=1 // loop_exit
      _
    %4245 = vsyncpa [#allocation4], 1
    %s4246 = scalar_lea.sflag [#allocation4], 1
    %4247 = vsyncpa %s4246, 1

</llo_original>
